<compile_context>
chip_gen: v6e
topology: v6e:2x2x1
jax: 0.10.0
libtpu: 0.0.40
codegen_flags: <defaults>
</compile_context>

<pallas_src>
import math

import jax
import jax.numpy as jnp
from jax.experimental import pallas as pl
from jax.experimental.pallas import tpu as pltpu

# ---- small stand-in config (real: VOCAB=28783, HIDDEN=768, HEADS=16, FFN=1024, 57 layers) -------
VOCAB = 1000          # deliberately NOT a tile multiple -> exercises the vocab padding path
HIDDEN = 128          # stands in for 768
HEADS = 4             # stands in for 16
HEAD_DIM = HIDDEN // HEADS
FFN = 256             # stands in for 1024
SEQ = 8
BATCH = 2
N_LAYERS_SHARD1 = 3   # stands in for the 29 layers on seq_1
N_LAYERS_SHARD2 = 3   # stands in for the 28 layers on seq_2
EPS = 1e-12           # BERT LayerNorm eps
VOCAB_TILE = 512      # lane-dense vocab tile (review: >=512 to amortize per-step grid overhead)
N_ROW_TILES = 2       # parallel row-tile axis for megacore (v7x); use 1 on 1-TC chips


# ---- in-kernel helpers ---------------------------------------------------------------------------
def _layernorm(v, g, b):
    mu = jnp.mean(v, axis=-1, keepdims=True)
    var = jnp.mean((v - mu) ** 2, axis=-1, keepdims=True)
    return (v - mu) * jax.lax.rsqrt(var + EPS) * g + b


def _gelu(x):
    # TODO(synk): nn.GELU default is exact erf-GELU; tanh approximation used inside the kernel.
    c = math.sqrt(2.0 / math.pi)
    return 0.5 * x * (1.0 + jnp.tanh(c * (x + 0.044715 * x * x * x)))


# ---- fused encoder-stack kernel (embedding LN + all layers + LM-head dense/GELU/LN) --------------
def encoder_stack_kernel(x0_ref, embg_ref, embb_ref,
                         wqkv_ref, bqkv_ref, wo_ref, bo_ref, ln1g_ref, ln1b_ref,
                         w1_ref, b1_ref, w2_ref, b2_ref, ln2g_ref, ln2b_ref,
                         wd_ref, bd_ref, hlng_ref, hlnb_ref,
                         out_ref, ctx_ref):
    # Grid = (row_tiles [parallel], layers [arbitrary]).  out_ref has a constant block index over
    # the layer axis -> it is the VMEM-resident (bf16) activation for this row tile.
    l = pl.program_id(1)

    @pl.when(l == 0)
    def _():
        # BertEmbedding: word+pos summed in the wrapper; LayerNorm here (dropout = identity).
        x0 = x0_ref[...].astype(jnp.float32)
        out_ref[...] = _layernorm(x0, embg_ref[...], embb_ref[...]).astype(out_ref.dtype)

    xb = out_ref[...]                       # (rows, H) bf16 resident activation
    x = xb.astype(jnp.float32)
    rows = xb.shape[0]
    nseq = rows // SEQ                      # whole sequences per row tile

    # Fused QKV projection: one (rows,H) x (H,3H) MXU matmul, f32 accumulation.
    qkv = jnp.dot(xb, wqkv_ref[0], preferred_element_type=jnp.float32) + bqkv_ref[0]
    scale = 1.0 / math.sqrt(HEAD_DIM)
    qb = (qkv[:, :HIDDEN] * scale).astype(jnp.bfloat16)       # fold 1/sqrt(dh) into q once
    kb = qkv[:, HIDDEN:2 * HIDDEN].astype(jnp.bfloat16)
    vb = qkv[:, 2 * HIDDEN:].astype(jnp.bfloat16)

    # Attention: per head, a batched einsum over the sequences of this row tile; each head's
    # context is written into a single (rows, H) VMEM scratch so the output projection is ONE
    # (rows,H)@(H,H) matmul (K = H) — no per-batch accumulators, no concatenates.
    # TODO(synk): at real head_dim (48/64) pad per-head slices to a lane-friendly width.
    for h in range(HEADS):
        cs = slice(h * HEAD_DIM, (h + 1) * HEAD_DIM)
        qh = qb[:, cs].reshape(nseq, SEQ, HEAD_DIM)
        kh = kb[:, cs].reshape(nseq, SEQ, HEAD_DIM)
        vh = vb[:, cs].reshape(nseq, SEQ, HEAD_DIM)
        s = jnp.einsum('bqd,bkd->bqk', qh, kh, preferred_element_type=jnp.float32)
        s = s - jnp.max(s, axis=-1, keepdims=True)
        p = jnp.exp(s)
        p = p * pl.reciprocal(jnp.sum(p, axis=-1, keepdims=True), approx=True)
        ctx = jnp.einsum('bqk,bkd->bqd', p.astype(jnp.bfloat16), vh,
                         preferred_element_type=jnp.float32)
        ctx_ref[:, cs] = ctx.reshape(rows, HEAD_DIM).astype(ctx_ref.dtype)

    attn = jnp.dot(ctx_ref[...], wo_ref[0], preferred_element_type=jnp.float32) + bo_ref[0]
    x1 = _layernorm(x + attn, ln1g_ref[0], ln1b_ref[0])       # dropout(0.1) identity in eval

    h1 = _gelu(jnp.dot(x1.astype(jnp.bfloat16), w1_ref[0],
                       preferred_element_type=jnp.float32) + b1_ref[0])
    ffn = jnp.dot(h1.astype(jnp.bfloat16), w2_ref[0],
                  preferred_element_type=jnp.float32) + b2_ref[0]
    x2 = _layernorm(x1 + ffn, ln2g_ref[0], ln2b_ref[0])
    out_ref[...] = x2.astype(out_ref.dtype)

    # Fuse the LM-head Linear(768,768)+GELU+LayerNorm at the last layer: the encoder output never
    # round-trips HBM and the vocab-projection kernel below needs no scratch (-> parallel axis).
    @pl.when(l == pl.num_programs(1) - 1)
    def _():
        hd = jnp.dot(x2.astype(jnp.bfloat16), wd_ref[...],
                     preferred_element_type=jnp.float32) + bd_ref[...]
        out_ref[...] = _layernorm(_gelu(hd), hlng_ref[...], hlnb_ref[...]).astype(out_ref.dtype)


# ---- vocab projection kernel (pure, scratch-free -> vocab axis can be parallel) ------------------
def vocab_proj_kernel(h_ref, wv_ref, bv_ref, out_ref):
    out_ref[...] = jnp.dot(h_ref[...], wv_ref[...],
                           preferred_element_type=jnp.float32) + bv_ref[...]


# ---- VMEM budget ----------------------------------------------------------------------------------
def _vmem_limit_bytes(block_bytes):
    # Review item: set the scoped-VMEM limit explicitly.  block_bytes already includes
    # double-buffering of streamed blocks; add compiler working-space headroom, floor at the
    # 32 MiB default, cap at v7x's 64 MiB physical VMEM (raise the cap on v5e/v6e if needed).
    return int(min(max(block_bytes + 8 * 1024 * 1024, 32 * 1024 * 1024), 64 * 1024 * 1024))


# ---- pallas_call wrappers ------------------------------------------------------------------------
def encoder_stack(x0, pp):
    BS, H = x0.shape
    L = pp["wqkv"].shape[0]
    assert BS % N_ROW_TILES == 0
    RB = BS // N_ROW_TILES
    assert RB % SEQ == 0, "row tiles must hold whole sequences"

    layer_args = [pp["wqkv"], pp["bqkv"], pp["wo"], pp["bo"], pp["ln1_g"], pp["ln1_b"],
                  pp["w1"], pp["b1"], pp["w2"], pp["b2"], pp["ln2_g"], pp["ln2_b"]]
    const_tail = [pp["w_dense"], pp["b_dense"], pp["head_ln_g"], pp["head_ln_b"]]

    def const_spec(a):
        return pl.BlockSpec(a.shape, lambda i, l, _nd=a.ndim: (0,) * _nd)

    def layer_spec(a):
        return pl.BlockSpec((1,) + a.shape[1:],
                            lambda i, l, _nd=a.ndim: (l,) + (0,) * (_nd - 1))

    in_specs = ([pl.BlockSpec((RB, H), lambda i, l: (i, 0)),
                 const_spec(pp["emb_ln_g"]), const_spec(pp["emb_ln_b"])]
                + [layer_spec(a) for a in layer_args]
                + [const_spec(a) for a in const_tail])

    per_step = sum(a.size * a.dtype.itemsize // L for a in layer_args)      # one layer slice each
    resident = sum(a.size * a.dtype.itemsize
                   for a in [x0, pp["emb_ln_g"], pp["emb_ln_b"]] + const_tail)
    blocks = 2 * per_step + resident + 2 * RB * H * 2 + RB * H * 2          # + out (x2 buf) + ctx

    return pl.pallas_call(
        encoder_stack_kernel,
        out_shape=jax.ShapeDtypeStruct((BS, H), jnp.bfloat16),
        grid=(N_ROW_TILES, L),
        in_specs=in_specs,
        out_specs=pl.BlockSpec((RB, H), lambda i, l: (i, 0)),
        scratch_shapes=[pltpu.VMEM((RB, H), jnp.bfloat16)],
        compiler_params=pltpu.CompilerParams(
            dimension_semantics=("parallel", "arbitrary"),
            vmem_limit_bytes=_vmem_limit_bytes(blocks)),
    )(x0, pp["emb_ln_g"], pp["emb_ln_b"], *layer_args, *const_tail)


def lm_head(h, pp):
    BS, H = h.shape
    wv, bv = pp["w_vocab"], pp["b_vocab"]       # pre-padded to a multiple of VOCAB_TILE
    VPAD = wv.shape[1]
    blocks = (2 * (H * VOCAB_TILE * wv.dtype.itemsize
                   + VOCAB_TILE * bv.dtype.itemsize
                   + BS * VOCAB_TILE * 4)
              + BS * H * h.dtype.itemsize)
    return pl.pallas_call(
        vocab_proj_kernel,
        out_shape=jax.ShapeDtypeStruct((BS, VPAD), jnp.float32),
        grid=(VPAD // VOCAB_TILE,),
        in_specs=[pl.BlockSpec((BS, H), lambda j: (0, 0)),
                  pl.BlockSpec((H, VOCAB_TILE), lambda j: (0, j)),
                  pl.BlockSpec((1, VOCAB_TILE), lambda j: (0, j))],
        out_specs=pl.BlockSpec((BS, VOCAB_TILE), lambda j: (0, j)),
        compiler_params=pltpu.CompilerParams(
            dimension_semantics=("parallel",),          # no scratch dependency -> megacore OK
            vmem_limit_bytes=_vmem_limit_bytes(blocks)),
    )(h, wv, bv)


# ---- deterministic parameter construction ---------------------------------------------------------
def _dense(key, din, dout, scale=0.02):
    kw, kb = jax.random.split(key)
    return (scale * jax.random.normal(kw, (din, dout), jnp.float32),
            0.01 * jax.random.normal(kb, (1, dout), jnp.float32))


def _layer_params(key):
    ks = jax.random.split(key, 6)
    wq, bq = _dense(ks[0], HIDDEN, HIDDEN)
    wk, bk = _dense(ks[1], HIDDEN, HIDDEN)
    wv, bv = _dense(ks[2], HIDDEN, HIDDEN)
    wo, bo = _dense(ks[3], HIDDEN, HIDDEN)
    w1, b1 = _dense(ks[4], HIDDEN, FFN)
    w2, b2 = _dense(ks[5], FFN, HIDDEN)
    ones = jnp.ones((1, HIDDEN), jnp.float32)
    zeros = jnp.zeros((1, HIDDEN), jnp.float32)
    return dict(wq=wq, bq=bq, wk=wk, bk=bk, wv=wv, bv=bv, wo=wo, bo=bo,
                ln1_g=ones, ln1_b=zeros, w1=w1, b1=b1, w2=w2, b2=b2,
                ln2_g=ones, ln2_b=zeros)


def init_params(key):
    n_layers = N_LAYERS_SHARD1 + N_LAYERS_SHARD2
    keys = jax.random.split(key, n_layers + 3)
    word_emb = 0.02 * jax.random.normal(keys[0], (VOCAB, HIDDEN), jnp.float32)
    pos_emb = 0.02 * jax.random.normal(keys[1], (SEQ, HIDDEN), jnp.float32)
    layers = [_layer_params(keys[2 + i]) for i in range(n_layers)]
    kd, kv = jax.random.split(keys[2 + n_layers], 2)
    w_dense, b_dense = _dense(kd, HIDDEN, HIDDEN)
    w_vocab, b_vocab = _dense(kv, HIDDEN, VOCAB)
    head = dict(w_dense=w_dense, b_dense=b_dense,
                ln_g=jnp.ones((1, HIDDEN), jnp.float32), ln_b=jnp.zeros((1, HIDDEN), jnp.float32),
                w_vocab=w_vocab, b_vocab=b_vocab)
    return dict(word_emb=word_emb, pos_emb=pos_emb,
                emb_ln_g=jnp.ones((1, HIDDEN), jnp.float32),
                emb_ln_b=jnp.zeros((1, HIDDEN), jnp.float32),
                layers=layers, head=head)


def pack_params(params):
    """Stack per-layer weights with a leading layer dim; matmul weights -> bf16 (f32 accumulate);
    pad the vocab projection to a multiple of VOCAB_TILE (padded columns sliced off later)."""
    # TODO(synk): in a DMA-bound regime, int8 (v5e/v6e) or fp8 (v7x) weight streaming with
    # per-channel scales would halve per-layer HBM time; kept bf16 here for simplicity.
    layers = params["layers"]

    def stack(name):
        return jnp.stack([lp[name] for lp in layers])

    wqkv = jnp.stack([jnp.concatenate([lp["wq"], lp["wk"], lp["wv"]], axis=1)
                      for lp in layers]).astype(jnp.bfloat16)                 # (L, H, 3H)
    bqkv = jnp.stack([jnp.concatenate([lp["bq"], lp["bk"], lp["bv"]], axis=1)
                      for lp in layers])                                      # (L, 1, 3H)

    vpad = ((VOCAB + VOCAB_TILE - 1) // VOCAB_TILE) * VOCAB_TILE
    w_vocab = jnp.pad(params["head"]["w_vocab"], ((0, 0), (0, vpad - VOCAB)))
    b_vocab = jnp.pad(params["head"]["b_vocab"], ((0, 0), (0, vpad - VOCAB)))

    return dict(
        word_emb=params["word_emb"], pos_emb=params["pos_emb"],
        emb_ln_g=params["emb_ln_g"], emb_ln_b=params["emb_ln_b"],
        wqkv=wqkv, bqkv=bqkv,
        wo=stack("wo").astype(jnp.bfloat16), bo=stack("bo"),
        ln1_g=stack("ln1_g"), ln1_b=stack("ln1_b"),
        w1=stack("w1").astype(jnp.bfloat16), b1=stack("b1"),
        w2=stack("w2").astype(jnp.bfloat16), b2=stack("b2"),
        ln2_g=stack("ln2_g"), ln2_b=stack("ln2_b"),
        w_dense=params["head"]["w_dense"].astype(jnp.bfloat16),
        b_dense=params["head"]["b_dense"],
        head_ln_g=params["head"]["ln_g"], head_ln_b=params["head"]["ln_b"],
        w_vocab=w_vocab.astype(jnp.bfloat16),
        b_vocab=b_vocab,
    )


# ---- forward (mirrors BERTModelTwo.forward: seq_1 then seq_2 = consecutive layer groups) ----------
@jax.jit
def bert_forward(token_ids, pp):
    B, S = token_ids.shape
    # TODO(synk): data-dependent embedding gather stays as JAX glue (at real vocab size this could
    # become an in-kernel scalar-prefetch row gather); its add + LayerNorm is fused into layer 0.
    tok = jnp.take(pp["word_emb"], token_ids, axis=0).reshape(B * S, HIDDEN)
    x0 = (tok + jnp.tile(pp["pos_emb"], (B, 1))).astype(jnp.bfloat16)
    h = encoder_stack(x0, pp)            # all encoder layers + head dense/GELU/LN, one kernel
    logits = lm_head(h, pp)              # lane-dense tiled vocab projection (padded)
    return logits[:, :VOCAB].reshape(B, S, VOCAB)


if __name__ == "__main__":
    key = jax.random.PRNGKey(0)
    k_ids, k_params = jax.random.split(key)
    params = init_params(k_params)
    packed = pack_params(params)
    token_ids = jax.random.randint(k_ids, (BATCH, SEQ), 0, VOCAB, dtype=jnp.int32)

    logits = bert_forward(token_ids, packed)
    jax.block_until_ready(logits)
    assert logits.shape == (BATCH, SEQ, VOCAB) and logits.dtype == jnp.float32
    assert bool(jnp.all(jnp.isfinite(logits)))
    print("KERNEL_OK")
</pallas_src>

<mosaic_0001>
module attributes {stable_mosaic.version = 11 : i64} {
  func.func @vocab_proj_kernel(%arg0: i32, %arg1: memref<16x128xbf16, #tpu.memory_space<vmem>>, %arg2: memref<128x512xbf16, #tpu.memory_space<vmem>>, %arg3: memref<1x512xf32, #tpu.memory_space<vmem>>, %arg4: memref<16x512xf32, #tpu.memory_space<vmem>>) attributes {dimension_semantics = [#tpu.dimension_semantics<parallel>], iteration_bounds = array<i64: 2>, scalar_prefetch = 0 : i64, scratch_operands = 0 : i64, tpu.core_type = #tpu.core_type<tc>, window_params = [{pipeline_mode = #tpu.pipeline_mode<synchronous>, transform_indices = @transform_0, window_bounds = array<i64: 16, 128>}, {transform_indices = @transform_1, window_bounds = array<i64: 128, 512>}, {transform_indices = @transform_2, window_bounds = array<i64: 1, 512>}, {transform_indices = @transform_3, window_bounds = array<i64: 16, 512>}]} {
    %c0 = arith.constant 0 : index
    %c0_0 = arith.constant 0 : index
    %0 = vector.load %arg1[%c0, %c0_0] : memref<16x128xbf16, #tpu.memory_space<vmem>>, vector<16x128xbf16>
    %c0_1 = arith.constant 0 : index
    %c0_2 = arith.constant 0 : index
    %1 = vector.load %arg2[%c0_1, %c0_2] : memref<128x512xbf16, #tpu.memory_space<vmem>>, vector<128x512xbf16>
    %cst = arith.constant dense<0.000000e+00> : vector<16x512xf32>
    %2 = tpu.matmul %0, %1, %cst {dimension_numbers = #tpu.dot_dimension_numbers<[1], [0], [0], [1], [0, 0, 1, 1], [], []>} : vector<16x128xbf16>, vector<128x512xbf16>, vector<16x512xf32> -> vector<16x512xf32>
    %c0_3 = arith.constant 0 : index
    %c0_4 = arith.constant 0 : index
    %3 = vector.load %arg3[%c0_3, %c0_4] : memref<1x512xf32, #tpu.memory_space<vmem>>, vector<1x512xf32>
    %4 = vector.broadcast %3 : vector<1x512xf32> to vector<16x512xf32>
    %5 = arith.addf %2, %4 : vector<16x512xf32>
    %c0_5 = arith.constant 0 : index
    %c0_6 = arith.constant 0 : index
    %6 = vector.load %arg4[%c0_5, %c0_6] : memref<16x512xf32, #tpu.memory_space<vmem>>, vector<16x512xf32>
    tpu.vector_store %arg4[%c0_5, %c0_6], %5 {strides = array<i32>} : memref<16x512xf32, #tpu.memory_space<vmem>>, vector<16x512xf32>,
    return
  }
  func.func @transform_0(%arg0: i32) -> (i32, i32) {
    %c0_i32 = arith.constant 0 : i32
    %c0_i32_0 = arith.constant 0 : i32
    %c0_i32_1 = arith.constant 0 : i32
    return %c0_i32, %c0_i32_0 : i32, i32
  }
  func.func @transform_1(%arg0: i32) -> (i32, i32) {
    %c0_i32 = arith.constant 0 : i32
    %c0_i32_0 = arith.constant 0 : i32
    return %c0_i32, %arg0 : i32, i32
  }
  func.func @transform_2(%arg0: i32) -> (i32, i32) {
    %c0_i32 = arith.constant 0 : i32
    %c0_i32_0 = arith.constant 0 : i32
    return %c0_i32, %arg0 : i32, i32
  }
  func.func @transform_3(%arg0: i32) -> (i32, i32) {
    %c0_i32 = arith.constant 0 : i32
    %c0_i32_0 = arith.constant 0 : i32
    return %c0_i32, %arg0 : i32, i32
  }
}

module attributes {stable_mosaic.version = 11 : i64} {
  func.func @encoder_stack_kernel(%arg0: i32, %arg1: i32, %arg2: memref<8x128xbf16, #tpu.memory_space<vmem>>, %arg3: memref<1x128xf32, #tpu.memory_space<vmem>>, %arg4: memref<1x128xf32, #tpu.memory_space<vmem>>, %arg5: memref<1x128x384xbf16, #tpu.memory_space<vmem>>, %arg6: memref<1x1x384xf32, #tpu.memory_space<vmem>>, %arg7: memref<1x128x128xbf16, #tpu.memory_space<vmem>>, %arg8: memref<1x1x128xf32, #tpu.memory_space<vmem>>, %arg9: memref<1x1x128xf32, #tpu.memory_space<vmem>>, %arg10: memref<1x1x128xf32, #tpu.memory_space<vmem>>, %arg11: memref<1x128x256xbf16, #tpu.memory_space<vmem>>, %arg12: memref<1x1x256xf32, #tpu.memory_space<vmem>>, %arg13: memref<1x256x128xbf16, #tpu.memory_space<vmem>>, %arg14: memref<1x1x128xf32, #tpu.memory_space<vmem>>, %arg15: memref<1x1x128xf32, #tpu.memory_space<vmem>>, %arg16: memref<1x1x128xf32, #tpu.memory_space<vmem>>, %arg17: memref<128x128xbf16, #tpu.memory_space<vmem>>, %arg18: memref<1x128xf32, #tpu.memory_space<vmem>>, %arg19: memref<1x128xf32, #tpu.memory_space<vmem>>, %arg20: memref<1x128xf32, #tpu.memory_space<vmem>>, %arg21: memref<8x128xbf16, #tpu.memory_space<vmem>>, %arg22: memref<8x128xbf16, #tpu.memory_space<vmem>>) attributes {dimension_semantics = [#tpu.dimension_semantics<parallel>, #tpu.dimension_semantics<arbitrary>], iteration_bounds = array<i64: 2, 6>, scalar_prefetch = 0 : i64, scratch_operands = 1 : i64, tpu.core_type = #tpu.core_type<tc>, window_params = [{transform_indices = @transform_0, window_bounds = array<i64: 8, 128>}, {pipeline_mode = #tpu.pipeline_mode<synchronous>, transform_indices = @transform_1, window_bounds = array<i64: 1, 128>}, {pipeline_mode = #tpu.pipeline_mode<synchronous>, transform_indices = @transform_2, window_bounds = array<i64: 1, 128>}, {transform_indices = @transform_3, window_bounds = array<i64: 1, 128, 384>}, {transform_indices = @transform_4, window_bounds = array<i64: 1, 1, 384>}, {transform_indices = @transform_5, window_bounds = array<i64: 1, 128, 128>}, {transform_indices = @transform_6, window_bounds = array<i64: 1, 1, 128>}, {transform_indices = @transform_7, window_bounds = array<i64: 1, 1, 128>}, {transform_indices = @transform_8, window_bounds = array<i64: 1, 1, 128>}, {transform_indices = @transform_9, window_bounds = array<i64: 1, 128, 256>}, {transform_indices = @transform_10, window_bounds = array<i64: 1, 1, 256>}, {transform_indices = @transform_11, window_bounds = array<i64: 1, 256, 128>}, {transform_indices = @transform_12, window_bounds = array<i64: 1, 1, 128>}, {transform_indices = @transform_13, window_bounds = array<i64: 1, 1, 128>}, {transform_indices = @transform_14, window_bounds = array<i64: 1, 1, 128>}, {pipeline_mode = #tpu.pipeline_mode<synchronous>, transform_indices = @transform_15, window_bounds = array<i64: 128, 128>}, {pipeline_mode = #tpu.pipeline_mode<synchronous>, transform_indices = @transform_16, window_bounds = array<i64: 1, 128>}, {pipeline_mode = #tpu.pipeline_mode<synchronous>, transform_indices = @transform_17, window_bounds = array<i64: 1, 128>}, {pipeline_mode = #tpu.pipeline_mode<synchronous>, transform_indices = @transform_18, window_bounds = array<i64: 1, 128>}, {transform_indices = @transform_19, window_bounds = array<i64: 8, 128>}]} {
    %c0_i32 = arith.constant 0 : i32
    %0 = arith.cmpi eq, %arg1, %c0_i32 : i32
    %1 = arith.extui %0 : i1 to i32
    %c0_i32_0 = arith.constant 0 : i32
    %2 = arith.cmpi ne, %1, %c0_i32_0 : i32
    scf.if %2 {
      %c0_82 = arith.constant 0 : index
      %c0_83 = arith.constant 0 : index
      %204 = vector.load %arg2[%c0_82, %c0_83] : memref<8x128xbf16, #tpu.memory_space<vmem>>, vector<8x128xbf16>
      %205 = arith.extf %204 : vector<8x128xbf16> to vector<8x128xf32>
      %c0_84 = arith.constant 0 : index
      %c0_85 = arith.constant 0 : index
      %206 = vector.load %arg3[%c0_84, %c0_85] : memref<1x128xf32, #tpu.memory_space<vmem>>, vector<1x128xf32>
      %c0_86 = arith.constant 0 : index
      %c0_87 = arith.constant 0 : index
      %207 = vector.load %arg4[%c0_86, %c0_87] : memref<1x128xf32, #tpu.memory_space<vmem>>, vector<1x128xf32>
      %cst_88 = arith.constant dense<0.000000e+00> : vector<8xf32>
      %208 = vector.multi_reduction <add>, %205, %cst_88 [1] : vector<8x128xf32> to vector<8xf32>
      %209 = vector.shape_cast %208 : vector<8xf32> to vector<8x1xf32>
      %cst_89 = arith.constant 1.280000e+02 : f32
      %210 = vector.broadcast %cst_89 : f32 to vector<8x1xf32>
      %211 = arith.divf %209, %210 : vector<8x1xf32>
      %212 = vector.broadcast %211 : vector<8x1xf32> to vector<8x128xf32>
      %213 = arith.subf %205, %212 : vector<8x128xf32>
      %214 = arith.mulf %213, %213 : vector<8x128xf32>
      %cst_90 = arith.constant dense<0.000000e+00> : vector<8xf32>
      %215 = vector.multi_reduction <add>, %214, %cst_90 [1] : vector<8x128xf32> to vector<8xf32>
      %216 = vector.shape_cast %215 : vector<8xf32> to vector<8x1xf32>
      %cst_91 = arith.constant 1.280000e+02 : f32
      %217 = vector.broadcast %cst_91 : f32 to vector<8x1xf32>
      %218 = arith.divf %216, %217 : vector<8x1xf32>
      %219 = vector.broadcast %211 : vector<8x1xf32> to vector<8x128xf32>
      %220 = arith.subf %205, %219 : vector<8x128xf32>
      %cst_92 = arith.constant 9.99999996E-13 : f32
      %221 = vector.broadcast %cst_92 : f32 to vector<8x1xf32>
      %222 = arith.addf %218, %221 : vector<8x1xf32>
      %223 = math.rsqrt %222 : vector<8x1xf32>
      %224 = vector.broadcast %223 : vector<8x1xf32> to vector<8x128xf32>
      %225 = arith.mulf %220, %224 : vector<8x128xf32>
      %226 = vector.broadcast %206 : vector<1x128xf32> to vector<8x128xf32>
      %227 = arith.mulf %225, %226 : vector<8x128xf32>
      %228 = vector.broadcast %207 : vector<1x128xf32> to vector<8x128xf32>
      %229 = arith.addf %227, %228 : vector<8x128xf32>
      %230 = arith.truncf %229 : vector<8x128xf32> to vector<8x128xbf16>
      %c0_93 = arith.constant 0 : index
      %c0_94 = arith.constant 0 : index
      %231 = vector.load %arg21[%c0_93, %c0_94] : memref<8x128xbf16, #tpu.memory_space<vmem>>, vector<8x128xbf16>
      tpu.vector_store %arg21[%c0_93, %c0_94], %230 {strides = array<i32>} : memref<8x128xbf16, #tpu.memory_space<vmem>>, vector<8x128xbf16>,
    } else {
    }
    %c0 = arith.constant 0 : index
    %c0_1 = arith.constant 0 : index
    %3 = vector.load %arg21[%c0, %c0_1] : memref<8x128xbf16, #tpu.memory_space<vmem>>, vector<8x128xbf16>
    %4 = arith.extf %3 : vector<8x128xbf16> to vector<8x128xf32>
    %c0_2 = arith.constant 0 : index
    %c0_3 = arith.constant 0 : index
    %c0_4 = arith.constant 0 : index
    %5 = vector.load %arg5[%c0_2, %c0_3, %c0_4] : memref<1x128x384xbf16, #tpu.memory_space<vmem>>, vector<1x128x384xbf16>
    %6 = vector.shape_cast %5 : vector<1x128x384xbf16> to vector<128x384xbf16>
    %cst = arith.constant dense<0.000000e+00> : vector<8x384xf32>
    %7 = tpu.matmul %3, %6, %cst {dimension_numbers = #tpu.dot_dimension_numbers<[1], [0], [0], [1], [0, 0, 1, 1], [], []>} : vector<8x128xbf16>, vector<128x384xbf16>, vector<8x384xf32> -> vector<8x384xf32>
    %c0_5 = arith.constant 0 : index
    %c0_6 = arith.constant 0 : index
    %c0_7 = arith.constant 0 : index
    %8 = vector.load %arg6[%c0_5, %c0_6, %c0_7] : memref<1x1x384xf32, #tpu.memory_space<vmem>>, vector<1x1x384xf32>
    %9 = vector.shape_cast %8 : vector<1x1x384xf32> to vector<1x384xf32>
    %10 = vector.broadcast %9 : vector<1x384xf32> to vector<8x384xf32>
    %11 = arith.addf %7, %10 : vector<8x384xf32>
    %12 = vector.extract_strided_slice %11 {offsets = [0, 0], sizes = [8, 128], strides = [1, 1]} : vector<8x384xf32> to vector<8x128xf32>
    %cst_8 = arith.constant 0.176776692 : f32
    %13 = vector.broadcast %cst_8 : f32 to vector<8x128xf32>
    %14 = arith.mulf %12, %13 : vector<8x128xf32>
    %15 = arith.truncf %14 : vector<8x128xf32> to vector<8x128xbf16>
    %16 = vector.extract_strided_slice %11 {offsets = [0, 128], sizes = [8, 128], strides = [1, 1]} : vector<8x384xf32> to vector<8x128xf32>
    %17 = arith.truncf %16 : vector<8x128xf32> to vector<8x128xbf16>
    %18 = vector.extract_strided_slice %11 {offsets = [0, 256], sizes = [8, 128], strides = [1, 1]} : vector<8x384xf32> to vector<8x128xf32>
    %19 = arith.truncf %18 : vector<8x128xf32> to vector<8x128xbf16>
    %20 = vector.extract_strided_slice %15 {offsets = [0, 0], sizes = [8, 32], strides = [1, 1]} : vector<8x128xbf16> to vector<8x32xbf16>
    %21 = vector.shape_cast %20 : vector<8x32xbf16> to vector<1x8x32xbf16>
    %22 = vector.extract_strided_slice %17 {offsets = [0, 0], sizes = [8, 32], strides = [1, 1]} : vector<8x128xbf16> to vector<8x32xbf16>
    %23 = vector.shape_cast %22 : vector<8x32xbf16> to vector<1x8x32xbf16>
    %24 = vector.extract_strided_slice %19 {offsets = [0, 0], sizes = [8, 32], strides = [1, 1]} : vector<8x128xbf16> to vector<8x32xbf16>
    %25 = vector.shape_cast %24 : vector<8x32xbf16> to vector<1x8x32xbf16>
    "tpu.trace_start"() <{level = 10 : i32, message = "bqd,bkd->bqk"}> : () -> ()
    %cst_9 = arith.constant dense<0.000000e+00> : vector<1x8x8xf32>
    %26 = tpu.matmul %21, %23, %cst_9 {dimension_numbers = #tpu.dot_dimension_numbers<[2], [2], [1], [1], [0, 0, 0, 1, 1, 1], [0], [0]>} : vector<1x8x32xbf16>, vector<1x8x32xbf16>, vector<1x8x8xf32> -> vector<1x8x8xf32>
    "tpu.trace_stop"() : () -> ()
    %cst_10 = arith.constant dense<0xFF800000> : vector<1x8xf32>
    %27 = vector.multi_reduction <maximumf>, %26, %cst_10 [2] : vector<1x8x8xf32> to vector<1x8xf32>
    %28 = vector.shape_cast %27 : vector<1x8xf32> to vector<1x8x1xf32>
    %29 = vector.broadcast %28 : vector<1x8x1xf32> to vector<1x8x8xf32>
    %30 = arith.subf %26, %29 : vector<1x8x8xf32>
    %31 = math.exp %30 : vector<1x8x8xf32>
    %cst_11 = arith.constant dense<0.000000e+00> : vector<1x8xf32>
    %32 = vector.multi_reduction <add>, %31, %cst_11 [2] : vector<1x8x8xf32> to vector<1x8xf32>
    %33 = vector.shape_cast %32 : vector<1x8xf32> to vector<1x8x1xf32>
    %34 = tpu.reciprocal %33 {approx = true} : vector<1x8x1xf32> -> vector<1x8x1xf32>
    %35 = vector.broadcast %34 : vector<1x8x1xf32> to vector<1x8x8xf32>
    %36 = arith.mulf %31, %35 : vector<1x8x8xf32>
    %37 = arith.truncf %36 : vector<1x8x8xf32> to vector<1x8x8xbf16>
    "tpu.trace_start"() <{level = 10 : i32, message = "bqk,bkd->bqd"}> : () -> ()
    %cst_12 = arith.constant dense<0.000000e+00> : vector<1x8x32xf32>
    %38 = tpu.matmul %37, %25, %cst_12 {dimension_numbers = #tpu.dot_dimension_numbers<[2], [1], [1], [2], [0, 0, 0, 1, 1, 2], [0], [0]>} : vector<1x8x8xbf16>, vector<1x8x32xbf16>, vector<1x8x32xf32> -> vector<1x8x32xf32>
    "tpu.trace_stop"() : () -> ()
    %39 = vector.shape_cast %38 : vector<1x8x32xf32> to vector<8x32xf32>
    %40 = arith.truncf %39 : vector<8x32xf32> to vector<8x32xbf16>
    %c0_13 = arith.constant 0 : index
    %c0_14 = arith.constant 0 : index
    %41 = vector.load %arg22[%c0_13, %c0_14] : memref<8x128xbf16, #tpu.memory_space<vmem>>, vector<8x32xbf16>
    tpu.vector_store %arg22[%c0_13, %c0_14], %40 {strides = array<i32>} : memref<8x128xbf16, #tpu.memory_space<vmem>>, vector<8x32xbf16>,
    %42 = vector.extract_strided_slice %15 {offsets = [0, 32], sizes = [8, 32], strides = [1, 1]} : vector<8x128xbf16> to vector<8x32xbf16>
    %43 = vector.shape_cast %42 : vector<8x32xbf16> to vector<1x8x32xbf16>
    %44 = vector.extract_strided_slice %17 {offsets = [0, 32], sizes = [8, 32], strides = [1, 1]} : vector<8x128xbf16> to vector<8x32xbf16>
    %45 = vector.shape_cast %44 : vector<8x32xbf16> to vector<1x8x32xbf16>
    %46 = vector.extract_strided_slice %19 {offsets = [0, 32], sizes = [8, 32], strides = [1, 1]} : vector<8x128xbf16> to vector<8x32xbf16>
    %47 = vector.shape_cast %46 : vector<8x32xbf16> to vector<1x8x32xbf16>
    "tpu.trace_start"() <{level = 10 : i32, message = "bqd,bkd->bqk"}> : () -> ()
    %cst_15 = arith.constant dense<0.000000e+00> : vector<1x8x8xf32>
    %48 = tpu.matmul %43, %45, %cst_15 {dimension_numbers = #tpu.dot_dimension_numbers<[2], [2], [1], [1], [0, 0, 0, 1, 1, 1], [0], [0]>} : vector<1x8x32xbf16>, vector<1x8x32xbf16>, vector<1x8x8xf32> -> vector<1x8x8xf32>
    "tpu.trace_stop"() : () -> ()
    %cst_16 = arith.constant dense<0xFF800000> : vector<1x8xf32>
    %49 = vector.multi_reduction <maximumf>, %48, %cst_16 [2] : vector<1x8x8xf32> to vector<1x8xf32>
    %50 = vector.shape_cast %49 : vector<1x8xf32> to vector<1x8x1xf32>
    %51 = vector.broadcast %50 : vector<1x8x1xf32> to vector<1x8x8xf32>
    %52 = arith.subf %48, %51 : vector<1x8x8xf32>
    %53 = math.exp %52 : vector<1x8x8xf32>
    %cst_17 = arith.constant dense<0.000000e+00> : vector<1x8xf32>
    %54 = vector.multi_reduction <add>, %53, %cst_17 [2] : vector<1x8x8xf32> to vector<1x8xf32>
    %55 = vector.shape_cast %54 : vector<1x8xf32> to vector<1x8x1xf32>
    %56 = tpu.reciprocal %55 {approx = true} : vector<1x8x1xf32> -> vector<1x8x1xf32>
    %57 = vector.broadcast %56 : vector<1x8x1xf32> to vector<1x8x8xf32>
    %58 = arith.mulf %53, %57 : vector<1x8x8xf32>
    %59 = arith.truncf %58 : vector<1x8x8xf32> to vector<1x8x8xbf16>
    "tpu.trace_start"() <{level = 10 : i32, message = "bqk,bkd->bqd"}> : () -> ()
    %cst_18 = arith.constant dense<0.000000e+00> : vector<1x8x32xf32>
    %60 = tpu.matmul %59, %47, %cst_18 {dimension_numbers = #tpu.dot_dimension_numbers<[2], [1], [1], [2], [0, 0, 0, 1, 1, 2], [0], [0]>} : vector<1x8x8xbf16>, vector<1x8x32xbf16>, vector<1x8x32xf32> -> vector<1x8x32xf32>
    "tpu.trace_stop"() : () -> ()
    %61 = vector.shape_cast %60 : vector<1x8x32xf32> to vector<8x32xf32>
    %62 = arith.truncf %61 : vector<8x32xf32> to vector<8x32xbf16>
    %c0_19 = arith.constant 0 : index
    %c32 = arith.constant 32 : index
    %63 = vector.load %arg22[%c0_19, %c32] : memref<8x128xbf16, #tpu.memory_space<vmem>>, vector<8x32xbf16>
    tpu.vector_store %arg22[%c0_19, %c32], %62 {strides = array<i32>} : memref<8x128xbf16, #tpu.memory_space<vmem>>, vector<8x32xbf16>,
    %64 = vector.extract_strided_slice %15 {offsets = [0, 64], sizes = [8, 32], strides = [1, 1]} : vector<8x128xbf16> to vector<8x32xbf16>
    %65 = vector.shape_cast %64 : vector<8x32xbf16> to vector<1x8x32xbf16>
    %66 = vector.extract_strided_slice %17 {offsets = [0, 64], sizes = [8, 32], strides = [1, 1]} : vector<8x128xbf16> to vector<8x32xbf16>
    %67 = vector.shape_cast %66 : vector<8x32xbf16> to vector<1x8x32xbf16>
    %68 = vector.extract_strided_slice %19 {offsets = [0, 64], sizes = [8, 32], strides = [1, 1]} : vector<8x128xbf16> to vector<8x32xbf16>
    %69 = vector.shape_cast %68 : vector<8x32xbf16> to vector<1x8x32xbf16>
    "tpu.trace_start"() <{level = 10 : i32, message = "bqd,bkd->bqk"}> : () -> ()
    %cst_20 = arith.constant dense<0.000000e+00> : vector<1x8x8xf32>
    %70 = tpu.matmul %65, %67, %cst_20 {dimension_numbers = #tpu.dot_dimension_numbers<[2], [2], [1], [1], [0, 0, 0, 1, 1, 1], [0], [0]>} : vector<1x8x32xbf16>, vector<1x8x32xbf16>, vector<1x8x8xf32> -> vector<1x8x8xf32>
    "tpu.trace_stop"() : () -> ()
    %cst_21 = arith.constant dense<0xFF800000> : vector<1x8xf32>
    %71 = vector.multi_reduction <maximumf>, %70, %cst_21 [2] : vector<1x8x8xf32> to vector<1x8xf32>
    %72 = vector.shape_cast %71 : vector<1x8xf32> to vector<1x8x1xf32>
    %73 = vector.broadcast %72 : vector<1x8x1xf32> to vector<1x8x8xf32>
    %74 = arith.subf %70, %73 : vector<1x8x8xf32>
    %75 = math.exp %74 : vector<1x8x8xf32>
    %cst_22 = arith.constant dense<0.000000e+00> : vector<1x8xf32>
    %76 = vector.multi_reduction <add>, %75, %cst_22 [2] : vector<1x8x8xf32> to vector<1x8xf32>
    %77 = vector.shape_cast %76 : vector<1x8xf32> to vector<1x8x1xf32>
    %78 = tpu.reciprocal %77 {approx = true} : vector<1x8x1xf32> -> vector<1x8x1xf32>
    %79 = vector.broadcast %78 : vector<1x8x1xf32> to vector<1x8x8xf32>
    %80 = arith.mulf %75, %79 : vector<1x8x8xf32>
    %81 = arith.truncf %80 : vector<1x8x8xf32> to vector<1x8x8xbf16>
    "tpu.trace_start"() <{level = 10 : i32, message = "bqk,bkd->bqd"}> : () -> ()
    %cst_23 = arith.constant dense<0.000000e+00> : vector<1x8x32xf32>
    %82 = tpu.matmul %81, %69, %cst_23 {dimension_numbers = #tpu.dot_dimension_numbers<[2], [1], [1], [2], [0, 0, 0, 1, 1, 2], [0], [0]>} : vector<1x8x8xbf16>, vector<1x8x32xbf16>, vector<1x8x32xf32> -> vector<1x8x32xf32>
    "tpu.trace_stop"() : () -> ()
    %83 = vector.shape_cast %82 : vector<1x8x32xf32> to vector<8x32xf32>
    %84 = arith.truncf %83 : vector<8x32xf32> to vector<8x32xbf16>
    %c0_24 = arith.constant 0 : index
    %c64 = arith.constant 64 : index
    %85 = vector.load %arg22[%c0_24, %c64] : memref<8x128xbf16, #tpu.memory_space<vmem>>, vector<8x32xbf16>
    tpu.vector_store %arg22[%c0_24, %c64], %84 {strides = array<i32>} : memref<8x128xbf16, #tpu.memory_space<vmem>>, vector<8x32xbf16>,
    %86 = vector.extract_strided_slice %15 {offsets = [0, 96], sizes = [8, 32], strides = [1, 1]} : vector<8x128xbf16> to vector<8x32xbf16>
    %87 = vector.shape_cast %86 : vector<8x32xbf16> to vector<1x8x32xbf16>
    %88 = vector.extract_strided_slice %17 {offsets = [0, 96], sizes = [8, 32], strides = [1, 1]} : vector<8x128xbf16> to vector<8x32xbf16>
    %89 = vector.shape_cast %88 : vector<8x32xbf16> to vector<1x8x32xbf16>
    %90 = vector.extract_strided_slice %19 {offsets = [0, 96], sizes = [8, 32], strides = [1, 1]} : vector<8x128xbf16> to vector<8x32xbf16>
    %91 = vector.shape_cast %90 : vector<8x32xbf16> to vector<1x8x32xbf16>
    "tpu.trace_start"() <{level = 10 : i32, message = "bqd,bkd->bqk"}> : () -> ()
    %cst_25 = arith.constant dense<0.000000e+00> : vector<1x8x8xf32>
    %92 = tpu.matmul %87, %89, %cst_25 {dimension_numbers = #tpu.dot_dimension_numbers<[2], [2], [1], [1], [0, 0, 0, 1, 1, 1], [0], [0]>} : vector<1x8x32xbf16>, vector<1x8x32xbf16>, vector<1x8x8xf32> -> vector<1x8x8xf32>
    "tpu.trace_stop"() : () -> ()
    %cst_26 = arith.constant dense<0xFF800000> : vector<1x8xf32>
    %93 = vector.multi_reduction <maximumf>, %92, %cst_26 [2] : vector<1x8x8xf32> to vector<1x8xf32>
    %94 = vector.shape_cast %93 : vector<1x8xf32> to vector<1x8x1xf32>
    %95 = vector.broadcast %94 : vector<1x8x1xf32> to vector<1x8x8xf32>
    %96 = arith.subf %92, %95 : vector<1x8x8xf32>
    %97 = math.exp %96 : vector<1x8x8xf32>
    %cst_27 = arith.constant dense<0.000000e+00> : vector<1x8xf32>
    %98 = vector.multi_reduction <add>, %97, %cst_27 [2] : vector<1x8x8xf32> to vector<1x8xf32>
    %99 = vector.shape_cast %98 : vector<1x8xf32> to vector<1x8x1xf32>
    %100 = tpu.reciprocal %99 {approx = true} : vector<1x8x1xf32> -> vector<1x8x1xf32>
    %101 = vector.broadcast %100 : vector<1x8x1xf32> to vector<1x8x8xf32>
    %102 = arith.mulf %97, %101 : vector<1x8x8xf32>
    %103 = arith.truncf %102 : vector<1x8x8xf32> to vector<1x8x8xbf16>
    "tpu.trace_start"() <{level = 10 : i32, message = "bqk,bkd->bqd"}> : () -> ()
    %cst_28 = arith.constant dense<0.000000e+00> : vector<1x8x32xf32>
    %104 = tpu.matmul %103, %91, %cst_28 {dimension_numbers = #tpu.dot_dimension_numbers<[2], [1], [1], [2], [0, 0, 0, 1, 1, 2], [0], [0]>} : vector<1x8x8xbf16>, vector<1x8x32xbf16>, vector<1x8x32xf32> -> vector<1x8x32xf32>
    "tpu.trace_stop"() : () -> ()
    %105 = vector.shape_cast %104 : vector<1x8x32xf32> to vector<8x32xf32>
    %106 = arith.truncf %105 : vector<8x32xf32> to vector<8x32xbf16>
    %c0_29 = arith.constant 0 : index
    %c96 = arith.constant 96 : index
    %107 = vector.load %arg22[%c0_29, %c96] : memref<8x128xbf16, #tpu.memory_space<vmem>>, vector<8x32xbf16>
    tpu.vector_store %arg22[%c0_29, %c96], %106 {strides = array<i32>} : memref<8x128xbf16, #tpu.memory_space<vmem>>, vector<8x32xbf16>,
    %c0_30 = arith.constant 0 : index
    %c0_31 = arith.constant 0 : index
    %108 = vector.load %arg22[%c0_30, %c0_31] : memref<8x128xbf16, #tpu.memory_space<vmem>>, vector<8x128xbf16>
    %c0_32 = arith.constant 0 : index
    %c0_33 = arith.constant 0 : index
    %c0_34 = arith.constant 0 : index
    %109 = vector.load %arg7[%c0_32, %c0_33, %c0_34] : memref<1x128x128xbf16, #tpu.memory_space<vmem>>, vector<1x128x128xbf16>
    %110 = vector.shape_cast %109 : vector<1x128x128xbf16> to vector<128x128xbf16>
    %cst_35 = arith.constant dense<0.000000e+00> : vector<8x128xf32>
    %111 = tpu.matmul %108, %110, %cst_35 {dimension_numbers = #tpu.dot_dimension_numbers<[1], [0], [0], [1], [0, 0, 1, 1], [], []>} : vector<8x128xbf16>, vector<128x128xbf16>, vector<8x128xf32> -> vector<8x128xf32>
    %c0_36 = arith.constant 0 : index
    %c0_37 = arith.constant 0 : index
    %c0_38 = arith.constant 0 : index
    %112 = vector.load %arg8[%c0_36, %c0_37, %c0_38] : memref<1x1x128xf32, #tpu.memory_space<vmem>>, vector<1x1x128xf32>
    %113 = vector.shape_cast %112 : vector<1x1x128xf32> to vector<1x128xf32>
    %114 = vector.broadcast %113 : vector<1x128xf32> to vector<8x128xf32>
    %115 = arith.addf %111, %114 : vector<8x128xf32>
    %116 = arith.addf %4, %115 : vector<8x128xf32>
    %c0_39 = arith.constant 0 : index
    %c0_40 = arith.constant 0 : index
    %c0_41 = arith.constant 0 : index
    %117 = vector.load %arg9[%c0_39, %c0_40, %c0_41] : memref<1x1x128xf32, #tpu.memory_space<vmem>>, vector<1x1x128xf32>
    %118 = vector.shape_cast %117 : vector<1x1x128xf32> to vector<1x128xf32>
    %c0_42 = arith.constant 0 : index
    %c0_43 = arith.constant 0 : index
    %c0_44 = arith.constant 0 : index
    %119 = vector.load %arg10[%c0_42, %c0_43, %c0_44] : memref<1x1x128xf32, #tpu.memory_space<vmem>>, vector<1x1x128xf32>
    %120 = vector.shape_cast %119 : vector<1x1x128xf32> to vector<1x128xf32>
    %cst_45 = arith.constant dense<0.000000e+00> : vector<8xf32>
    %121 = vector.multi_reduction <add>, %116, %cst_45 [1] : vector<8x128xf32> to vector<8xf32>
    %122 = vector.shape_cast %121 : vector<8xf32> to vector<8x1xf32>
    %cst_46 = arith.constant 1.280000e+02 : f32
    %123 = vector.broadcast %cst_46 : f32 to vector<8x1xf32>
    %124 = arith.divf %122, %123 : vector<8x1xf32>
    %125 = vector.broadcast %124 : vector<8x1xf32> to vector<8x128xf32>
    %126 = arith.subf %116, %125 : vector<8x128xf32>
    %127 = arith.mulf %126, %126 : vector<8x128xf32>
    %cst_47 = arith.constant dense<0.000000e+00> : vector<8xf32>
    %128 = vector.multi_reduction <add>, %127, %cst_47 [1] : vector<8x128xf32> to vector<8xf32>
    %129 = vector.shape_cast %128 : vector<8xf32> to vector<8x1xf32>
    %cst_48 = arith.constant 1.280000e+02 : f32
    %130 = vector.broadcast %cst_48 : f32 to vector<8x1xf32>
    %131 = arith.divf %129, %130 : vector<8x1xf32>
    %132 = vector.broadcast %124 : vector<8x1xf32> to vector<8x128xf32>
    %133 = arith.subf %116, %132 : vector<8x128xf32>
    %cst_49 = arith.constant 9.99999996E-13 : f32
    %134 = vector.broadcast %cst_49 : f32 to vector<8x1xf32>
    %135 = arith.addf %131, %134 : vector<8x1xf32>
    %136 = math.rsqrt %135 : vector<8x1xf32>
    %137 = vector.broadcast %136 : vector<8x1xf32> to vector<8x128xf32>
    %138 = arith.mulf %133, %137 : vector<8x128xf32>
    %139 = vector.broadcast %118 : vector<1x128xf32> to vector<8x128xf32>
    %140 = arith.mulf %138, %139 : vector<8x128xf32>
    %141 = vector.broadcast %120 : vector<1x128xf32> to vector<8x128xf32>
    %142 = arith.addf %140, %141 : vector<8x128xf32>
    %143 = arith.truncf %142 : vector<8x128xf32> to vector<8x128xbf16>
    %c0_50 = arith.constant 0 : index
    %c0_51 = arith.constant 0 : index
    %c0_52 = arith.constant 0 : index
    %144 = vector.load %arg11[%c0_50, %c0_51, %c0_52] : memref<1x128x256xbf16, #tpu.memory_space<vmem>>, vector<1x128x256xbf16>
    %145 = vector.shape_cast %144 : vector<1x128x256xbf16> to vector<128x256xbf16>
    %cst_53 = arith.constant dense<0.000000e+00> : vector<8x256xf32>
    %146 = tpu.matmul %143, %145, %cst_53 {dimension_numbers = #tpu.dot_dimension_numbers<[1], [0], [0], [1], [0, 0, 1, 1], [], []>} : vector<8x128xbf16>, vector<128x256xbf16>, vector<8x256xf32> -> vector<8x256xf32>
    %c0_54 = arith.constant 0 : index
    %c0_55 = arith.constant 0 : index
    %c0_56 = arith.constant 0 : index
    %147 = vector.load %arg12[%c0_54, %c0_55, %c0_56] : memref<1x1x256xf32, #tpu.memory_space<vmem>>, vector<1x1x256xf32>
    %148 = vector.shape_cast %147 : vector<1x1x256xf32> to vector<1x256xf32>
    %149 = vector.broadcast %148 : vector<1x256xf32> to vector<8x256xf32>
    %150 = arith.addf %146, %149 : vector<8x256xf32>
    %cst_57 = arith.constant 5.000000e-01 : f32
    %151 = vector.broadcast %cst_57 : f32 to vector<8x256xf32>
    %152 = arith.mulf %151, %150 : vector<8x256xf32>
    %cst_58 = arith.constant 4.471500e-02 : f32
    %153 = vector.broadcast %cst_58 : f32 to vector<8x256xf32>
    %154 = arith.mulf %153, %150 : vector<8x256xf32>
    %155 = arith.mulf %154, %150 : vector<8x256xf32>
    %156 = arith.mulf %155, %150 : vector<8x256xf32>
    %157 = arith.addf %150, %156 : vector<8x256xf32>
    %cst_59 = arith.constant 0.797884583 : f32
    %158 = vector.broadcast %cst_59 : f32 to vector<8x256xf32>
    %159 = arith.mulf %158, %157 : vector<8x256xf32>
    %160 = math.tanh %159 : vector<8x256xf32>
    %cst_60 = arith.constant 1.000000e+00 : f32
    %161 = vector.broadcast %cst_60 : f32 to vector<8x256xf32>
    %162 = arith.addf %161, %160 : vector<8x256xf32>
    %163 = arith.mulf %152, %162 : vector<8x256xf32>
    %164 = arith.truncf %163 : vector<8x256xf32> to vector<8x256xbf16>
    %c0_61 = arith.constant 0 : index
    %c0_62 = arith.constant 0 : index
    %c0_63 = arith.constant 0 : index
    %165 = vector.load %arg13[%c0_61, %c0_62, %c0_63] : memref<1x256x128xbf16, #tpu.memory_space<vmem>>, vector<1x256x128xbf16>
    %166 = vector.shape_cast %165 : vector<1x256x128xbf16> to vector<256x128xbf16>
    %cst_64 = arith.constant dense<0.000000e+00> : vector<8x128xf32>
    %167 = tpu.matmul %164, %166, %cst_64 {dimension_numbers = #tpu.dot_dimension_numbers<[1], [0], [0], [1], [0, 0, 1, 1], [], []>} : vector<8x256xbf16>, vector<256x128xbf16>, vector<8x128xf32> -> vector<8x128xf32>
    %c0_65 = arith.constant 0 : index
    %c0_66 = arith.constant 0 : index
    %c0_67 = arith.constant 0 : index
    %168 = vector.load %arg14[%c0_65, %c0_66, %c0_67] : memref<1x1x128xf32, #tpu.memory_space<vmem>>, vector<1x1x128xf32>
    %169 = vector.shape_cast %168 : vector<1x1x128xf32> to vector<1x128xf32>
    %170 = vector.broadcast %169 : vector<1x128xf32> to vector<8x128xf32>
    %171 = arith.addf %167, %170 : vector<8x128xf32>
    %172 = arith.addf %142, %171 : vector<8x128xf32>
    %c0_68 = arith.constant 0 : index
    %c0_69 = arith.constant 0 : index
    %c0_70 = arith.constant 0 : index
    %173 = vector.load %arg15[%c0_68, %c0_69, %c0_70] : memref<1x1x128xf32, #tpu.memory_space<vmem>>, vector<1x1x128xf32>
    %174 = vector.shape_cast %173 : vector<1x1x128xf32> to vector<1x128xf32>
    %c0_71 = arith.constant 0 : index
    %c0_72 = arith.constant 0 : index
    %c0_73 = arith.constant 0 : index
    %175 = vector.load %arg16[%c0_71, %c0_72, %c0_73] : memref<1x1x128xf32, #tpu.memory_space<vmem>>, vector<1x1x128xf32>
    %176 = vector.shape_cast %175 : vector<1x1x128xf32> to vector<1x128xf32>
    %cst_74 = arith.constant dense<0.000000e+00> : vector<8xf32>
    %177 = vector.multi_reduction <add>, %172, %cst_74 [1] : vector<8x128xf32> to vector<8xf32>
    %178 = vector.shape_cast %177 : vector<8xf32> to vector<8x1xf32>
    %cst_75 = arith.constant 1.280000e+02 : f32
    %179 = vector.broadcast %cst_75 : f32 to vector<8x1xf32>
    %180 = arith.divf %178, %179 : vector<8x1xf32>
    %181 = vector.broadcast %180 : vector<8x1xf32> to vector<8x128xf32>
    %182 = arith.subf %172, %181 : vector<8x128xf32>
    %183 = arith.mulf %182, %182 : vector<8x128xf32>
    %cst_76 = arith.constant dense<0.000000e+00> : vector<8xf32>
    %184 = vector.multi_reduction <add>, %183, %cst_76 [1] : vector<8x128xf32> to vector<8xf32>
    %185 = vector.shape_cast %184 : vector<8xf32> to vector<8x1xf32>
    %cst_77 = arith.constant 1.280000e+02 : f32
    %186 = vector.broadcast %cst_77 : f32 to vector<8x1xf32>
    %187 = arith.divf %185, %186 : vector<8x1xf32>
    %188 = vector.broadcast %180 : vector<8x1xf32> to vector<8x128xf32>
    %189 = arith.subf %172, %188 : vector<8x128xf32>
    %cst_78 = arith.constant 9.99999996E-13 : f32
    %190 = vector.broadcast %cst_78 : f32 to vector<8x1xf32>
    %191 = arith.addf %187, %190 : vector<8x1xf32>
    %192 = math.rsqrt %191 : vector<8x1xf32>
    %193 = vector.broadcast %192 : vector<8x1xf32> to vector<8x128xf32>
    %194 = arith.mulf %189, %193 : vector<8x128xf32>
    %195 = vector.broadcast %174 : vector<1x128xf32> to vector<8x128xf32>
    %196 = arith.mulf %194, %195 : vector<8x128xf32>
    %197 = vector.broadcast %176 : vector<1x128xf32> to vector<8x128xf32>
    %198 = arith.addf %196, %197 : vector<8x128xf32>
    %199 = arith.truncf %198 : vector<8x128xf32> to vector<8x128xbf16>
    %c0_79 = arith.constant 0 : index
    %c0_80 = arith.constant 0 : index
    %200 = vector.load %arg21[%c0_79, %c0_80] : memref<8x128xbf16, #tpu.memory_space<vmem>>, vector<8x128xbf16>
    tpu.vector_store %arg21[%c0_79, %c0_80], %199 {strides = array<i32>} : memref<8x128xbf16, #tpu.memory_space<vmem>>, vector<8x128xbf16>,
    %c5_i32 = arith.constant 5 : i32
    %201 = arith.cmpi eq, %arg1, %c5_i32 : i32
    %202 = arith.extui %201 : i1 to i32
    %c0_i32_81 = arith.constant 0 : i32
    %203 = arith.cmpi ne, %202, %c0_i32_81 : i32
    scf.if %203 {
      %204 = arith.truncf %198 : vector<8x128xf32> to vector<8x128xbf16>
      %c0_82 = arith.constant 0 : index
      %c0_83 = arith.constant 0 : index
      %205 = vector.load %arg17[%c0_82, %c0_83] : memref<128x128xbf16, #tpu.memory_space<vmem>>, vector<128x128xbf16>
      %cst_84 = arith.constant dense<0.000000e+00> : vector<8x128xf32>
      %206 = tpu.matmul %204, %205, %cst_84 {dimension_numbers = #tpu.dot_dimension_numbers<[1], [0], [0], [1], [0, 0, 1, 1], [], []>} : vector<8x128xbf16>, vector<128x128xbf16>, vector<8x128xf32> -> vector<8x128xf32>
      %c0_85 = arith.constant 0 : index
      %c0_86 = arith.constant 0 : index
      %207 = vector.load %arg18[%c0_85, %c0_86] : memref<1x128xf32, #tpu.memory_space<vmem>>, vector<1x128xf32>
      %208 = vector.broadcast %207 : vector<1x128xf32> to vector<8x128xf32>
      %209 = arith.addf %206, %208 : vector<8x128xf32>
      %cst_87 = arith.constant 5.000000e-01 : f32
      %210 = vector.broadcast %cst_87 : f32 to vector<8x128xf32>
      %211 = arith.mulf %210, %209 : vector<8x128xf32>
      %cst_88 = arith.constant 4.471500e-02 : f32
      %212 = vector.broadcast %cst_88 : f32 to vector<8x128xf32>
      %213 = arith.mulf %212, %209 : vector<8x128xf32>
      %214 = arith.mulf %213, %209 : vector<8x128xf32>
      %215 = arith.mulf %214, %209 : vector<8x128xf32>
      %216 = arith.addf %209, %215 : vector<8x128xf32>
      %cst_89 = arith.constant 0.797884583 : f32
      %217 = vector.broadcast %cst_89 : f32 to vector<8x128xf32>
      %218 = arith.mulf %217, %216 : vector<8x128xf32>
      %219 = math.tanh %218 : vector<8x128xf32>
      %cst_90 = arith.constant 1.000000e+00 : f32
      %220 = vector.broadcast %cst_90 : f32 to vector<8x128xf32>
      %221 = arith.addf %220, %219 : vector<8x128xf32>
      %222 = arith.mulf %211, %221 : vector<8x128xf32>
      %c0_91 = arith.constant 0 : index
      %c0_92 = arith.constant 0 : index
      %223 = vector.load %arg19[%c0_91, %c0_92] : memref<1x128xf32, #tpu.memory_space<vmem>>, vector<1x128xf32>
      %c0_93 = arith.constant 0 : index
      %c0_94 = arith.constant 0 : index
      %224 = vector.load %arg20[%c0_93, %c0_94] : memref<1x128xf32, #tpu.memory_space<vmem>>, vector<1x128xf32>
      %cst_95 = arith.constant dense<0.000000e+00> : vector<8xf32>
      %225 = vector.multi_reduction <add>, %222, %cst_95 [1] : vector<8x128xf32> to vector<8xf32>
      %226 = vector.shape_cast %225 : vector<8xf32> to vector<8x1xf32>
      %cst_96 = arith.constant 1.280000e+02 : f32
      %227 = vector.broadcast %cst_96 : f32 to vector<8x1xf32>
      %228 = arith.divf %226, %227 : vector<8x1xf32>
      %229 = vector.broadcast %228 : vector<8x1xf32> to vector<8x128xf32>
      %230 = arith.subf %222, %229 : vector<8x128xf32>
      %231 = arith.mulf %230, %230 : vector<8x128xf32>
      %cst_97 = arith.constant dense<0.000000e+00> : vector<8xf32>
      %232 = vector.multi_reduction <add>, %231, %cst_97 [1] : vector<8x128xf32> to vector<8xf32>
      %233 = vector.shape_cast %232 : vector<8xf32> to vector<8x1xf32>
      %cst_98 = arith.constant 1.280000e+02 : f32
      %234 = vector.broadcast %cst_98 : f32 to vector<8x1xf32>
      %235 = arith.divf %233, %234 : vector<8x1xf32>
      %236 = vector.broadcast %228 : vector<8x1xf32> to vector<8x128xf32>
      %237 = arith.subf %222, %236 : vector<8x128xf32>
      %cst_99 = arith.constant 9.99999996E-13 : f32
      %238 = vector.broadcast %cst_99 : f32 to vector<8x1xf32>
      %239 = arith.addf %235, %238 : vector<8x1xf32>
      %240 = math.rsqrt %239 : vector<8x1xf32>
      %241 = vector.broadcast %240 : vector<8x1xf32> to vector<8x128xf32>
      %242 = arith.mulf %237, %241 : vector<8x128xf32>
      %243 = vector.broadcast %223 : vector<1x128xf32> to vector<8x128xf32>
      %244 = arith.mulf %242, %243 : vector<8x128xf32>
      %245 = vector.broadcast %224 : vector<1x128xf32> to vector<8x128xf32>
      %246 = arith.addf %244, %245 : vector<8x128xf32>
      %247 = arith.truncf %246 : vector<8x128xf32> to vector<8x128xbf16>
      %c0_100 = arith.constant 0 : index
      %c0_101 = arith.constant 0 : index
      %248 = vector.load %arg21[%c0_100, %c0_101] : memref<8x128xbf16, #tpu.memory_space<vmem>>, vector<8x128xbf16>
      tpu.vector_store %arg21[%c0_100, %c0_101], %247 {strides = array<i32>} : memref<8x128xbf16, #tpu.memory_space<vmem>>, vector<8x128xbf16>,
    } else {
    }
    return
  }
  func.func @transform_0(%arg0: i32, %arg1: i32) -> (i32, i32) {
    %c0_i32 = arith.constant 0 : i32
    %c0_i32_0 = arith.constant 0 : i32
    return %arg0, %c0_i32 : i32, i32
  }
  func.func @transform_1(%arg0: i32, %arg1: i32) -> (i32, i32) {
    %c0_i32 = arith.constant 0 : i32
    %c0_i32_0 = arith.constant 0 : i32
    %c0_i32_1 = arith.constant 0 : i32
    return %c0_i32, %c0_i32_0 : i32, i32
  }
  func.func @transform_2(%arg0: i32, %arg1: i32) -> (i32, i32) {
    %c0_i32 = arith.constant 0 : i32
    %c0_i32_0 = arith.constant 0 : i32
    %c0_i32_1 = arith.constant 0 : i32
    return %c0_i32, %c0_i32_0 : i32, i32
  }
  func.func @transform_3(%arg0: i32, %arg1: i32) -> (i32, i32, i32) {
    %c0_i32 = arith.constant 0 : i32
    %c0_i32_0 = arith.constant 0 : i32
    %c0_i32_1 = arith.constant 0 : i32
    return %arg1, %c0_i32, %c0_i32_0 : i32, i32, i32
  }
  func.func @transform_4(%arg0: i32, %arg1: i32) -> (i32, i32, i32) {
    %c0_i32 = arith.constant 0 : i32
    %c0_i32_0 = arith.constant 0 : i32
    %c0_i32_1 = arith.constant 0 : i32
    return %arg1, %c0_i32, %c0_i32_0 : i32, i32, i32
  }
  func.func @transform_5(%arg0: i32, %arg1: i32) -> (i32, i32, i32) {
    %c0_i32 = arith.constant 0 : i32
    %c0_i32_0 = arith.constant 0 : i32
    %c0_i32_1 = arith.constant 0 : i32
    return %arg1, %c0_i32, %c0_i32_0 : i32, i32, i32
  }
  func.func @transform_6(%arg0: i32, %arg1: i32) -> (i32, i32, i32) {
    %c0_i32 = arith.constant 0 : i32
    %c0_i32_0 = arith.constant 0 : i32
    %c0_i32_1 = arith.constant 0 : i32
    return %arg1, %c0_i32, %c0_i32_0 : i32, i32, i32
  }
  func.func @transform_7(%arg0: i32, %arg1: i32) -> (i32, i32, i32) {
    %c0_i32 = arith.constant 0 : i32
    %c0_i32_0 = arith.constant 0 : i32
    %c0_i32_1 = arith.constant 0 : i32
    return %arg1, %c0_i32, %c0_i32_0 : i32, i32, i32
  }
  func.func @transform_8(%arg0: i32, %arg1: i32) -> (i32, i32, i32) {
    %c0_i32 = arith.constant 0 : i32
    %c0_i32_0 = arith.constant 0 : i32
    %c0_i32_1 = arith.constant 0 : i32
    return %arg1, %c0_i32, %c0_i32_0 : i32, i32, i32
  }
  func.func @transform_9(%arg0: i32, %arg1: i32) -> (i32, i32, i32) {
    %c0_i32 = arith.constant 0 : i32
    %c0_i32_0 = arith.constant 0 : i32
    %c0_i32_1 = arith.constant 0 : i32
    return %arg1, %c0_i32, %c0_i32_0 : i32, i32, i32
  }
  func.func @transform_10(%arg0: i32, %arg1: i32) -> (i32, i32, i32) {
    %c0_i32 = arith.constant 0 : i32
    %c0_i32_0 = arith.constant 0 : i32
    %c0_i32_1 = arith.constant 0 : i32
    return %arg1, %c0_i32, %c0_i32_0 : i32, i32, i32
  }
  func.func @transform_11(%arg0: i32, %arg1: i32) -> (i32, i32, i32) {
    %c0_i32 = arith.constant 0 : i32
    %c0_i32_0 = arith.constant 0 : i32
    %c0_i32_1 = arith.constant 0 : i32
    return %arg1, %c0_i32, %c0_i32_0 : i32, i32, i32
  }
  func.func @transform_12(%arg0: i32, %arg1: i32) -> (i32, i32, i32) {
    %c0_i32 = arith.constant 0 : i32
    %c0_i32_0 = arith.constant 0 : i32
    %c0_i32_1 = arith.constant 0 : i32
    return %arg1, %c0_i32, %c0_i32_0 : i32, i32, i32
  }
  func.func @transform_13(%arg0: i32, %arg1: i32) -> (i32, i32, i32) {
    %c0_i32 = arith.constant 0 : i32
    %c0_i32_0 = arith.constant 0 : i32
    %c0_i32_1 = arith.constant 0 : i32
    return %arg1, %c0_i32, %c0_i32_0 : i32, i32, i32
  }
  func.func @transform_14(%arg0: i32, %arg1: i32) -> (i32, i32, i32) {
    %c0_i32 = arith.constant 0 : i32
    %c0_i32_0 = arith.constant 0 : i32
    %c0_i32_1 = arith.constant 0 : i32
    return %arg1, %c0_i32, %c0_i32_0 : i32, i32, i32
  }
  func.func @transform_15(%arg0: i32, %arg1: i32) -> (i32, i32) {
    %c0_i32 = arith.constant 0 : i32
    %c0_i32_0 = arith.constant 0 : i32
    %c0_i32_1 = arith.constant 0 : i32
    return %c0_i32, %c0_i32_0 : i32, i32
  }
  func.func @transform_16(%arg0: i32, %arg1: i32) -> (i32, i32) {
    %c0_i32 = arith.constant 0 : i32
    %c0_i32_0 = arith.constant 0 : i32
    %c0_i32_1 = arith.constant 0 : i32
    return %c0_i32, %c0_i32_0 : i32, i32
  }
  func.func @transform_17(%arg0: i32, %arg1: i32) -> (i32, i32) {
    %c0_i32 = arith.constant 0 : i32
    %c0_i32_0 = arith.constant 0 : i32
    %c0_i32_1 = arith.constant 0 : i32
    return %c0_i32, %c0_i32_0 : i32, i32
  }
  func.func @transform_18(%arg0: i32, %arg1: i32) -> (i32, i32) {
    %c0_i32 = arith.constant 0 : i32
    %c0_i32_0 = arith.constant 0 : i32
    %c0_i32_1 = arith.constant 0 : i32
    return %c0_i32, %c0_i32_0 : i32, i32
  }
  func.func @transform_19(%arg0: i32, %arg1: i32) -> (i32, i32) {
    %c0_i32 = arith.constant 0 : i32
    %c0_i32_0 = arith.constant 0 : i32
    return %arg0, %c0_i32 : i32, i32
  }
}

</mosaic_0001>

<llo_original>
// kernel: bert_forward.3
$region0: #{bert_forward.3}
  #allocation0 [shape = 'u32[]', space=smem, size = 0x4, offset = 0x4, fixed_abs, tag = 'smem constant byte address 0x4 - core index']
  #allocation1 [shape = 'u32[144,128]{1,0:T(1,128)}', space=vmem, size = 0x12000, scoped, tag = 'internal scratch']
  %s0 = inlined_call_operand.vmem [shape: bf16[16,128], index: 0, kind: input, shape index: {}]
  %s1 = inlined_call_operand.vmem [shape: bf16[128,1024], index: 1, kind: input, shape index: {}]
  %s2 = inlined_call_operand.vmem [shape: f32[1,1024], index: 2, kind: input, shape index: {}]
  %s3 = inlined_call_operand.vmem [shape: f32[16,1024], index: 3, kind: output, shape index: {}]
  %s4 = sld [smem:[#allocation0]]
  $region87: #{bert_forward.3} parent=0
    _
  %s6 = ssub.s32 1, %s4
  %s7 = scalar_select 0, %s6, %s4
  $region1: #{bert_forward.3} parent=0
    #allocation2 [shape = 'u8[262144]{0}', space=vmem, size = 0x40000, scoped, tag = 'input window, operand 1']
    #allocation3 [shape = 'u8[65536]{0}', space=vmem, size = 0x10000, scoped, tag = 'output window, operand 0']
    loop: start=0, step=1, limit=4
    $region2: #{bert_forward.3} parent=1 // loop_pre_header
      _
    $region3: #{bert_forward.3} parent=1 // loop_header
      %s9 = sphi 0, %s13
      %p10 = scmp.ge.s32.totalorder %s9, 4
      %s17 = sphi 0, %s17
      %s19 = sphi 0, %s17
      %s20 = sphi 0, %s19
      %s34 = sphi 0, %s20
      %s40 = sphi 0, %s42
      %s43 = sphi 0, %s40
      %s44 = sphi 0, %s43
      %s60 = sphi 0, %s44
      %s66 = sphi 0, %s68
      %s69 = sphi 0, %s66
      %s70 = sphi 0, %s69
      %s86 = sphi 0, %s70
      %s92 = sphi 0, %s94
      %s95 = sphi 0, %s92
      %s96 = sphi 0, %s95
      %s112 = sphi 0, %s96
    $region4: #{bert_forward.3} parent=1 // loop_header_branch
      %12 = sbr.rel (%p10) target = $region8
    $region5: #{bert_forward.3} parent=1 // loop_body
      %s14 = ssub.s32 %s9, 1
      %s15 = ssub.s32 %s9, 2
      %s16 = sadd.s32 %s9, 1
      %s18 = sadd.s32 %s17, 1
      %p21 = scmp.eq.s32.totalorder %s9, 1
      %p22 = scmp.ne.s32.totalorder %s17, %s19
      %p23 = scmp.eq.s32.totalorder %s9, 0
      %p24 = por %p22, %p23
      %p25 = scmp.ne.s32.totalorder %s17, %s19
      %p26 = scmp.eq.s32.totalorder %s14, 1
      %p27 = por %p25, %p26
      %p28 = scmp.ne.s32.totalorder %s19, %s20
      %p29 = scmp.eq.s32.totalorder %s14, 0
      %p30 = por %p28, %p29
      %p31 = scmp.ne.s32.totalorder %s19, %s20
      %p32 = scmp.eq.s32.totalorder %s15, 1
      %p33 = por %p31, %p32
      %p35 = scmp.ne.s32.totalorder %s20, %s34
      %p36 = scmp.eq.s32.totalorder %s15, 0
      %p37 = por %p35, %p36
      %s38 = ssub.s32 %s9, %s16
      %p39 = scmp.eq.s32.totalorder %s38, 0
      %s41 = sadd.s32 %s40, 1
      %s42 = scalar_select %p39, %s40, %s41
      %p45 = pneg %p39
      %p46 = scmp.eq.s32.totalorder %s9, 1
      %p47 = por %p45, %p46
      %p48 = scmp.ne.s32.totalorder %s40, %s43
      %p49 = scmp.eq.s32.totalorder %s9, 0
      %p50 = por %p48, %p49
      %p51 = scmp.ne.s32.totalorder %s40, %s43
      %p52 = scmp.eq.s32.totalorder %s14, 1
      %p53 = por %p51, %p52
      %p54 = scmp.ne.s32.totalorder %s43, %s44
      %p55 = scmp.eq.s32.totalorder %s14, 0
      %p56 = por %p54, %p55
      %p57 = scmp.ne.s32.totalorder %s43, %s44
      %p58 = scmp.eq.s32.totalorder %s15, 1
      %p59 = por %p57, %p58
      %p61 = scmp.ne.s32.totalorder %s44, %s60
      %p62 = scmp.eq.s32.totalorder %s15, 0
      %p63 = por %p61, %p62
      %s64 = ssub.s32 %s9, %s16
      %p65 = scmp.eq.s32.totalorder %s64, 0
      %s67 = sadd.s32 %s66, 1
      %s68 = scalar_select %p65, %s66, %s67
      %p71 = pneg %p65
      %p72 = scmp.eq.s32.totalorder %s9, 1
      %p73 = por %p71, %p72
      %p74 = scmp.ne.s32.totalorder %s66, %s69
      %p75 = scmp.eq.s32.totalorder %s9, 0
      %p76 = por %p74, %p75
      %p77 = scmp.ne.s32.totalorder %s66, %s69
      %p78 = scmp.eq.s32.totalorder %s14, 1
      %p79 = por %p77, %p78
      %p80 = scmp.ne.s32.totalorder %s69, %s70
      %p81 = scmp.eq.s32.totalorder %s14, 0
      %p82 = por %p80, %p81
      %p83 = scmp.ne.s32.totalorder %s69, %s70
      %p84 = scmp.eq.s32.totalorder %s15, 1
      %p85 = por %p83, %p84
      %p87 = scmp.ne.s32.totalorder %s70, %s86
      %p88 = scmp.eq.s32.totalorder %s15, 0
      %p89 = por %p87, %p88
      %s90 = ssub.s32 %s9, %s16
      %p91 = scmp.eq.s32.totalorder %s90, 0
      %s93 = sadd.s32 %s92, 1
      %s94 = scalar_select %p91, %s92, %s93
      %p97 = pneg %p91
      %p98 = scmp.eq.s32.totalorder %s9, 1
      %p99 = por %p97, %p98
      %p100 = scmp.ne.s32.totalorder %s92, %s95
      %p101 = scmp.eq.s32.totalorder %s9, 0
      %p102 = por %p100, %p101
      %p103 = scmp.ne.s32.totalorder %s92, %s95
      %p104 = scmp.eq.s32.totalorder %s14, 1
      %p105 = por %p103, %p104
      %p106 = scmp.ne.s32.totalorder %s95, %s96
      %p107 = scmp.eq.s32.totalorder %s14, 0
      %p108 = por %p106, %p107
      %p109 = scmp.ne.s32.totalorder %s95, %s96
      %p110 = scmp.eq.s32.totalorder %s15, 1
      %p111 = por %p109, %p110
      %p113 = scmp.ne.s32.totalorder %s96, %s112
      %p114 = scmp.eq.s32.totalorder %s15, 0
      %p115 = por %p113, %p114
      %p116 = scmp.le.s32.totalorder 1, %s9
      %p117 = scmp.lt.s32.totalorder %s9, 3
      %p118 = pnand %p116, %p117
      %p119 = pneg %p118
      // Predicated region
      $region9: #{bert_forward.3} parent=5 // pred_check
        _
      $region10: #{bert_forward.3} parent=5 // pred_check_branch
        %121 = sbr.rel (%p118) target = $region12
      $region11: #{bert_forward.3} parent=5 // pred_region
        %s122 = ssub.s32 %s9, 1
        // Predicated region
        $region13: #{bert_forward.3} parent=11 // pred_check
          %p123 = pneg %p30
        $region14: #{bert_forward.3} parent=11 // pred_check_branch
          %125 = sbr.rel (%p123) target = $region16
        $region15: #{bert_forward.3} parent=11 // pred_region
          _
        $region16: #{bert_forward.3} parent=11 // pred_fallthru
          _
      $region12: #{bert_forward.3} parent=5 // pred_fallthru
        _
      %p126 = scmp.lt.s32.totalorder %s9, 2
      // Predicated region
      $region17: #{bert_forward.3} parent=5 // pred_check
        %p127 = pneg %p126
      $region18: #{bert_forward.3} parent=5 // pred_check_branch
        %129 = sbr.rel (%p127) target = $region20
      $region19: #{bert_forward.3} parent=5 // pred_region
        // Predicated region
        $region21: #{bert_forward.3} parent=19 // pred_check
          %p130 = pneg %p50
        $region22: #{bert_forward.3} parent=19 // pred_check_branch
          %132 = sbr.rel (%p130) target = $region24
        $region23: #{bert_forward.3} parent=19 // pred_region
          %s133 = sand.u32 %s40, 1
          %s134 = sand.u32 %s40, 1
          %s135 = smul.addr %s134, 256
          %s136 = scalar_lea.vmem [#allocation2], %s135
          %s137 = smul.u32 4, %s9
          %s138 = smul.addr %s137, 4
          %s139 = scalar_lea.vmem %s1, %s138
          // Predicated region
          $region25: #{bert_forward.3} parent=23 // pred_check
            _
          $region26: #{bert_forward.3} parent=23 // pred_check_branch
            %141 = sbr.rel (0) target = $region28
          $region27: #{bert_forward.3} parent=23 // pred_region
            // Predicated region
            $region29: #{bert_forward.3} parent=27 // pred_check
              _
            $region30: #{bert_forward.3} parent=27 // pred_check_branch
              %143 = sbr.rel (0) target = $region32
            $region31: #{bert_forward.3} parent=27 // pred_region
              loop: start=0, step=1, limit=1
              $region33: #{bert_forward.3} parent=31 // loop_pre_header
                _
              $region34: #{bert_forward.3} parent=31 // loop_header
                %s145 = sphi 0, %s149
                %p146 = scmp.ge.s32.totalorder %s145, 1
                %s150 = sphi %s139, %s139
                %s151 = sphi %s136, %s136
              $region35: #{bert_forward.3} parent=31 // loop_header_branch
                %148 = sbr.rel (%p146) target = $region39
              $region36: #{bert_forward.3} parent=31 // loop_body
                %v152 = vld [vmem:[%s150] sm:$0xff]
                %153 = vst [vmem:[%s151] sm:$0xff] %v152
                %v154 = vld [vmem:[%s150 + $0x8] sm:$0xff]
                %155 = vst [vmem:[%s151 + $0x8] sm:$0xff] %v154
                %v156 = vld [vmem:[%s150 + $0x20] sm:$0xff]
                %157 = vst [vmem:[%s151 + $0x10] sm:$0xff] %v156
                %v158 = vld [vmem:[%s150 + $0x28] sm:$0xff]
                %159 = vst [vmem:[%s151 + $0x18] sm:$0xff] %v158
                %v160 = vld [vmem:[%s150 + $0x40] sm:$0xff]
                %161 = vst [vmem:[%s151 + $0x20] sm:$0xff] %v160
                %v162 = vld [vmem:[%s150 + $0x48] sm:$0xff]
                %163 = vst [vmem:[%s151 + $0x28] sm:$0xff] %v162
                %v164 = vld [vmem:[%s150 + $0x60] sm:$0xff]
                %165 = vst [vmem:[%s151 + $0x30] sm:$0xff] %v164
                %v166 = vld [vmem:[%s150 + $0x68] sm:$0xff]
                %167 = vst [vmem:[%s151 + $0x38] sm:$0xff] %v166
                %v168 = vld [vmem:[%s150 + $0x80] sm:$0xff]
                %169 = vst [vmem:[%s151 + $0x40] sm:$0xff] %v168
                %v170 = vld [vmem:[%s150 + $0x88] sm:$0xff]
                %171 = vst [vmem:[%s151 + $0x48] sm:$0xff] %v170
                %v172 = vld [vmem:[%s150 + $0xa0] sm:$0xff]
                %173 = vst [vmem:[%s151 + $0x50] sm:$0xff] %v172
                %v174 = vld [vmem:[%s150 + $0xa8] sm:$0xff]
                %175 = vst [vmem:[%s151 + $0x58] sm:$0xff] %v174
                %v176 = vld [vmem:[%s150 + $0xc0] sm:$0xff]
                %177 = vst [vmem:[%s151 + $0x60] sm:$0xff] %v176
                %v178 = vld [vmem:[%s150 + $0xc8] sm:$0xff]
                %179 = vst [vmem:[%s151 + $0x68] sm:$0xff] %v178
                %v180 = vld [vmem:[%s150 + $0xe0] sm:$0xff]
                %181 = vst [vmem:[%s151 + $0x70] sm:$0xff] %v180
                %v182 = vld [vmem:[%s150 + $0xe8] sm:$0xff]
                %183 = vst [vmem:[%s151 + $0x78] sm:$0xff] %v182
                %v184 = vld [vmem:[%s150 + $0x100] sm:$0xff]
                %185 = vst [vmem:[%s151 + $0x80] sm:$0xff] %v184
                %v186 = vld [vmem:[%s150 + $0x108] sm:$0xff]
                %187 = vst [vmem:[%s151 + $0x88] sm:$0xff] %v186
                %v188 = vld [vmem:[%s150 + $0x120] sm:$0xff]
                %189 = vst [vmem:[%s151 + $0x90] sm:$0xff] %v188
                %v190 = vld [vmem:[%s150 + $0x128] sm:$0xff]
                %191 = vst [vmem:[%s151 + $0x98] sm:$0xff] %v190
                %v192 = vld [vmem:[%s150 + $0x140] sm:$0xff]
                %193 = vst [vmem:[%s151 + $0xa0] sm:$0xff] %v192
                %v194 = vld [vmem:[%s150 + $0x148] sm:$0xff]
                %195 = vst [vmem:[%s151 + $0xa8] sm:$0xff] %v194
                %v196 = vld [vmem:[%s150 + $0x160] sm:$0xff]
                %197 = vst [vmem:[%s151 + $0xb0] sm:$0xff] %v196
                %v198 = vld [vmem:[%s150 + $0x168] sm:$0xff]
                %199 = vst [vmem:[%s151 + $0xb8] sm:$0xff] %v198
                %v200 = vld [vmem:[%s150 + $0x180] sm:$0xff]
                %201 = vst [vmem:[%s151 + $0xc0] sm:$0xff] %v200
                %v202 = vld [vmem:[%s150 + $0x188] sm:$0xff]
                %203 = vst [vmem:[%s151 + $0xc8] sm:$0xff] %v202
                %v204 = vld [vmem:[%s150 + $0x1a0] sm:$0xff]
                %205 = vst [vmem:[%s151 + $0xd0] sm:$0xff] %v204
                %v206 = vld [vmem:[%s150 + $0x1a8] sm:$0xff]
                %207 = vst [vmem:[%s151 + $0xd8] sm:$0xff] %v206
                %v208 = vld [vmem:[%s150 + $0x1c0] sm:$0xff]
                %209 = vst [vmem:[%s151 + $0xe0] sm:$0xff] %v208
                %v210 = vld [vmem:[%s150 + $0x1c8] sm:$0xff]
                %211 = vst [vmem:[%s151 + $0xe8] sm:$0xff] %v210
                %v212 = vld [vmem:[%s150 + $0x1e0] sm:$0xff]
                %213 = vst [vmem:[%s151 + $0xf0] sm:$0xff] %v212
                %v214 = vld [vmem:[%s150 + $0x1e8] sm:$0xff]
                %215 = vst [vmem:[%s151 + $0xf8] sm:$0xff] %v214
              $region37: #{bert_forward.3} parent=31 // loop_footer
                %s149 = sadd.s32 1, %s145
              $region38: #{bert_forward.3} parent=31 // loop_footer_branch
                %144 = sbr.rel target = $region34
              $region39: #{bert_forward.3} parent=31 // loop_exit
                _
            $region32: #{bert_forward.3} parent=27 // pred_fallthru
              _
            // Predicated region
            $region40: #{bert_forward.3} parent=27 // pred_check
              _
            $region41: #{bert_forward.3} parent=27 // pred_check_branch
              %217 = sbr.rel target = $region43
            $region42: #{bert_forward.3} parent=27 // pred_region
              _
            $region43: #{bert_forward.3} parent=27 // pred_fallthru
              _
          $region28: #{bert_forward.3} parent=23 // pred_fallthru
            _
          %218 = vnop
        $region24: #{bert_forward.3} parent=19 // pred_fallthru
          _
        // Predicated region
        $region44: #{bert_forward.3} parent=19 // pred_check
          %p219 = pneg %p76
        $region45: #{bert_forward.3} parent=19 // pred_check_branch
          %221 = sbr.rel (%p219) target = $region47
        $region46: #{bert_forward.3} parent=19 // pred_region
          %s222 = smul.u32 4, %s9
          %p223 = scmp.lt.s32.totalorder %s222, 7
          %s224 = scalar_select %p223, %s222, 7
          %s225 = scalar_lea.vmem %s2, %s224
          %s226 = smul.u32 4, %s9
        $region47: #{bert_forward.3} parent=19 // pred_fallthru
          _
      $region20: #{bert_forward.3} parent=5 // pred_fallthru
        _
      %p227 = scmp.le.s32.totalorder 1, %s9
      %p228 = scmp.lt.s32.totalorder %s9, 3
      %p229 = pnand %p227, %p228
      %p230 = pneg %p229
      // Predicated region
      $region48: #{bert_forward.3} parent=5 // pred_check
        _
      $region49: #{bert_forward.3} parent=5 // pred_check_branch
        %232 = sbr.rel (%p229) target = $region51
      $region50: #{bert_forward.3} parent=5 // pred_region
        %s233 = ssub.s32 %s9, 1
        %s234 = sand.u32 %s43, 1
        %s235 = sand.u32 %s43, 1
        %s236 = smul.addr %s235, 256
        %s237 = scalar_lea.vmem [#allocation2], %s236
        // Predicated region
        $region52: #{bert_forward.3} parent=50 // pred_check
          %p238 = pneg %p56
        $region53: #{bert_forward.3} parent=50 // pred_check_branch
          %240 = sbr.rel (%p238) target = $region55
        $region54: #{bert_forward.3} parent=50 // pred_region
          _
        $region55: #{bert_forward.3} parent=50 // pred_fallthru
          _
        %p241 = pneg %p30
        %p242 = pneg %p27
        %s243 = sand.u32 %s43, 1
        %s244 = sand.u32 %s43, 1
        %s245 = smul.addr %s244, 256
        %s246 = scalar_lea.vmem [#allocation2], %s245
        %p247 = pneg %p56
        %p248 = pneg %p53
        %s249 = smul.u32 4, %s14
        %p250 = scmp.lt.s32.totalorder %s249, 7
        %s251 = scalar_select %p250, %s249, 7
        %s252 = scalar_lea.vmem %s2, %s251
        %p253 = pneg %p82
        %p254 = pneg %p79
        %p255 = pneg %p108
        %p256 = pneg %p105
        %s257 = sand.u32 %s95, 1
        %s258 = sand.u32 %s95, 1
        %s259 = smul.addr %s258, 64
        %s260 = scalar_lea.vmem [#allocation3], %s259
        %s261 = smul.u32 4, %s14
        %s262 = smul.u32 4, %s14
        %p263 = scmp.lt.s32.totalorder %s262, 7
        %s264 = scalar_select %p263, %s262, 7
        %s265 = scalar_lea.vmem %s2, %s264
        %s266 = smul.u32 4, %s14
        %s267 = smul.u32 4, %s14
        %v269 = vld [vmem:[%s0] sm:$0xf]
        %v270 = vld [vmem:[%s0 + $0x4] sm:$0xf]
        %v271 = vld [vmem:[%s237] sm:$0xff]
        %v272 = vld [vmem:[%s237 + $0x8] sm:$0xff]
        %v273 = vld [vmem:[%s237 + $0x10] sm:$0xff]
        %v274 = vld [vmem:[%s237 + $0x18] sm:$0xff]
        %v275 = vld [vmem:[%s237 + $0x20] sm:$0xff]
        %v276 = vld [vmem:[%s237 + $0x28] sm:$0xff]
        %v277 = vld [vmem:[%s237 + $0x30] sm:$0xff]
        %v278 = vld [vmem:[%s237 + $0x38] sm:$0xff]
        %v279 = vld [vmem:[%s237 + $0x40] sm:$0xff]
        %v280 = vld [vmem:[%s237 + $0x48] sm:$0xff]
        %v281 = vld [vmem:[%s237 + $0x50] sm:$0xff]
        %v282 = vld [vmem:[%s237 + $0x58] sm:$0xff]
        %v283 = vld [vmem:[%s237 + $0x60] sm:$0xff]
        %v284 = vld [vmem:[%s237 + $0x68] sm:$0xff]
        %v285 = vld [vmem:[%s237 + $0x70] sm:$0xff]
        %v286 = vld [vmem:[%s237 + $0x78] sm:$0xff]
        %v287 = vld [vmem:[%s237 + $0x80] sm:$0xff]
        %v288 = vld [vmem:[%s237 + $0x88] sm:$0xff]
        %v289 = vld [vmem:[%s237 + $0x90] sm:$0xff]
        %v290 = vld [vmem:[%s237 + $0x98] sm:$0xff]
        %v291 = vld [vmem:[%s237 + $0xa0] sm:$0xff]
        %v292 = vld [vmem:[%s237 + $0xa8] sm:$0xff]
        %v293 = vld [vmem:[%s237 + $0xb0] sm:$0xff]
        %v294 = vld [vmem:[%s237 + $0xb8] sm:$0xff]
        %v295 = vld [vmem:[%s237 + $0xc0] sm:$0xff]
        %v296 = vld [vmem:[%s237 + $0xc8] sm:$0xff]
        %v297 = vld [vmem:[%s237 + $0xd0] sm:$0xff]
        %v298 = vld [vmem:[%s237 + $0xd8] sm:$0xff]
        %v299 = vld [vmem:[%s237 + $0xe0] sm:$0xff]
        %v300 = vld [vmem:[%s237 + $0xe8] sm:$0xff]
        %v301 = vld [vmem:[%s237 + $0xf0] sm:$0xff]
        %v302 = vld [vmem:[%s237 + $0xf8] sm:$0xff]
        %v303 = vld [vmem:[%s265] sm:$0xf]
        %v305 = vlaneseq
        %v306 = vshrl.u32 %v305, 7
        %v307 = vsub.s32 0, %v306
        %v308 = vrot.slane %v303, %v307
        %v309 = vlaneseq
        %v310 = vshrl.u32 %v309, 7
        %v311 = vsub.s32 1, %v310
        %v312 = vrot.slane %v303, %v311
        %v313 = vlaneseq
        %v314 = vshrl.u32 %v313, 7
        %v315 = vsub.s32 2, %v314
        %v316 = vrot.slane %v303, %v315
        %v317 = vlaneseq
        %v318 = vshrl.u32 %v317, 7
        %v319 = vsub.s32 3, %v318
        %v320 = vrot.slane %v303, %v319
        %v327 = vunpack.c.l.b16 %v269
        %v328 = vunpack.c.l.b16 %v270
        %v329 = vpack.c.b16 %v328, %v327
        %v363 = vunpack.c.l.b16 %v271
        %v364 = vunpack.c.h.b16 %v271
        %v365 = vunpack.c.l.b16 %v272
        %v366 = vunpack.c.h.b16 %v272
        %v367 = vunpack.c.l.b16 %v273
        %v368 = vunpack.c.h.b16 %v273
        %v369 = vunpack.c.l.b16 %v274
        %v370 = vunpack.c.h.b16 %v274
        %v371 = vunpack.c.l.b16 %v275
        %v372 = vunpack.c.h.b16 %v275
        %v373 = vunpack.c.l.b16 %v276
        %v374 = vunpack.c.h.b16 %v276
        %v375 = vunpack.c.l.b16 %v277
        %v376 = vunpack.c.h.b16 %v277
        %v377 = vunpack.c.l.b16 %v278
        %v378 = vunpack.c.h.b16 %v278
        %v379 = vunpack.c.l.b16 %v279
        %v380 = vunpack.c.h.b16 %v279
        %v381 = vunpack.c.l.b16 %v280
        %v382 = vunpack.c.h.b16 %v280
        %v383 = vunpack.c.l.b16 %v281
        %v384 = vunpack.c.h.b16 %v281
        %v385 = vunpack.c.l.b16 %v282
        %v386 = vunpack.c.h.b16 %v282
        %v387 = vunpack.c.l.b16 %v283
        %v388 = vunpack.c.h.b16 %v283
        %v389 = vunpack.c.l.b16 %v284
        %v390 = vunpack.c.h.b16 %v284
        %v391 = vunpack.c.l.b16 %v285
        %v392 = vunpack.c.h.b16 %v285
        %v393 = vunpack.c.l.b16 %v286
        %v394 = vunpack.c.h.b16 %v286
        %v395 = vunpack.c.l.b16 %v287
        %v396 = vunpack.c.h.b16 %v287
        %v397 = vunpack.c.l.b16 %v288
        %v398 = vunpack.c.h.b16 %v288
        %v399 = vunpack.c.l.b16 %v289
        %v400 = vunpack.c.h.b16 %v289
        %v401 = vunpack.c.l.b16 %v290
        %v402 = vunpack.c.h.b16 %v290
        %v403 = vunpack.c.l.b16 %v291
        %v404 = vunpack.c.h.b16 %v291
        %v405 = vunpack.c.l.b16 %v292
        %v406 = vunpack.c.h.b16 %v292
        %v407 = vunpack.c.l.b16 %v293
        %v408 = vunpack.c.h.b16 %v293
        %v409 = vunpack.c.l.b16 %v294
        %v410 = vunpack.c.h.b16 %v294
        %v411 = vunpack.c.l.b16 %v295
        %v412 = vunpack.c.h.b16 %v295
        %v413 = vunpack.c.l.b16 %v296
        %v414 = vunpack.c.h.b16 %v296
        %v415 = vunpack.c.l.b16 %v297
        %v416 = vunpack.c.h.b16 %v297
        %v417 = vunpack.c.l.b16 %v298
        %v418 = vunpack.c.h.b16 %v298
        %v419 = vunpack.c.l.b16 %v299
        %v420 = vunpack.c.h.b16 %v299
        %v421 = vunpack.c.l.b16 %v300
        %v422 = vunpack.c.h.b16 %v300
        %v423 = vunpack.c.l.b16 %v301
        %v424 = vunpack.c.h.b16 %v301
        %v425 = vunpack.c.l.b16 %v302
        %v426 = vunpack.c.h.b16 %v302
        %v427 = vpack.c.b16 %v367, %v363
        %v428 = vpack.c.b16 %v368, %v364
        %v429 = vpack.c.b16 %v369, %v365
        %v430 = vpack.c.b16 %v370, %v366
        %v431 = vpack.c.b16 %v375, %v371
        %v432 = vpack.c.b16 %v376, %v372
        %v433 = vpack.c.b16 %v377, %v373
        %v434 = vpack.c.b16 %v378, %v374
        %v435 = vpack.c.b16 %v383, %v379
        %v436 = vpack.c.b16 %v384, %v380
        %v437 = vpack.c.b16 %v385, %v381
        %v438 = vpack.c.b16 %v386, %v382
        %v439 = vpack.c.b16 %v391, %v387
        %v440 = vpack.c.b16 %v392, %v388
        %v441 = vpack.c.b16 %v393, %v389
        %v442 = vpack.c.b16 %v394, %v390
        %v443 = vpack.c.b16 %v399, %v395
        %v444 = vpack.c.b16 %v400, %v396
        %v445 = vpack.c.b16 %v401, %v397
        %v446 = vpack.c.b16 %v402, %v398
        %v447 = vpack.c.b16 %v407, %v403
        %v448 = vpack.c.b16 %v408, %v404
        %v449 = vpack.c.b16 %v409, %v405
        %v450 = vpack.c.b16 %v410, %v406
        %v451 = vpack.c.b16 %v415, %v411
        %v452 = vpack.c.b16 %v416, %v412
        %v453 = vpack.c.b16 %v417, %v413
        %v454 = vpack.c.b16 %v418, %v414
        %v455 = vpack.c.b16 %v423, %v419
        %v456 = vpack.c.b16 %v424, %v420
        %v457 = vpack.c.b16 %v425, %v421
        %v458 = vpack.c.b16 %v426, %v422
        %491 = vmatprep.subr.bf16.mxu0 %v456
        %492 = vmatpush1.bf16.msra.mxu0 %v455
        %493 = vmatprep.subr.bf16.mxu0 %v452
        %494 = vmatpush1.bf16.msra.mxu0 %v451
        %495 = vmatprep.subr.bf16.mxu0 %v448
        %496 = vmatpush1.bf16.msra.mxu0 %v447
        %497 = vmatprep.subr.bf16.mxu0 %v444
        %498 = vmatpush1.bf16.msra.mxu0 %v443
        %499 = vmatprep.subr.bf16.mxu0 %v440
        %500 = vmatpush1.bf16.msra.mxu0 %v439
        %501 = vmatprep.subr.bf16.mxu0 %v436
        %502 = vmatpush1.bf16.msra.mxu0 %v435
        %503 = vmatprep.subr.bf16.mxu0 %v432
        %504 = vmatpush1.bf16.msra.mxu0 %v431
        %505 = vmatprep.subr.bf16.mxu0 %v428
        %506 = vmatpush1.bf16.msra.mxu0 %v427
        %507 = vmatprep.subr.bf16.mxu0 0
        %508 = vmatpush2.bf16.msra.mxu0 0
        %509 = vmatprep.subr.bf16.mxu0 0
        %510 = vmatpush2.bf16.msra.mxu0 0
        %511 = vmatprep.subr.bf16.mxu0 0
        %512 = vmatpush2.bf16.msra.mxu0 0
        %513 = vmatprep.subr.bf16.mxu0 0
        %514 = vmatpush2.bf16.msra.mxu0 0
        %515 = vmatprep.subr.bf16.mxu0 0
        %516 = vmatpush2.bf16.msra.mxu0 0
        %517 = vmatprep.subr.bf16.mxu0 0
        %518 = vmatpush2.bf16.msra.mxu0 0
        %519 = vmatprep.subr.bf16.mxu0 0
        %520 = vmatpush2.bf16.msra.mxu0 0
        %521 = vmatprep.subr.bf16.mxu0 0
        %522 = vmatpush2.bf16.msra.mxu0 0
        %523 = vmatprep.mubr.bf16.mxu0 0
        %524 = vmatmul.mubr.bf16.gmra.mxu0 %v329
        %v525 = vpop.f32.mrf.mxu0
        %v526 = vadd.f32 %v308, %v525
        %v527 = vpop.f32.mrf.mxu0
        %v528 = vadd.f32 %v312, %v527
        %v529 = vpop.f32.mrf.mxu0
        %v530 = vadd.f32 %v308, %v529
        %v531 = vpop.f32.mrf.mxu0
        %v532 = vadd.f32 %v312, %v531
        %533 = vdwg.mxu0
        %534 = vmatprep.subr.bf16.mxu0 %v458
        %535 = vmatpush1.bf16.msra.mxu0 %v457
        %536 = vmatprep.subr.bf16.mxu0 %v454
        %537 = vmatpush1.bf16.msra.mxu0 %v453
        %538 = vmatprep.subr.bf16.mxu0 %v450
        %539 = vmatpush1.bf16.msra.mxu0 %v449
        %540 = vmatprep.subr.bf16.mxu0 %v446
        %541 = vmatpush1.bf16.msra.mxu0 %v445
        %542 = vmatprep.subr.bf16.mxu0 %v442
        %543 = vmatpush1.bf16.msra.mxu0 %v441
        %544 = vmatprep.subr.bf16.mxu0 %v438
        %545 = vmatpush1.bf16.msra.mxu0 %v437
        %546 = vmatprep.subr.bf16.mxu0 %v434
        %547 = vmatpush1.bf16.msra.mxu0 %v433
        %548 = vmatprep.subr.bf16.mxu0 %v430
        %549 = vmatpush1.bf16.msra.mxu0 %v429
        %550 = vmatprep.subr.bf16.mxu0 0
        %551 = vmatpush2.bf16.msra.mxu0 0
        %552 = vmatprep.subr.bf16.mxu0 0
        %553 = vmatpush2.bf16.msra.mxu0 0
        %554 = vmatprep.subr.bf16.mxu0 0
        %555 = vmatpush2.bf16.msra.mxu0 0
        %556 = vmatprep.subr.bf16.mxu0 0
        %557 = vmatpush2.bf16.msra.mxu0 0
        %558 = vmatprep.subr.bf16.mxu0 0
        %559 = vmatpush2.bf16.msra.mxu0 0
        %560 = vmatprep.subr.bf16.mxu0 0
        %561 = vmatpush2.bf16.msra.mxu0 0
        %562 = vmatprep.subr.bf16.mxu0 0
        %563 = vmatpush2.bf16.msra.mxu0 0
        %564 = vmatprep.subr.bf16.mxu0 0
        %565 = vmatpush2.bf16.msra.mxu0 0
        %566 = vmatprep.mubr.bf16.mxu0 0
        %567 = vmatmul.mubr.bf16.gmra.mxu0 %v329
        %v568 = vpop.f32.mrf.mxu0
        %v569 = vadd.f32 %v316, %v568
        %v570 = vpop.f32.mrf.mxu0
        %v571 = vadd.f32 %v320, %v570
        %v572 = vpop.f32.mrf.mxu0
        %v573 = vadd.f32 %v316, %v572
        %v574 = vpop.f32.mrf.mxu0
        %v575 = vadd.f32 %v320, %v574
        %576 = vdwg.mxu0
        %577 = vst [vmem:[%s260] sm:$0xff] %v526
        %578 = vst [vmem:[%s260 + $0x8] sm:$0xff] %v528
        %579 = vst [vmem:[%s260 + $0x10] sm:$0xff] %v569
        %580 = vst [vmem:[%s260 + $0x18] sm:$0xff] %v571
        %581 = vst [vmem:[%s260 + $0x20] sm:$0xff] %v530
        %582 = vst [vmem:[%s260 + $0x28] sm:$0xff] %v532
        %583 = vst [vmem:[%s260 + $0x30] sm:$0xff] %v573
        %584 = vst [vmem:[%s260 + $0x38] sm:$0xff] %v575
        %s585 = sand.u32 %s95, 1
        %s586 = sand.u32 %s95, 1
        %s587 = smul.addr %s586, 64
        %s588 = scalar_lea.vmem [#allocation3], %s587
        // Predicated region
        $region56: #{bert_forward.3} parent=50 // pred_check
          %p589 = pneg %p105
        $region57: #{bert_forward.3} parent=50 // pred_check_branch
          %591 = sbr.rel (%p589) target = $region59
        $region58: #{bert_forward.3} parent=50 // pred_region
          %s592 = smul.u32 4, %s14
          %s593 = smul.addr %s592, 8
          %s594 = scalar_lea.vmem %s3, %s593
          // Predicated region
          $region60: #{bert_forward.3} parent=58 // pred_check
            _
          $region61: #{bert_forward.3} parent=58 // pred_check_branch
            %596 = sbr.rel (0) target = $region63
          $region62: #{bert_forward.3} parent=58 // pred_region
            // Predicated region
            $region64: #{bert_forward.3} parent=62 // pred_check
              _
            $region65: #{bert_forward.3} parent=62 // pred_check_branch
              %598 = sbr.rel (0) target = $region67
            $region66: #{bert_forward.3} parent=62 // pred_region
              loop: start=0, step=1, limit=1
              $region68: #{bert_forward.3} parent=66 // loop_pre_header
                _
              $region69: #{bert_forward.3} parent=66 // loop_header
                %s600 = sphi 0, %s604
                %p601 = scmp.ge.s32.totalorder %s600, 1
                %s605 = sphi %s588, %s588
                %s606 = sphi %s594, %s594
              $region70: #{bert_forward.3} parent=66 // loop_header_branch
                %603 = sbr.rel (%p601) target = $region74
              $region71: #{bert_forward.3} parent=66 // loop_body
                %v607 = vld [vmem:[%s605] sm:$0xff]
                %608 = vst [vmem:[%s606] sm:$0xff] %v607
                %v609 = vld [vmem:[%s605 + $0x8] sm:$0xff]
                %610 = vst [vmem:[%s606 + $0x8] sm:$0xff] %v609
                %v611 = vld [vmem:[%s605 + $0x10] sm:$0xff]
                %612 = vst [vmem:[%s606 + $0x10] sm:$0xff] %v611
                %v613 = vld [vmem:[%s605 + $0x18] sm:$0xff]
                %614 = vst [vmem:[%s606 + $0x18] sm:$0xff] %v613
                %v615 = vld [vmem:[%s605 + $0x20] sm:$0xff]
                %616 = vst [vmem:[%s606 + $0x40] sm:$0xff] %v615
                %v617 = vld [vmem:[%s605 + $0x28] sm:$0xff]
                %618 = vst [vmem:[%s606 + $0x48] sm:$0xff] %v617
                %v619 = vld [vmem:[%s605 + $0x30] sm:$0xff]
                %620 = vst [vmem:[%s606 + $0x50] sm:$0xff] %v619
                %v621 = vld [vmem:[%s605 + $0x38] sm:$0xff]
                %622 = vst [vmem:[%s606 + $0x58] sm:$0xff] %v621
              $region72: #{bert_forward.3} parent=66 // loop_footer
                %s604 = sadd.s32 1, %s600
              $region73: #{bert_forward.3} parent=66 // loop_footer_branch
                %599 = sbr.rel target = $region69
              $region74: #{bert_forward.3} parent=66 // loop_exit
                _
            $region67: #{bert_forward.3} parent=62 // pred_fallthru
              _
            // Predicated region
            $region75: #{bert_forward.3} parent=62 // pred_check
              _
            $region76: #{bert_forward.3} parent=62 // pred_check_branch
              %624 = sbr.rel target = $region78
            $region77: #{bert_forward.3} parent=62 // pred_region
              _
            $region78: #{bert_forward.3} parent=62 // pred_fallthru
              _
          $region63: #{bert_forward.3} parent=58 // pred_fallthru
            _
          %625 = vnop
        $region59: #{bert_forward.3} parent=50 // pred_fallthru
          _
      $region51: #{bert_forward.3} parent=5 // pred_fallthru
        _
      %p626 = scmp.le.s32.totalorder 2, %s9
      // Predicated region
      $region79: #{bert_forward.3} parent=5 // pred_check
        %p627 = pneg %p626
      $region80: #{bert_forward.3} parent=5 // pred_check_branch
        %629 = sbr.rel (%p627) target = $region82
      $region81: #{bert_forward.3} parent=5 // pred_region
        %s630 = ssub.s32 %s9, 2
        // Predicated region
        $region83: #{bert_forward.3} parent=81 // pred_check
          %p631 = pneg %p111
        $region84: #{bert_forward.3} parent=81 // pred_check_branch
          %633 = sbr.rel (%p631) target = $region86
        $region85: #{bert_forward.3} parent=81 // pred_region
          %s634 = sand.u32 %s96, 1
          %s635 = sand.u32 %s96, 1
          %s636 = smul.addr %s635, 64
          %s637 = scalar_lea.vmem [#allocation3], %s636
        $region86: #{bert_forward.3} parent=81 // pred_fallthru
          _
      $region82: #{bert_forward.3} parent=5 // pred_fallthru
        _
    $region6: #{bert_forward.3} parent=1 // loop_footer
      %s13 = sadd.s32 1, %s9
    $region7: #{bert_forward.3} parent=1 // loop_footer_branch
      %8 = sbr.rel target = $region3
    $region8: #{bert_forward.3} parent=1 // loop_exit
      _

// kernel: bert_forward.2
$region0: #{bert_forward.2}
  #allocation0 [shape = 'u32[]', space=smem, size = 0x4, offset = 0x4, fixed_abs, tag = 'smem constant byte address 0x4 - core index']
  #allocation1 [shape = 'u32[144,128]{1,0:T(1,128)}', space=vmem, size = 0x12000, scoped, tag = 'internal scratch']
  #allocation2 [shape = 'bf16[8,128]{1,0:T(8,128)(2,1)}', space=vmem, size = 0x800, scoped, tag = 'scratch operand']
  %s0 = inlined_call_operand.vmem [shape: bf16[16,128], index: 0, kind: input, shape index: {}]
  %s1 = inlined_call_operand.vmem [shape: f32[1,128], index: 1, kind: input, shape index: {}]
  %s2 = inlined_call_operand.vmem [shape: f32[1,128], index: 2, kind: input, shape index: {}]
  %s3 = inlined_call_operand.hbm [shape: bf16[6,128,384], index: 3, kind: input, shape index: {}]
  %s4 = inlined_call_operand.vmem [shape: f32[6,1,384], index: 4, kind: input, shape index: {}]
  %s5 = inlined_call_operand.hbm [shape: bf16[6,128,128], index: 5, kind: input, shape index: {}]
  %s6 = inlined_call_operand.vmem [shape: f32[6,1,128], index: 6, kind: input, shape index: {}]
  %s7 = inlined_call_operand.vmem [shape: f32[6,1,128], index: 7, kind: input, shape index: {}]
  %s8 = inlined_call_operand.vmem [shape: f32[6,1,128], index: 8, kind: input, shape index: {}]
  %s9 = inlined_call_operand.hbm [shape: bf16[6,128,256], index: 9, kind: input, shape index: {}]
  %s10 = inlined_call_operand.vmem [shape: f32[6,1,256], index: 10, kind: input, shape index: {}]
  %s11 = inlined_call_operand.hbm [shape: bf16[6,256,128], index: 11, kind: input, shape index: {}]
  %s12 = inlined_call_operand.vmem [shape: f32[6,1,128], index: 12, kind: input, shape index: {}]
  %s13 = inlined_call_operand.vmem [shape: f32[6,1,128], index: 13, kind: input, shape index: {}]
  %s14 = inlined_call_operand.vmem [shape: f32[6,1,128], index: 14, kind: input, shape index: {}]
  %s15 = inlined_call_operand.vmem [shape: bf16[128,128], index: 15, kind: input, shape index: {}]
  %s16 = inlined_call_operand.vmem [shape: f32[1,128], index: 16, kind: input, shape index: {}]
  %s17 = inlined_call_operand.vmem [shape: f32[1,128], index: 17, kind: input, shape index: {}]
  %s18 = inlined_call_operand.vmem [shape: f32[1,128], index: 18, kind: input, shape index: {}]
  %s19 = inlined_call_operand.vmem [shape: bf16[16,128], index: 19, kind: output, shape index: {}]
  %s20 = sld [smem:[#allocation0]]
  $region133: #{bert_forward.2} parent=0
    _
  %s22 = ssub.s32 1, %s20
  %s23 = scalar_select 0, %s22, %s20
  $region1: #{bert_forward.2} parent=0
    #allocation3 [shape = 'u8[196608]{0}', space=vmem, size = 0x30000, scoped, tag = 'input window, operand 3']
    #allocation4 [shape = 's32[2]{0}', space=sflag, size = 0x8, scoped, tag = 'scoped memory for bert_forward.2']
    #allocation5 [shape = 'u8[65536]{0}', space=vmem, size = 0x10000, scoped, tag = 'input window, operand 5']
    #allocation6 [shape = 's32[2]{0}', space=sflag, size = 0x8, scoped, tag = 'scoped memory for bert_forward.2']
    #allocation7 [shape = 'u8[131072]{0}', space=vmem, size = 0x20000, scoped, tag = 'input window, operand 9']
    #allocation8 [shape = 'u8[131072]{0}', space=vmem, size = 0x20000, scoped, tag = 'input window, operand 11']
    #allocation9 [shape = 's32[2]{0}', space=sflag, size = 0x8, scoped, tag = 'scoped memory for bert_forward.2']
    %24 = vsyncpa [#allocation4], 0
    %s25 = scalar_lea.sflag [#allocation4], 1
    %26 = vsyncpa %s25, 0
    %27 = vsyncpa [#allocation6], 0
    %s28 = scalar_lea.sflag [#allocation6], 1
    %29 = vsyncpa %s28, 0
    %30 = vsyncpa [#allocation9], 0
    %s31 = scalar_lea.sflag [#allocation9], 1
    %32 = vsyncpa %s31, 0
    loop: start=0, step=1, limit=14
    $region2: #{bert_forward.2} parent=1 // loop_pre_header
      _
    $region3: #{bert_forward.2} parent=1 // loop_header
      %s34 = sphi 0, %s38
      %p35 = scmp.ge.s32.totalorder %s34, 14
      %s41 = sphi 0, %s53
      %s42 = sphi 0, %s49
      %s43 = sphi 0, %s41
      %s44 = sphi 0, %s42
      %s45 = sphi 0, %s43
      %s46 = sphi 0, %s44
      %s56 = sphi 0, %s58
      %s59 = sphi 0, %s56
      %s60 = sphi 0, %s59
      %s76 = sphi 0, %s60
      %s80 = sphi 0, %s80
      %s82 = sphi 0, %s80
      %s83 = sphi 0, %s82
      %s97 = sphi 0, %s83
      %s101 = sphi 0, %s101
      %s103 = sphi 0, %s101
      %s104 = sphi 0, %s103
      %s118 = sphi 0, %s104
      %s124 = sphi 0, %s126
      %s127 = sphi 0, %s124
      %s128 = sphi 0, %s127
      %s144 = sphi 0, %s128
      %s150 = sphi 0, %s152
      %s153 = sphi 0, %s150
      %s154 = sphi 0, %s153
      %s170 = sphi 0, %s154
      %s176 = sphi 0, %s178
      %s179 = sphi 0, %s176
      %s180 = sphi 0, %s179
      %s196 = sphi 0, %s180
      %s202 = sphi 0, %s204
      %s205 = sphi 0, %s202
      %s206 = sphi 0, %s205
      %s222 = sphi 0, %s206
      %s228 = sphi 0, %s230
      %s231 = sphi 0, %s228
      %s232 = sphi 0, %s231
      %s248 = sphi 0, %s232
      %s254 = sphi 0, %s256
      %s257 = sphi 0, %s254
      %s258 = sphi 0, %s257
      %s274 = sphi 0, %s258
      %s280 = sphi 0, %s282
      %s283 = sphi 0, %s280
      %s284 = sphi 0, %s283
      %s300 = sphi 0, %s284
      %s306 = sphi 0, %s308
      %s309 = sphi 0, %s306
      %s310 = sphi 0, %s309
      %s326 = sphi 0, %s310
      %s332 = sphi 0, %s334
      %s335 = sphi 0, %s332
      %s336 = sphi 0, %s335
      %s352 = sphi 0, %s336
      %s358 = sphi 0, %s360
      %s361 = sphi 0, %s358
      %s362 = sphi 0, %s361
      %s378 = sphi 0, %s362
      %s384 = sphi 0, %s386
      %s387 = sphi 0, %s384
      %s388 = sphi 0, %s387
      %s404 = sphi 0, %s388
      %s410 = sphi 0, %s412
      %s413 = sphi 0, %s410
      %s414 = sphi 0, %s413
      %s430 = sphi 0, %s414
      %s434 = sphi 0, %s434
      %s436 = sphi 0, %s434
      %s437 = sphi 0, %s436
      %s451 = sphi 0, %s437
      %s455 = sphi 0, %s455
      %s457 = sphi 0, %s455
      %s458 = sphi 0, %s457
      %s472 = sphi 0, %s458
      %s476 = sphi 0, %s476
      %s478 = sphi 0, %s476
      %s479 = sphi 0, %s478
      %s493 = sphi 0, %s479
      %s497 = sphi 0, %s497
      %s499 = sphi 0, %s497
      %s500 = sphi 0, %s499
      %s514 = sphi 0, %s500
      %s520 = sphi 0, %s522
      %s523 = sphi 0, %s520
      %s524 = sphi 0, %s523
      %s540 = sphi 0, %s524
    $region4: #{bert_forward.2} parent=1 // loop_header_branch
      %37 = sbr.rel (%p35) target = $region8
    $region5: #{bert_forward.2} parent=1 // loop_body
      %s39 = ssub.s32 %s34, 1
      %s40 = ssub.s32 %s34, 2
      %s47 = sadd.s32 1, %s42
      %p48 = scmp.ge.s32.totalorder %s47, 6
      %s49 = scalar_select %p48, 0, %s47
      %s50 = sadd.s32 1, %s41
      %s51 = scalar_select %p48, %s50, %s41
      %p52 = scmp.ge.s32.totalorder %s51, 2
      %s53 = scalar_select %p52, 0, %s51
      %s54 = ssub.s32 %s41, %s53
      %p55 = scmp.eq.s32.totalorder %s54, 0
      %s57 = sadd.s32 %s56, 1
      %s58 = scalar_select %p55, %s56, %s57
      %p61 = pneg %p55
      %p62 = scmp.eq.s32.totalorder %s34, 11
      %p63 = por %p61, %p62
      %p64 = scmp.ne.s32.totalorder %s56, %s59
      %p65 = scmp.eq.s32.totalorder %s34, 0
      %p66 = por %p64, %p65
      %p67 = scmp.ne.s32.totalorder %s56, %s59
      %p68 = scmp.eq.s32.totalorder %s39, 11
      %p69 = por %p67, %p68
      %p70 = scmp.ne.s32.totalorder %s59, %s60
      %p71 = scmp.eq.s32.totalorder %s39, 0
      %p72 = por %p70, %p71
      %p73 = scmp.ne.s32.totalorder %s59, %s60
      %p74 = scmp.eq.s32.totalorder %s40, 11
      %p75 = por %p73, %p74
      %p77 = scmp.ne.s32.totalorder %s60, %s76
      %p78 = scmp.eq.s32.totalorder %s40, 0
      %p79 = por %p77, %p78
      %s81 = sadd.s32 %s80, 1
      %p84 = scmp.eq.s32.totalorder %s34, 11
      %p85 = scmp.ne.s32.totalorder %s80, %s82
      %p86 = scmp.eq.s32.totalorder %s34, 0
      %p87 = por %p85, %p86
      %p88 = scmp.ne.s32.totalorder %s80, %s82
      %p89 = scmp.eq.s32.totalorder %s39, 11
      %p90 = por %p88, %p89
      %p91 = scmp.ne.s32.totalorder %s82, %s83
      %p92 = scmp.eq.s32.totalorder %s39, 0
      %p93 = por %p91, %p92
      %p94 = scmp.ne.s32.totalorder %s82, %s83
      %p95 = scmp.eq.s32.totalorder %s40, 11
      %p96 = por %p94, %p95
      %p98 = scmp.ne.s32.totalorder %s83, %s97
      %p99 = scmp.eq.s32.totalorder %s40, 0
      %p100 = por %p98, %p99
      %s102 = sadd.s32 %s101, 1
      %p105 = scmp.eq.s32.totalorder %s34, 11
      %p106 = scmp.ne.s32.totalorder %s101, %s103
      %p107 = scmp.eq.s32.totalorder %s34, 0
      %p108 = por %p106, %p107
      %p109 = scmp.ne.s32.totalorder %s101, %s103
      %p110 = scmp.eq.s32.totalorder %s39, 11
      %p111 = por %p109, %p110
      %p112 = scmp.ne.s32.totalorder %s103, %s104
      %p113 = scmp.eq.s32.totalorder %s39, 0
      %p114 = por %p112, %p113
      %p115 = scmp.ne.s32.totalorder %s103, %s104
      %p116 = scmp.eq.s32.totalorder %s40, 11
      %p117 = por %p115, %p116
      %p119 = scmp.ne.s32.totalorder %s104, %s118
      %p120 = scmp.eq.s32.totalorder %s40, 0
      %p121 = por %p119, %p120
      %s122 = ssub.s32 %s42, %s49
      %p123 = scmp.eq.s32.totalorder %s122, 0
      %s125 = sadd.s32 %s124, 1
      %s126 = scalar_select %p123, %s124, %s125
      %p129 = pneg %p123
      %p130 = scmp.eq.s32.totalorder %s34, 11
      %p131 = por %p129, %p130
      %p132 = scmp.ne.s32.totalorder %s124, %s127
      %p133 = scmp.eq.s32.totalorder %s34, 0
      %p134 = por %p132, %p133
      %p135 = scmp.ne.s32.totalorder %s124, %s127
      %p136 = scmp.eq.s32.totalorder %s39, 11
      %p137 = por %p135, %p136
      %p138 = scmp.ne.s32.totalorder %s127, %s128
      %p139 = scmp.eq.s32.totalorder %s39, 0
      %p140 = por %p138, %p139
      %p141 = scmp.ne.s32.totalorder %s127, %s128
      %p142 = scmp.eq.s32.totalorder %s40, 11
      %p143 = por %p141, %p142
      %p145 = scmp.ne.s32.totalorder %s128, %s144
      %p146 = scmp.eq.s32.totalorder %s40, 0
      %p147 = por %p145, %p146
      %s148 = ssub.s32 %s42, %s49
      %p149 = scmp.eq.s32.totalorder %s148, 0
      %s151 = sadd.s32 %s150, 1
      %s152 = scalar_select %p149, %s150, %s151
      %p155 = pneg %p149
      %p156 = scmp.eq.s32.totalorder %s34, 11
      %p157 = por %p155, %p156
      %p158 = scmp.ne.s32.totalorder %s150, %s153
      %p159 = scmp.eq.s32.totalorder %s34, 0
      %p160 = por %p158, %p159
      %p161 = scmp.ne.s32.totalorder %s150, %s153
      %p162 = scmp.eq.s32.totalorder %s39, 11
      %p163 = por %p161, %p162
      %p164 = scmp.ne.s32.totalorder %s153, %s154
      %p165 = scmp.eq.s32.totalorder %s39, 0
      %p166 = por %p164, %p165
      %p167 = scmp.ne.s32.totalorder %s153, %s154
      %p168 = scmp.eq.s32.totalorder %s40, 11
      %p169 = por %p167, %p168
      %p171 = scmp.ne.s32.totalorder %s154, %s170
      %p172 = scmp.eq.s32.totalorder %s40, 0
      %p173 = por %p171, %p172
      %s174 = ssub.s32 %s42, %s49
      %p175 = scmp.eq.s32.totalorder %s174, 0
      %s177 = sadd.s32 %s176, 1
      %s178 = scalar_select %p175, %s176, %s177
      %p181 = pneg %p175
      %p182 = scmp.eq.s32.totalorder %s34, 11
      %p183 = por %p181, %p182
      %p184 = scmp.ne.s32.totalorder %s176, %s179
      %p185 = scmp.eq.s32.totalorder %s34, 0
      %p186 = por %p184, %p185
      %p187 = scmp.ne.s32.totalorder %s176, %s179
      %p188 = scmp.eq.s32.totalorder %s39, 11
      %p189 = por %p187, %p188
      %p190 = scmp.ne.s32.totalorder %s179, %s180
      %p191 = scmp.eq.s32.totalorder %s39, 0
      %p192 = por %p190, %p191
      %p193 = scmp.ne.s32.totalorder %s179, %s180
      %p194 = scmp.eq.s32.totalorder %s40, 11
      %p195 = por %p193, %p194
      %p197 = scmp.ne.s32.totalorder %s180, %s196
      %p198 = scmp.eq.s32.totalorder %s40, 0
      %p199 = por %p197, %p198
      %s200 = ssub.s32 %s42, %s49
      %p201 = scmp.eq.s32.totalorder %s200, 0
      %s203 = sadd.s32 %s202, 1
      %s204 = scalar_select %p201, %s202, %s203
      %p207 = pneg %p201
      %p208 = scmp.eq.s32.totalorder %s34, 11
      %p209 = por %p207, %p208
      %p210 = scmp.ne.s32.totalorder %s202, %s205
      %p211 = scmp.eq.s32.totalorder %s34, 0
      %p212 = por %p210, %p211
      %p213 = scmp.ne.s32.totalorder %s202, %s205
      %p214 = scmp.eq.s32.totalorder %s39, 11
      %p215 = por %p213, %p214
      %p216 = scmp.ne.s32.totalorder %s205, %s206
      %p217 = scmp.eq.s32.totalorder %s39, 0
      %p218 = por %p216, %p217
      %p219 = scmp.ne.s32.totalorder %s205, %s206
      %p220 = scmp.eq.s32.totalorder %s40, 11
      %p221 = por %p219, %p220
      %p223 = scmp.ne.s32.totalorder %s206, %s222
      %p224 = scmp.eq.s32.totalorder %s40, 0
      %p225 = por %p223, %p224
      %s226 = ssub.s32 %s42, %s49
      %p227 = scmp.eq.s32.totalorder %s226, 0
      %s229 = sadd.s32 %s228, 1
      %s230 = scalar_select %p227, %s228, %s229
      %p233 = pneg %p227
      %p234 = scmp.eq.s32.totalorder %s34, 11
      %p235 = por %p233, %p234
      %p236 = scmp.ne.s32.totalorder %s228, %s231
      %p237 = scmp.eq.s32.totalorder %s34, 0
      %p238 = por %p236, %p237
      %p239 = scmp.ne.s32.totalorder %s228, %s231
      %p240 = scmp.eq.s32.totalorder %s39, 11
      %p241 = por %p239, %p240
      %p242 = scmp.ne.s32.totalorder %s231, %s232
      %p243 = scmp.eq.s32.totalorder %s39, 0
      %p244 = por %p242, %p243
      %p245 = scmp.ne.s32.totalorder %s231, %s232
      %p246 = scmp.eq.s32.totalorder %s40, 11
      %p247 = por %p245, %p246
      %p249 = scmp.ne.s32.totalorder %s232, %s248
      %p250 = scmp.eq.s32.totalorder %s40, 0
      %p251 = por %p249, %p250
      %s252 = ssub.s32 %s42, %s49
      %p253 = scmp.eq.s32.totalorder %s252, 0
      %s255 = sadd.s32 %s254, 1
      %s256 = scalar_select %p253, %s254, %s255
      %p259 = pneg %p253
      %p260 = scmp.eq.s32.totalorder %s34, 11
      %p261 = por %p259, %p260
      %p262 = scmp.ne.s32.totalorder %s254, %s257
      %p263 = scmp.eq.s32.totalorder %s34, 0
      %p264 = por %p262, %p263
      %p265 = scmp.ne.s32.totalorder %s254, %s257
      %p266 = scmp.eq.s32.totalorder %s39, 11
      %p267 = por %p265, %p266
      %p268 = scmp.ne.s32.totalorder %s257, %s258
      %p269 = scmp.eq.s32.totalorder %s39, 0
      %p270 = por %p268, %p269
      %p271 = scmp.ne.s32.totalorder %s257, %s258
      %p272 = scmp.eq.s32.totalorder %s40, 11
      %p273 = por %p271, %p272
      %p275 = scmp.ne.s32.totalorder %s258, %s274
      %p276 = scmp.eq.s32.totalorder %s40, 0
      %p277 = por %p275, %p276
      %s278 = ssub.s32 %s42, %s49
      %p279 = scmp.eq.s32.totalorder %s278, 0
      %s281 = sadd.s32 %s280, 1
      %s282 = scalar_select %p279, %s280, %s281
      %p285 = pneg %p279
      %p286 = scmp.eq.s32.totalorder %s34, 11
      %p287 = por %p285, %p286
      %p288 = scmp.ne.s32.totalorder %s280, %s283
      %p289 = scmp.eq.s32.totalorder %s34, 0
      %p290 = por %p288, %p289
      %p291 = scmp.ne.s32.totalorder %s280, %s283
      %p292 = scmp.eq.s32.totalorder %s39, 11
      %p293 = por %p291, %p292
      %p294 = scmp.ne.s32.totalorder %s283, %s284
      %p295 = scmp.eq.s32.totalorder %s39, 0
      %p296 = por %p294, %p295
      %p297 = scmp.ne.s32.totalorder %s283, %s284
      %p298 = scmp.eq.s32.totalorder %s40, 11
      %p299 = por %p297, %p298
      %p301 = scmp.ne.s32.totalorder %s284, %s300
      %p302 = scmp.eq.s32.totalorder %s40, 0
      %p303 = por %p301, %p302
      %s304 = ssub.s32 %s42, %s49
      %p305 = scmp.eq.s32.totalorder %s304, 0
      %s307 = sadd.s32 %s306, 1
      %s308 = scalar_select %p305, %s306, %s307
      %p311 = pneg %p305
      %p312 = scmp.eq.s32.totalorder %s34, 11
      %p313 = por %p311, %p312
      %p314 = scmp.ne.s32.totalorder %s306, %s309
      %p315 = scmp.eq.s32.totalorder %s34, 0
      %p316 = por %p314, %p315
      %p317 = scmp.ne.s32.totalorder %s306, %s309
      %p318 = scmp.eq.s32.totalorder %s39, 11
      %p319 = por %p317, %p318
      %p320 = scmp.ne.s32.totalorder %s309, %s310
      %p321 = scmp.eq.s32.totalorder %s39, 0
      %p322 = por %p320, %p321
      %p323 = scmp.ne.s32.totalorder %s309, %s310
      %p324 = scmp.eq.s32.totalorder %s40, 11
      %p325 = por %p323, %p324
      %p327 = scmp.ne.s32.totalorder %s310, %s326
      %p328 = scmp.eq.s32.totalorder %s40, 0
      %p329 = por %p327, %p328
      %s330 = ssub.s32 %s42, %s49
      %p331 = scmp.eq.s32.totalorder %s330, 0
      %s333 = sadd.s32 %s332, 1
      %s334 = scalar_select %p331, %s332, %s333
      %p337 = pneg %p331
      %p338 = scmp.eq.s32.totalorder %s34, 11
      %p339 = por %p337, %p338
      %p340 = scmp.ne.s32.totalorder %s332, %s335
      %p341 = scmp.eq.s32.totalorder %s34, 0
      %p342 = por %p340, %p341
      %p343 = scmp.ne.s32.totalorder %s332, %s335
      %p344 = scmp.eq.s32.totalorder %s39, 11
      %p345 = por %p343, %p344
      %p346 = scmp.ne.s32.totalorder %s335, %s336
      %p347 = scmp.eq.s32.totalorder %s39, 0
      %p348 = por %p346, %p347
      %p349 = scmp.ne.s32.totalorder %s335, %s336
      %p350 = scmp.eq.s32.totalorder %s40, 11
      %p351 = por %p349, %p350
      %p353 = scmp.ne.s32.totalorder %s336, %s352
      %p354 = scmp.eq.s32.totalorder %s40, 0
      %p355 = por %p353, %p354
      %s356 = ssub.s32 %s42, %s49
      %p357 = scmp.eq.s32.totalorder %s356, 0
      %s359 = sadd.s32 %s358, 1
      %s360 = scalar_select %p357, %s358, %s359
      %p363 = pneg %p357
      %p364 = scmp.eq.s32.totalorder %s34, 11
      %p365 = por %p363, %p364
      %p366 = scmp.ne.s32.totalorder %s358, %s361
      %p367 = scmp.eq.s32.totalorder %s34, 0
      %p368 = por %p366, %p367
      %p369 = scmp.ne.s32.totalorder %s358, %s361
      %p370 = scmp.eq.s32.totalorder %s39, 11
      %p371 = por %p369, %p370
      %p372 = scmp.ne.s32.totalorder %s361, %s362
      %p373 = scmp.eq.s32.totalorder %s39, 0
      %p374 = por %p372, %p373
      %p375 = scmp.ne.s32.totalorder %s361, %s362
      %p376 = scmp.eq.s32.totalorder %s40, 11
      %p377 = por %p375, %p376
      %p379 = scmp.ne.s32.totalorder %s362, %s378
      %p380 = scmp.eq.s32.totalorder %s40, 0
      %p381 = por %p379, %p380
      %s382 = ssub.s32 %s42, %s49
      %p383 = scmp.eq.s32.totalorder %s382, 0
      %s385 = sadd.s32 %s384, 1
      %s386 = scalar_select %p383, %s384, %s385
      %p389 = pneg %p383
      %p390 = scmp.eq.s32.totalorder %s34, 11
      %p391 = por %p389, %p390
      %p392 = scmp.ne.s32.totalorder %s384, %s387
      %p393 = scmp.eq.s32.totalorder %s34, 0
      %p394 = por %p392, %p393
      %p395 = scmp.ne.s32.totalorder %s384, %s387
      %p396 = scmp.eq.s32.totalorder %s39, 11
      %p397 = por %p395, %p396
      %p398 = scmp.ne.s32.totalorder %s387, %s388
      %p399 = scmp.eq.s32.totalorder %s39, 0
      %p400 = por %p398, %p399
      %p401 = scmp.ne.s32.totalorder %s387, %s388
      %p402 = scmp.eq.s32.totalorder %s40, 11
      %p403 = por %p401, %p402
      %p405 = scmp.ne.s32.totalorder %s388, %s404
      %p406 = scmp.eq.s32.totalorder %s40, 0
      %p407 = por %p405, %p406
      %s408 = ssub.s32 %s42, %s49
      %p409 = scmp.eq.s32.totalorder %s408, 0
      %s411 = sadd.s32 %s410, 1
      %s412 = scalar_select %p409, %s410, %s411
      %p415 = pneg %p409
      %p416 = scmp.eq.s32.totalorder %s34, 11
      %p417 = por %p415, %p416
      %p418 = scmp.ne.s32.totalorder %s410, %s413
      %p419 = scmp.eq.s32.totalorder %s34, 0
      %p420 = por %p418, %p419
      %p421 = scmp.ne.s32.totalorder %s410, %s413
      %p422 = scmp.eq.s32.totalorder %s39, 11
      %p423 = por %p421, %p422
      %p424 = scmp.ne.s32.totalorder %s413, %s414
      %p425 = scmp.eq.s32.totalorder %s39, 0
      %p426 = por %p424, %p425
      %p427 = scmp.ne.s32.totalorder %s413, %s414
      %p428 = scmp.eq.s32.totalorder %s40, 11
      %p429 = por %p427, %p428
      %p431 = scmp.ne.s32.totalorder %s414, %s430
      %p432 = scmp.eq.s32.totalorder %s40, 0
      %p433 = por %p431, %p432
      %s435 = sadd.s32 %s434, 1
      %p438 = scmp.eq.s32.totalorder %s34, 11
      %p439 = scmp.ne.s32.totalorder %s434, %s436
      %p440 = scmp.eq.s32.totalorder %s34, 0
      %p441 = por %p439, %p440
      %p442 = scmp.ne.s32.totalorder %s434, %s436
      %p443 = scmp.eq.s32.totalorder %s39, 11
      %p444 = por %p442, %p443
      %p445 = scmp.ne.s32.totalorder %s436, %s437
      %p446 = scmp.eq.s32.totalorder %s39, 0
      %p447 = por %p445, %p446
      %p448 = scmp.ne.s32.totalorder %s436, %s437
      %p449 = scmp.eq.s32.totalorder %s40, 11
      %p450 = por %p448, %p449
      %p452 = scmp.ne.s32.totalorder %s437, %s451
      %p453 = scmp.eq.s32.totalorder %s40, 0
      %p454 = por %p452, %p453
      %s456 = sadd.s32 %s455, 1
      %p459 = scmp.eq.s32.totalorder %s34, 11
      %p460 = scmp.ne.s32.totalorder %s455, %s457
      %p461 = scmp.eq.s32.totalorder %s34, 0
      %p462 = por %p460, %p461
      %p463 = scmp.ne.s32.totalorder %s455, %s457
      %p464 = scmp.eq.s32.totalorder %s39, 11
      %p465 = por %p463, %p464
      %p466 = scmp.ne.s32.totalorder %s457, %s458
      %p467 = scmp.eq.s32.totalorder %s39, 0
      %p468 = por %p466, %p467
      %p469 = scmp.ne.s32.totalorder %s457, %s458
      %p470 = scmp.eq.s32.totalorder %s40, 11
      %p471 = por %p469, %p470
      %p473 = scmp.ne.s32.totalorder %s458, %s472
      %p474 = scmp.eq.s32.totalorder %s40, 0
      %p475 = por %p473, %p474
      %s477 = sadd.s32 %s476, 1
      %p480 = scmp.eq.s32.totalorder %s34, 11
      %p481 = scmp.ne.s32.totalorder %s476, %s478
      %p482 = scmp.eq.s32.totalorder %s34, 0
      %p483 = por %p481, %p482
      %p484 = scmp.ne.s32.totalorder %s476, %s478
      %p485 = scmp.eq.s32.totalorder %s39, 11
      %p486 = por %p484, %p485
      %p487 = scmp.ne.s32.totalorder %s478, %s479
      %p488 = scmp.eq.s32.totalorder %s39, 0
      %p489 = por %p487, %p488
      %p490 = scmp.ne.s32.totalorder %s478, %s479
      %p491 = scmp.eq.s32.totalorder %s40, 11
      %p492 = por %p490, %p491
      %p494 = scmp.ne.s32.totalorder %s479, %s493
      %p495 = scmp.eq.s32.totalorder %s40, 0
      %p496 = por %p494, %p495
      %s498 = sadd.s32 %s497, 1
      %p501 = scmp.eq.s32.totalorder %s34, 11
      %p502 = scmp.ne.s32.totalorder %s497, %s499
      %p503 = scmp.eq.s32.totalorder %s34, 0
      %p504 = por %p502, %p503
      %p505 = scmp.ne.s32.totalorder %s497, %s499
      %p506 = scmp.eq.s32.totalorder %s39, 11
      %p507 = por %p505, %p506
      %p508 = scmp.ne.s32.totalorder %s499, %s500
      %p509 = scmp.eq.s32.totalorder %s39, 0
      %p510 = por %p508, %p509
      %p511 = scmp.ne.s32.totalorder %s499, %s500
      %p512 = scmp.eq.s32.totalorder %s40, 11
      %p513 = por %p511, %p512
      %p515 = scmp.ne.s32.totalorder %s500, %s514
      %p516 = scmp.eq.s32.totalorder %s40, 0
      %p517 = por %p515, %p516
      %s518 = ssub.s32 %s41, %s53
      %p519 = scmp.eq.s32.totalorder %s518, 0
      %s521 = sadd.s32 %s520, 1
      %s522 = scalar_select %p519, %s520, %s521
      %p525 = pneg %p519
      %p526 = scmp.eq.s32.totalorder %s34, 11
      %p527 = por %p525, %p526
      %p528 = scmp.ne.s32.totalorder %s520, %s523
      %p529 = scmp.eq.s32.totalorder %s34, 0
      %p530 = por %p528, %p529
      %p531 = scmp.ne.s32.totalorder %s520, %s523
      %p532 = scmp.eq.s32.totalorder %s39, 11
      %p533 = por %p531, %p532
      %p534 = scmp.ne.s32.totalorder %s523, %s524
      %p535 = scmp.eq.s32.totalorder %s39, 0
      %p536 = por %p534, %p535
      %p537 = scmp.ne.s32.totalorder %s523, %s524
      %p538 = scmp.eq.s32.totalorder %s40, 11
      %p539 = por %p537, %p538
      %p541 = scmp.ne.s32.totalorder %s524, %s540
      %p542 = scmp.eq.s32.totalorder %s40, 0
      %p543 = por %p541, %p542
      %p544 = scmp.le.s32.totalorder 1, %s34
      %p545 = scmp.lt.s32.totalorder %s34, 13
      %p546 = pnand %p544, %p545
      %p547 = pneg %p546
      // Predicated region
      $region9: #{bert_forward.2} parent=5 // pred_check
        _
      $region10: #{bert_forward.2} parent=5 // pred_check_branch
        %549 = sbr.rel (%p546) target = $region12
      $region11: #{bert_forward.2} parent=5 // pred_region
        %s550 = ssub.s32 %s34, 1
        // Predicated region
        $region13: #{bert_forward.2} parent=11 // pred_check
          %p551 = pneg %p93
        $region14: #{bert_forward.2} parent=11 // pred_check_branch
          %553 = sbr.rel (%p551) target = $region16
        $region15: #{bert_forward.2} parent=11 // pred_region
          _
        $region16: #{bert_forward.2} parent=11 // pred_fallthru
          _
        // Predicated region
        $region17: #{bert_forward.2} parent=11 // pred_check
          %p554 = pneg %p114
        $region18: #{bert_forward.2} parent=11 // pred_check_branch
          %556 = sbr.rel (%p554) target = $region20
        $region19: #{bert_forward.2} parent=11 // pred_region
          _
        $region20: #{bert_forward.2} parent=11 // pred_fallthru
          _
        // Predicated region
        $region21: #{bert_forward.2} parent=11 // pred_check
          %p557 = pneg %p447
        $region22: #{bert_forward.2} parent=11 // pred_check_branch
          %559 = sbr.rel (%p557) target = $region24
        $region23: #{bert_forward.2} parent=11 // pred_region
          _
        $region24: #{bert_forward.2} parent=11 // pred_fallthru
          _
        // Predicated region
        $region25: #{bert_forward.2} parent=11 // pred_check
          %p560 = pneg %p468
        $region26: #{bert_forward.2} parent=11 // pred_check_branch
          %562 = sbr.rel (%p560) target = $region28
        $region27: #{bert_forward.2} parent=11 // pred_region
          _
        $region28: #{bert_forward.2} parent=11 // pred_fallthru
          _
        // Predicated region
        $region29: #{bert_forward.2} parent=11 // pred_check
          %p563 = pneg %p489
        $region30: #{bert_forward.2} parent=11 // pred_check_branch
          %565 = sbr.rel (%p563) target = $region32
        $region31: #{bert_forward.2} parent=11 // pred_region
          _
        $region32: #{bert_forward.2} parent=11 // pred_fallthru
          _
        // Predicated region
        $region33: #{bert_forward.2} parent=11 // pred_check
          %p566 = pneg %p510
        $region34: #{bert_forward.2} parent=11 // pred_check_branch
          %568 = sbr.rel (%p566) target = $region36
        $region35: #{bert_forward.2} parent=11 // pred_region
          _
        $region36: #{bert_forward.2} parent=11 // pred_fallthru
          _
      $region12: #{bert_forward.2} parent=5 // pred_fallthru
        _
      %p569 = scmp.lt.s32.totalorder %s34, 12
      // Predicated region
      $region37: #{bert_forward.2} parent=5 // pred_check
        %p570 = pneg %p569
      $region38: #{bert_forward.2} parent=5 // pred_check_branch
        %572 = sbr.rel (%p570) target = $region40
      $region39: #{bert_forward.2} parent=5 // pred_region
        // Predicated region
        $region41: #{bert_forward.2} parent=39 // pred_check
          %p573 = pneg %p66
        $region42: #{bert_forward.2} parent=39 // pred_check_branch
          %575 = sbr.rel (%p573) target = $region44
        $region43: #{bert_forward.2} parent=39 // pred_region
          %p576 = scmp.lt.s32.totalorder %s41, 1
          %s577 = scalar_select %p576, %s41, 1
          %s578 = smul.addr %s577, 4
          %s579 = scalar_lea.vmem %s0, %s578
        $region44: #{bert_forward.2} parent=39 // pred_fallthru
          _
        // Predicated region
        $region45: #{bert_forward.2} parent=39 // pred_check
          %p580 = pneg %p134
        $region46: #{bert_forward.2} parent=39 // pred_check_branch
          %582 = sbr.rel (%p580) target = $region48
        $region47: #{bert_forward.2} parent=39 // pred_region
          %s583 = sand.u32 %s124, 1
          %s584 = scalar_lea.sflag [#allocation4], %s583
          %s585 = sand.u32 %s124, 1
          %s586 = smul.addr %s585, 192
          %s587 = scalar_lea.vmem [#allocation3], %s586
          %s589 = ssub.s32 3072, 3072
          %590 = vsyncadd %s584, %s589
          %s591 = smul.addr %s42, 48
          %s592 = smul.addr %s591, 64
          %s593 = scalar_lea.hbm %s3, %s592
          %s594 = sshll.u32 %s587, 4
          %s595 = int_to_ptr.vmem [resolvable:$true] %s594
          %600 = dma.hbm_to_vmem [thread:$0]  %s593, 3072, %s595, %s584, 192, 192, 12
        $region48: #{bert_forward.2} parent=39 // pred_fallthru
          _
        // Predicated region
        $region49: #{bert_forward.2} parent=39 // pred_check
          %p601 = pneg %p160
        $region50: #{bert_forward.2} parent=39 // pred_check_branch
          %603 = sbr.rel (%p601) target = $region52
        $region51: #{bert_forward.2} parent=39 // pred_region
          %p604 = scmp.lt.s32.totalorder %s42, 5
          %s605 = scalar_select %p604, %s42, 5
          %s606 = smul.addr %s605, 3
          %s607 = scalar_lea.vmem %s4, %s606
        $region52: #{bert_forward.2} parent=39 // pred_fallthru
          _
        // Predicated region
        $region53: #{bert_forward.2} parent=39 // pred_check
          %p608 = pneg %p186
        $region54: #{bert_forward.2} parent=39 // pred_check_branch
          %610 = sbr.rel (%p608) target = $region56
        $region55: #{bert_forward.2} parent=39 // pred_region
          %s611 = sand.u32 %s34, 1
          %s612 = scalar_lea.sflag [#allocation6], %s611
          %s613 = sand.u32 %s176, 1
          %s614 = smul.addr %s613, 64
          %s615 = scalar_lea.vmem [#allocation5], %s614
          %s617 = ssub.s32 1024, 1024
          %618 = vsyncadd %s612, %s617
          %s619 = smul.addr %s42, 16
          %s620 = smul.addr %s619, 64
          %s621 = scalar_lea.hbm %s5, %s620
          %s622 = sshll.u32 %s615, 4
          %s623 = int_to_ptr.vmem [resolvable:$true] %s622
          %628 = dma.hbm_to_vmem [thread:$0]  %s621, 1024, %s623, %s612, 64, 64, 4
        $region56: #{bert_forward.2} parent=39 // pred_fallthru
          _
        // Predicated region
        $region57: #{bert_forward.2} parent=39 // pred_check
          %p629 = pneg %p212
        $region58: #{bert_forward.2} parent=39 // pred_check_branch
          %631 = sbr.rel (%p629) target = $region60
        $region59: #{bert_forward.2} parent=39 // pred_region
          %p632 = scmp.lt.s32.totalorder %s42, 5
          %s633 = scalar_select %p632, %s42, 5
          %s634 = scalar_lea.vmem %s6, %s633
        $region60: #{bert_forward.2} parent=39 // pred_fallthru
          _
        // Predicated region
        $region61: #{bert_forward.2} parent=39 // pred_check
          %p635 = pneg %p238
        $region62: #{bert_forward.2} parent=39 // pred_check_branch
          %637 = sbr.rel (%p635) target = $region64
        $region63: #{bert_forward.2} parent=39 // pred_region
          %p638 = scmp.lt.s32.totalorder %s42, 5
          %s639 = scalar_select %p638, %s42, 5
          %s640 = scalar_lea.vmem %s7, %s639
        $region64: #{bert_forward.2} parent=39 // pred_fallthru
          _
        // Predicated region
        $region65: #{bert_forward.2} parent=39 // pred_check
          %p641 = pneg %p264
        $region66: #{bert_forward.2} parent=39 // pred_check_branch
          %643 = sbr.rel (%p641) target = $region68
        $region67: #{bert_forward.2} parent=39 // pred_region
          %p644 = scmp.lt.s32.totalorder %s42, 5
          %s645 = scalar_select %p644, %s42, 5
          %s646 = scalar_lea.vmem %s8, %s645
        $region68: #{bert_forward.2} parent=39 // pred_fallthru
          _
        // Predicated region
        $region69: #{bert_forward.2} parent=39 // pred_check
          %p647 = pneg %p290
        $region70: #{bert_forward.2} parent=39 // pred_check_branch
          %649 = sbr.rel (%p647) target = $region72
        $region71: #{bert_forward.2} parent=39 // pred_region
          %s650 = sand.u32 %s34, 1
          %s651 = scalar_lea.sflag [#allocation6], %s650
          %s652 = sand.u32 %s280, 1
          %s653 = smul.addr %s652, 128
          %s654 = scalar_lea.vmem [#allocation7], %s653
          %s656 = ssub.s32 2048, 2048
          %657 = vsyncadd %s651, %s656
          %s658 = smul.addr %s42, 32
          %s659 = smul.addr %s658, 64
          %s660 = scalar_lea.hbm %s9, %s659
          %s661 = sshll.u32 %s654, 4
          %s662 = int_to_ptr.vmem [resolvable:$true] %s661
          %667 = dma.hbm_to_vmem [thread:$0]  %s660, 2048, %s662, %s651, 128, 128, 8
        $region72: #{bert_forward.2} parent=39 // pred_fallthru
          _
        // Predicated region
        $region73: #{bert_forward.2} parent=39 // pred_check
          %p668 = pneg %p316
        $region74: #{bert_forward.2} parent=39 // pred_check_branch
          %670 = sbr.rel (%p668) target = $region76
        $region75: #{bert_forward.2} parent=39 // pred_region
          %p671 = scmp.lt.s32.totalorder %s42, 5
          %s672 = scalar_select %p671, %s42, 5
          %s673 = smul.addr %s672, 2
          %s674 = scalar_lea.vmem %s10, %s673
        $region76: #{bert_forward.2} parent=39 // pred_fallthru
          _
        // Predicated region
        $region77: #{bert_forward.2} parent=39 // pred_check
          %p675 = pneg %p342
        $region78: #{bert_forward.2} parent=39 // pred_check_branch
          %677 = sbr.rel (%p675) target = $region80
        $region79: #{bert_forward.2} parent=39 // pred_region
          %s678 = sand.u32 %s332, 1
          %s679 = scalar_lea.sflag [#allocation9], %s678
          %s680 = sand.u32 %s332, 1
          %s681 = smul.addr %s680, 128
          %s682 = scalar_lea.vmem [#allocation8], %s681
          %s684 = ssub.s32 2048, 2048
          %685 = vsyncadd %s679, %s684
          %s686 = smul.addr %s42, 32
          %s687 = smul.addr %s686, 64
          %s688 = scalar_lea.hbm %s11, %s687
          %s689 = sshll.u32 %s682, 4
          %s690 = int_to_ptr.vmem [resolvable:$true] %s689
          %695 = dma.hbm_to_vmem [thread:$0]  %s688, 2048, %s690, %s679, 64, 64, 4
        $region80: #{bert_forward.2} parent=39 // pred_fallthru
          _
        // Predicated region
        $region81: #{bert_forward.2} parent=39 // pred_check
          %p696 = pneg %p368
        $region82: #{bert_forward.2} parent=39 // pred_check_branch
          %698 = sbr.rel (%p696) target = $region84
        $region83: #{bert_forward.2} parent=39 // pred_region
          %p699 = scmp.lt.s32.totalorder %s42, 5
          %s700 = scalar_select %p699, %s42, 5
          %s701 = scalar_lea.vmem %s12, %s700
        $region84: #{bert_forward.2} parent=39 // pred_fallthru
          _
        // Predicated region
        $region85: #{bert_forward.2} parent=39 // pred_check
          %p702 = pneg %p394
        $region86: #{bert_forward.2} parent=39 // pred_check_branch
          %704 = sbr.rel (%p702) target = $region88
        $region87: #{bert_forward.2} parent=39 // pred_region
          %p705 = scmp.lt.s32.totalorder %s42, 5
          %s706 = scalar_select %p705, %s42, 5
          %s707 = scalar_lea.vmem %s13, %s706
        $region88: #{bert_forward.2} parent=39 // pred_fallthru
          _
        // Predicated region
        $region89: #{bert_forward.2} parent=39 // pred_check
          %p708 = pneg %p420
        $region90: #{bert_forward.2} parent=39 // pred_check_branch
          %710 = sbr.rel (%p708) target = $region92
        $region91: #{bert_forward.2} parent=39 // pred_region
          %p711 = scmp.lt.s32.totalorder %s42, 5
          %s712 = scalar_select %p711, %s42, 5
          %s713 = scalar_lea.vmem %s14, %s712
        $region92: #{bert_forward.2} parent=39 // pred_fallthru
          _
      $region40: #{bert_forward.2} parent=5 // pred_fallthru
        _
      %p714 = scmp.le.s32.totalorder 1, %s34
      %p715 = scmp.lt.s32.totalorder %s34, 13
      %p716 = pnand %p714, %p715
      %p717 = pneg %p716
      // Predicated region
      $region93: #{bert_forward.2} parent=5 // pred_check
        _
      $region94: #{bert_forward.2} parent=5 // pred_check_branch
        %719 = sbr.rel (%p716) target = $region96
      $region95: #{bert_forward.2} parent=5 // pred_region
        %s720 = ssub.s32 %s34, 1
        %s721 = sand.u32 %s127, 1
        %s722 = scalar_lea.sflag [#allocation4], %s721
        %s723 = sand.u32 %s127, 1
        %s724 = smul.addr %s723, 192
        %s725 = scalar_lea.vmem [#allocation3], %s724
        // Predicated region
        $region97: #{bert_forward.2} parent=95 // pred_check
          %p726 = pneg %p140
        $region98: #{bert_forward.2} parent=95 // pred_check_branch
          %728 = sbr.rel (%p726) target = $region100
        $region99: #{bert_forward.2} parent=95 // pred_region
          %729 = dma.done %s722, 3072
        $region100: #{bert_forward.2} parent=95 // pred_fallthru
          _
        %s730 = sand.u32 %s39, 1
        %s731 = scalar_lea.sflag [#allocation6], %s730
        %s732 = sand.u32 %s179, 1
        %s733 = smul.addr %s732, 64
        %s734 = scalar_lea.vmem [#allocation5], %s733
        // Predicated region
        $region101: #{bert_forward.2} parent=95 // pred_check
          %p735 = pneg %p192
        $region102: #{bert_forward.2} parent=95 // pred_check_branch
          %737 = sbr.rel (%p735) target = $region104
        $region103: #{bert_forward.2} parent=95 // pred_region
          %738 = dma.done %s731, 1024
        $region104: #{bert_forward.2} parent=95 // pred_fallthru
          _
        %s739 = sand.u32 %s39, 1
        %s740 = scalar_lea.sflag [#allocation6], %s739
        %s741 = sand.u32 %s283, 1
        %s742 = smul.addr %s741, 128
        %s743 = scalar_lea.vmem [#allocation7], %s742
        // Predicated region
        $region105: #{bert_forward.2} parent=95 // pred_check
          %p744 = pneg %p296
        $region106: #{bert_forward.2} parent=95 // pred_check_branch
          %746 = sbr.rel (%p744) target = $region108
        $region107: #{bert_forward.2} parent=95 // pred_region
          %747 = dma.done %s740, 2048
        $region108: #{bert_forward.2} parent=95 // pred_fallthru
          _
        %s748 = sand.u32 %s335, 1
        %s749 = scalar_lea.sflag [#allocation9], %s748
        %s750 = sand.u32 %s335, 1
        %s751 = smul.addr %s750, 128
        %s752 = scalar_lea.vmem [#allocation8], %s751
        // Predicated region
        $region109: #{bert_forward.2} parent=95 // pred_check
          %p753 = pneg %p348
        $region110: #{bert_forward.2} parent=95 // pred_check_branch
          %755 = sbr.rel (%p753) target = $region112
        $region111: #{bert_forward.2} parent=95 // pred_region
          %756 = dma.done %s749, 2048
        $region112: #{bert_forward.2} parent=95 // pred_fallthru
          _
        %p757 = scmp.lt.s32.totalorder %s43, 1
        %s758 = scalar_select %p757, %s43, 1
        %s759 = smul.addr %s758, 4
        %s760 = scalar_lea.vmem %s0, %s759
        %p761 = pneg %p72
        %p762 = pneg %p69
        %p763 = pneg %p93
        %p764 = pneg %p90
        %p765 = pneg %p114
        %p766 = pneg %p111
        %s767 = sand.u32 %s127, 1
        %s768 = scalar_lea.sflag [#allocation4], %s767
        %s769 = sand.u32 %s127, 1
        %s770 = smul.addr %s769, 192
        %s771 = scalar_lea.vmem [#allocation3], %s770
        %p772 = pneg %p140
        %p773 = pneg %p137
        %p774 = scmp.lt.s32.totalorder %s44, 5
        %s775 = scalar_select %p774, %s44, 5
        %s776 = smul.addr %s775, 3
        %s777 = scalar_lea.vmem %s4, %s776
        %p778 = pneg %p166
        %p779 = pneg %p163
        %s780 = sand.u32 %s39, 1
        %s781 = scalar_lea.sflag [#allocation6], %s780
        %s782 = sand.u32 %s179, 1
        %s783 = smul.addr %s782, 64
        %s784 = scalar_lea.vmem [#allocation5], %s783
        %p785 = pneg %p192
        %p786 = pneg %p189
        %p787 = scmp.lt.s32.totalorder %s44, 5
        %s788 = scalar_select %p787, %s44, 5
        %s789 = scalar_lea.vmem %s6, %s788
        %p790 = pneg %p218
        %p791 = pneg %p215
        %p792 = scmp.lt.s32.totalorder %s44, 5
        %s793 = scalar_select %p792, %s44, 5
        %s794 = scalar_lea.vmem %s7, %s793
        %p795 = pneg %p244
        %p796 = pneg %p241
        %p797 = scmp.lt.s32.totalorder %s44, 5
        %s798 = scalar_select %p797, %s44, 5
        %s799 = scalar_lea.vmem %s8, %s798
        %p800 = pneg %p270
        %p801 = pneg %p267
        %s802 = sand.u32 %s39, 1
        %s803 = scalar_lea.sflag [#allocation6], %s802
        %s804 = sand.u32 %s283, 1
        %s805 = smul.addr %s804, 128
        %s806 = scalar_lea.vmem [#allocation7], %s805
        %p807 = pneg %p296
        %p808 = pneg %p293
        %p809 = scmp.lt.s32.totalorder %s44, 5
        %s810 = scalar_select %p809, %s44, 5
        %s811 = smul.addr %s810, 2
        %s812 = scalar_lea.vmem %s10, %s811
        %p813 = pneg %p322
        %p814 = pneg %p319
        %s815 = sand.u32 %s335, 1
        %s816 = scalar_lea.sflag [#allocation9], %s815
        %s817 = sand.u32 %s335, 1
        %s818 = smul.addr %s817, 128
        %s819 = scalar_lea.vmem [#allocation8], %s818
        %p820 = pneg %p348
        %p821 = pneg %p345
        %p822 = scmp.lt.s32.totalorder %s44, 5
        %s823 = scalar_select %p822, %s44, 5
        %s824 = scalar_lea.vmem %s12, %s823
        %p825 = pneg %p374
        %p826 = pneg %p371
        %p827 = scmp.lt.s32.totalorder %s44, 5
        %s828 = scalar_select %p827, %s44, 5
        %s829 = scalar_lea.vmem %s13, %s828
        %p830 = pneg %p400
        %p831 = pneg %p397
        %p832 = scmp.lt.s32.totalorder %s44, 5
        %s833 = scalar_select %p832, %s44, 5
        %s834 = scalar_lea.vmem %s14, %s833
        %p835 = pneg %p426
        %p836 = pneg %p423
        %p837 = pneg %p447
        %p838 = pneg %p444
        %p839 = pneg %p468
        %p840 = pneg %p465
        %p841 = pneg %p489
        %p842 = pneg %p486
        %p843 = pneg %p510
        %p844 = pneg %p507
        %p845 = pneg %p536
        %p846 = pneg %p533
        %p847 = scmp.lt.s32.totalorder %s43, 1
        %s848 = scalar_select %p847, %s43, 1
        %s849 = smul.addr %s848, 4
        %s850 = scalar_lea.vmem %s19, %s849
        %p851 = scmp.lt.s32.totalorder %s43, 1
        %s852 = scalar_select %p851, %s43, 1
        %s853 = smul.addr %s852, 4
        %s854 = scalar_lea.vmem %s0, %s853
        %p855 = scmp.lt.s32.totalorder %s44, 5
        %s856 = scalar_select %p855, %s44, 5
        %s857 = smul.addr %s856, 3
        %s858 = scalar_lea.vmem %s4, %s857
        %p859 = scmp.lt.s32.totalorder %s44, 5
        %s860 = scalar_select %p859, %s44, 5
        %s861 = scalar_lea.vmem %s6, %s860
        %p862 = scmp.lt.s32.totalorder %s44, 5
        %s863 = scalar_select %p862, %s44, 5
        %s864 = scalar_lea.vmem %s7, %s863
        %p865 = scmp.lt.s32.totalorder %s44, 5
        %s866 = scalar_select %p865, %s44, 5
        %s867 = scalar_lea.vmem %s8, %s866
        %p868 = scmp.lt.s32.totalorder %s44, 5
        %s869 = scalar_select %p868, %s44, 5
        %s870 = smul.addr %s869, 2
        %s871 = scalar_lea.vmem %s10, %s870
        %p872 = scmp.lt.s32.totalorder %s44, 5
        %s873 = scalar_select %p872, %s44, 5
        %s874 = scalar_lea.vmem %s12, %s873
        %p875 = scmp.lt.s32.totalorder %s44, 5
        %s876 = scalar_select %p875, %s44, 5
        %s877 = scalar_lea.vmem %s13, %s876
        %p878 = scmp.lt.s32.totalorder %s44, 5
        %s879 = scalar_select %p878, %s44, 5
        %s880 = scalar_lea.vmem %s14, %s879
        %p881 = scmp.lt.s32.totalorder %s43, 1
        %s882 = scalar_select %p881, %s43, 1
        %s883 = smul.addr %s882, 4
        %s884 = scalar_lea.vmem %s19, %s883
        %p886 = scmp.eq.s32.totalorder %s44, 0
        // Predicated region
        $region113: #{bert_forward.2} parent=95 // pred_check
          %p887 = pneg %p886
        $region114: #{bert_forward.2} parent=95 // pred_check_branch
          %889 = sbr.rel (%p887) target = $region116
        $region115: #{bert_forward.2} parent=95 // pred_region
          %v890 = vld [vmem:[%s854] sm:$0xf]
          %v891 = vunpack.c.l.bf16 %v890
          %v892 = vld [vmem:[%s1] sm:$0x1]
          %v893 = vld [vmem:[%s2] sm:$0x1]
          %894 = vadd.xlane.f32.xlu0 %v891
          %v895 = vpop.xlane.xlu0 %894
          %v896 = vrcp.pop 128.0
          %v897 = vmul.f32 %v895, %v896
          %v898 = vsub.f32 %v891, %v897
          %v899 = vmul.f32 %v898, %v898
          %900 = vadd.xlane.f32.xlu0 %v899
          %v901 = vpop.xlane.xlu0 %900
          %v902 = vmul.f32 %v901, %v896
          %v903 = vadd.f32 %v902, 1e-12
          %v904 = vrsqrt.pop %v903
          %v905 = vmul.f32 %v898, %v904
          %v907 = vlaneseq
          %v908 = vshrl.u32 %v907, 7
          %v909 = vsub.s32 0, %v908
          %v910 = vrot.slane %v892, %v909
          %v912 = vmul.f32 %v905, %v910
          %v914 = vlaneseq
          %v915 = vshrl.u32 %v914, 7
          %v916 = vsub.s32 0, %v915
          %v917 = vrot.slane %v893, %v916
          %v919 = vadd.f32 %v912, %v917
          %v920 = vpack.c.bf16 %v919, %v919
          %921 = vst [vmem:[%s884] sm:$0xf] %v920
        $region116: #{bert_forward.2} parent=95 // pred_fallthru
          _
        %v922 = vld [vmem:[%s884] sm:$0xf]
        %v923 = vunpack.c.l.bf16 %v922
        %v924 = vld [vmem:[%s725] sm:$0xff]
        %v925 = vld [vmem:[%s725 + $0x8] sm:$0xf]
        %v926 = vld [vmem:[%s725 + $0xc] sm:$0xff]
        %v927 = vld [vmem:[%s725 + $0x14] sm:$0xf]
        %v928 = vld [vmem:[%s725 + $0x18] sm:$0xff]
        %v929 = vld [vmem:[%s725 + $0x20] sm:$0xf]
        %v930 = vld [vmem:[%s725 + $0x24] sm:$0xff]
        %v931 = vld [vmem:[%s725 + $0x2c] sm:$0xf]
        %v932 = vld [vmem:[%s725 + $0x30] sm:$0xff]
        %v933 = vld [vmem:[%s725 + $0x38] sm:$0xf]
        %v934 = vld [vmem:[%s725 + $0x3c] sm:$0xff]
        %v935 = vld [vmem:[%s725 + $0x44] sm:$0xf]
        %v936 = vld [vmem:[%s725 + $0x48] sm:$0xff]
        %v937 = vld [vmem:[%s725 + $0x50] sm:$0xf]
        %v938 = vld [vmem:[%s725 + $0x54] sm:$0xff]
        %v939 = vld [vmem:[%s725 + $0x5c] sm:$0xf]
        %v940 = vld [vmem:[%s725 + $0x60] sm:$0xff]
        %v941 = vld [vmem:[%s725 + $0x68] sm:$0xf]
        %v942 = vld [vmem:[%s725 + $0x6c] sm:$0xff]
        %v943 = vld [vmem:[%s725 + $0x74] sm:$0xf]
        %v944 = vld [vmem:[%s725 + $0x78] sm:$0xff]
        %v945 = vld [vmem:[%s725 + $0x80] sm:$0xf]
        %v946 = vld [vmem:[%s725 + $0x84] sm:$0xff]
        %v947 = vld [vmem:[%s725 + $0x8c] sm:$0xf]
        %v948 = vld [vmem:[%s725 + $0x90] sm:$0xff]
        %v949 = vld [vmem:[%s725 + $0x98] sm:$0xf]
        %v950 = vld [vmem:[%s725 + $0x9c] sm:$0xff]
        %v951 = vld [vmem:[%s725 + $0xa4] sm:$0xf]
        %v952 = vld [vmem:[%s725 + $0xa8] sm:$0xff]
        %v953 = vld [vmem:[%s725 + $0xb0] sm:$0xf]
        %v954 = vld [vmem:[%s725 + $0xb4] sm:$0xff]
        %v955 = vld [vmem:[%s725 + $0xbc] sm:$0xf]
        %v956 = vld [vmem:[%s858] sm:$0x7]
        %v958 = vlaneseq
        %v959 = vshrl.u32 %v958, 7
        %v960 = vsub.s32 0, %v959
        %v961 = vrot.slane %v956, %v960
        %v962 = vlaneseq
        %v963 = vshrl.u32 %v962, 7
        %v964 = vsub.s32 1, %v963
        %v965 = vrot.slane %v956, %v964
        %v966 = vlaneseq
        %v967 = vshrl.u32 %v966, 7
        %v968 = vsub.s32 2, %v967
        %v969 = vrot.slane %v956, %v968
        %v1005 = vunpack.c.l.b16 %v924
        %v1006 = vunpack.c.h.b16 %v924
        %v1007 = vunpack.c.l.b16 %v925
        %v1008 = vunpack.c.l.b16 %v926
        %v1009 = vunpack.c.h.b16 %v926
        %v1010 = vunpack.c.l.b16 %v927
        %v1011 = vunpack.c.l.b16 %v928
        %v1012 = vunpack.c.h.b16 %v928
        %v1013 = vunpack.c.l.b16 %v929
        %v1014 = vunpack.c.l.b16 %v930
        %v1015 = vunpack.c.h.b16 %v930
        %v1016 = vunpack.c.l.b16 %v931
        %v1017 = vunpack.c.l.b16 %v932
        %v1018 = vunpack.c.h.b16 %v932
        %v1019 = vunpack.c.l.b16 %v933
        %v1020 = vunpack.c.l.b16 %v934
        %v1021 = vunpack.c.h.b16 %v934
        %v1022 = vunpack.c.l.b16 %v935
        %v1023 = vunpack.c.l.b16 %v936
        %v1024 = vunpack.c.h.b16 %v936
        %v1025 = vunpack.c.l.b16 %v937
        %v1026 = vunpack.c.l.b16 %v938
        %v1027 = vunpack.c.h.b16 %v938
        %v1028 = vunpack.c.l.b16 %v939
        %v1029 = vunpack.c.l.b16 %v940
        %v1030 = vunpack.c.h.b16 %v940
        %v1031 = vunpack.c.l.b16 %v941
        %v1032 = vunpack.c.l.b16 %v942
        %v1033 = vunpack.c.h.b16 %v942
        %v1034 = vunpack.c.l.b16 %v943
        %v1035 = vunpack.c.l.b16 %v944
        %v1036 = vunpack.c.h.b16 %v944
        %v1037 = vunpack.c.l.b16 %v945
        %v1038 = vunpack.c.l.b16 %v946
        %v1039 = vunpack.c.h.b16 %v946
        %v1040 = vunpack.c.l.b16 %v947
        %v1041 = vunpack.c.l.b16 %v948
        %v1042 = vunpack.c.h.b16 %v948
        %v1043 = vunpack.c.l.b16 %v949
        %v1044 = vunpack.c.l.b16 %v950
        %v1045 = vunpack.c.h.b16 %v950
        %v1046 = vunpack.c.l.b16 %v951
        %v1047 = vunpack.c.l.b16 %v952
        %v1048 = vunpack.c.h.b16 %v952
        %v1049 = vunpack.c.l.b16 %v953
        %v1050 = vunpack.c.l.b16 %v954
        %v1051 = vunpack.c.h.b16 %v954
        %v1052 = vunpack.c.l.b16 %v955
        %v1053 = vpack.c.b16 %v1008, %v1005
        %v1054 = vpack.c.b16 %v1009, %v1006
        %v1055 = vpack.c.b16 %v1010, %v1007
        %v1056 = vpack.c.b16 %v1014, %v1011
        %v1057 = vpack.c.b16 %v1015, %v1012
        %v1058 = vpack.c.b16 %v1016, %v1013
        %v1059 = vpack.c.b16 %v1020, %v1017
        %v1060 = vpack.c.b16 %v1021, %v1018
        %v1061 = vpack.c.b16 %v1022, %v1019
        %v1062 = vpack.c.b16 %v1026, %v1023
        %v1063 = vpack.c.b16 %v1027, %v1024
        %v1064 = vpack.c.b16 %v1028, %v1025
        %v1065 = vpack.c.b16 %v1032, %v1029
        %v1066 = vpack.c.b16 %v1033, %v1030
        %v1067 = vpack.c.b16 %v1034, %v1031
        %v1068 = vpack.c.b16 %v1038, %v1035
        %v1069 = vpack.c.b16 %v1039, %v1036
        %v1070 = vpack.c.b16 %v1040, %v1037
        %v1071 = vpack.c.b16 %v1044, %v1041
        %v1072 = vpack.c.b16 %v1045, %v1042
        %v1073 = vpack.c.b16 %v1046, %v1043
        %v1074 = vpack.c.b16 %v1050, %v1047
        %v1075 = vpack.c.b16 %v1051, %v1048
        %v1076 = vpack.c.b16 %v1052, %v1049
        %1101 = vmatprep.subr.bf16.mxu0 %v1075
        %1102 = vmatpush1.bf16.msra.mxu0 %v1074
        %1103 = vmatprep.subr.bf16.mxu0 %v1072
        %1104 = vmatpush1.bf16.msra.mxu0 %v1071
        %1105 = vmatprep.subr.bf16.mxu0 %v1069
        %1106 = vmatpush1.bf16.msra.mxu0 %v1068
        %1107 = vmatprep.subr.bf16.mxu0 %v1066
        %1108 = vmatpush1.bf16.msra.mxu0 %v1065
        %1109 = vmatprep.subr.bf16.mxu0 %v1063
        %1110 = vmatpush1.bf16.msra.mxu0 %v1062
        %1111 = vmatprep.subr.bf16.mxu0 %v1060
        %1112 = vmatpush1.bf16.msra.mxu0 %v1059
        %1113 = vmatprep.subr.bf16.mxu0 %v1057
        %1114 = vmatpush1.bf16.msra.mxu0 %v1056
        %1115 = vmatprep.subr.bf16.mxu0 %v1054
        %1116 = vmatpush1.bf16.msra.mxu0 %v1053
        %1117 = vmatprep.subr.bf16.mxu0 0
        %1118 = vmatpush2.bf16.msra.mxu0 0
        %1119 = vmatprep.subr.bf16.mxu0 0
        %1120 = vmatpush2.bf16.msra.mxu0 0
        %1121 = vmatprep.subr.bf16.mxu0 0
        %1122 = vmatpush2.bf16.msra.mxu0 0
        %1123 = vmatprep.subr.bf16.mxu0 0
        %1124 = vmatpush2.bf16.msra.mxu0 0
        %1125 = vmatprep.subr.bf16.mxu0 0
        %1126 = vmatpush2.bf16.msra.mxu0 0
        %1127 = vmatprep.subr.bf16.mxu0 0
        %1128 = vmatpush2.bf16.msra.mxu0 0
        %1129 = vmatprep.subr.bf16.mxu0 0
        %1130 = vmatpush2.bf16.msra.mxu0 0
        %1131 = vmatprep.subr.bf16.mxu0 0
        %1132 = vmatpush2.bf16.msra.mxu0 0
        %1133 = vmatprep.mubr.bf16.mxu0 0
        %1134 = vmatmul.mubr.bf16.gmra.mxu0 %v922
        %v1135 = vpop.f32.mrf.mxu0
        %v1136 = vadd.f32 %v961, %v1135
        %v1137 = vpop.f32.mrf.mxu0
        %v1138 = vadd.f32 %v965, %v1137
        %v1139 = vpop.f32.mrf.mxu0
        %v1140 = vpop.f32.mrf.mxu0
        %1141 = vdwg.mxu0
        %1142 = vmatprep.subr.bf16.mxu0 0
        %1143 = vmatpush1.bf16.msra.mxu0 %v1076
        %1144 = vmatprep.subr.bf16.mxu0 0
        %1145 = vmatpush1.bf16.msra.mxu0 %v1073
        %1146 = vmatprep.subr.bf16.mxu0 0
        %1147 = vmatpush1.bf16.msra.mxu0 %v1070
        %1148 = vmatprep.subr.bf16.mxu0 0
        %1149 = vmatpush1.bf16.msra.mxu0 %v1067
        %1150 = vmatprep.subr.bf16.mxu0 0
        %1151 = vmatpush1.bf16.msra.mxu0 %v1064
        %1152 = vmatprep.subr.bf16.mxu0 0
        %1153 = vmatpush1.bf16.msra.mxu0 %v1061
        %1154 = vmatprep.subr.bf16.mxu0 0
        %1155 = vmatpush1.bf16.msra.mxu0 %v1058
        %1156 = vmatprep.subr.bf16.mxu0 0
        %1157 = vmatpush1.bf16.msra.mxu0 %v1055
        %1158 = vmatprep.subr.bf16.mxu0 0
        %1159 = vmatpush2.bf16.msra.mxu0 0
        %1160 = vmatprep.subr.bf16.mxu0 0
        %1161 = vmatpush2.bf16.msra.mxu0 0
        %1162 = vmatprep.subr.bf16.mxu0 0
        %1163 = vmatpush2.bf16.msra.mxu0 0
        %1164 = vmatprep.subr.bf16.mxu0 0
        %1165 = vmatpush2.bf16.msra.mxu0 0
        %1166 = vmatprep.subr.bf16.mxu0 0
        %1167 = vmatpush2.bf16.msra.mxu0 0
        %1168 = vmatprep.subr.bf16.mxu0 0
        %1169 = vmatpush2.bf16.msra.mxu0 0
        %1170 = vmatprep.subr.bf16.mxu0 0
        %1171 = vmatpush2.bf16.msra.mxu0 0
        %1172 = vmatprep.subr.bf16.mxu0 0
        %1173 = vmatpush2.bf16.msra.mxu0 0
        %1174 = vmatprep.mubr.bf16.mxu0 0
        %1175 = vmatmul.mubr.bf16.gmra.mxu0 %v922
        %v1176 = vpop.f32.mrf.mxu0
        %v1177 = vadd.f32 %v969, %v1176
        %v1178 = vpop.f32.mrf.mxu0
        %v1179 = vpop.f32.mrf.mxu0
        %v1180 = vpop.f32.mrf.mxu0
        %1181 = vdwg.mxu0
        %v1182 = vmul.f32 %v1136, 0.17677669
        %v1183 = vpack.c.bf16 %v1182, %v1182
        %v1184 = vpack.c.bf16 %v1138, %v1138
        %v1185 = vpack.c.bf16 %v1177, %v1177
        %vm1186 = vcmask 261120
        %v1188 = vsel %vm1186, %v1183, 0
        %v1191 = vsel %vm1186, %v1184, 0
        %1193 = vmatprep.subr.bf16.mxu0 0
        %1194 = vmatpush1.bf16.xpose.msra.mxu0 0
        %1195 = vmatprep.subr.bf16.mxu0 0
        %1196 = vmatpush1.bf16.xpose.msra.mxu0 0
        %1197 = vmatprep.subr.bf16.mxu0 0
        %1198 = vmatpush1.bf16.xpose.msra.mxu0 0
        %1199 = vmatprep.subr.bf16.mxu0 0
        %1200 = vmatpush1.bf16.xpose.msra.mxu0 0
        %1201 = vmatprep.subr.bf16.mxu0 0
        %1202 = vmatpush1.bf16.xpose.msra.mxu0 0
        %1203 = vmatprep.subr.bf16.mxu0 0
        %1204 = vmatpush1.bf16.xpose.msra.mxu0 0
        %1205 = vmatprep.subr.bf16.mxu0 0
        %1206 = vmatpush1.bf16.xpose.msra.mxu0 0
        %1207 = vmatprep.subr.bf16.mxu0 0
        %1208 = vmatpush1.bf16.xpose.msra.mxu0 %v1191
        %1209 = vmatprep.subr.bf16.mxu0 0
        %1210 = vmatpush2.bf16.xpose.msra.mxu0 0
        %1211 = vmatprep.subr.bf16.mxu0 0
        %1212 = vmatpush2.bf16.xpose.msra.mxu0 0
        %1213 = vmatprep.subr.bf16.mxu0 0
        %1214 = vmatpush2.bf16.xpose.msra.mxu0 0
        %1215 = vmatprep.subr.bf16.mxu0 0
        %1216 = vmatpush2.bf16.xpose.msra.mxu0 0
        %1217 = vmatprep.subr.bf16.mxu0 0
        %1218 = vmatpush2.bf16.xpose.msra.mxu0 0
        %1219 = vmatprep.subr.bf16.mxu0 0
        %1220 = vmatpush2.bf16.xpose.msra.mxu0 0
        %1221 = vmatprep.subr.bf16.mxu0 0
        %1222 = vmatpush2.bf16.xpose.msra.mxu0 0
        %1223 = vmatprep.subr.bf16.mxu0 0
        %1224 = vmatpush2.bf16.xpose.msra.mxu0 0
        %1225 = vmatprep.mubr.bf16.mxu0 0
        %1226 = vmatmul.mubr.bf16.gmra.mxu0 %v1188
        %v1227 = vpop.f32.mrf.mxu0
        %v1228 = vadd.f32 0.0, %v1227
        %v1229 = vpop.f32.mrf.mxu0
        %v1230 = vpop.f32.mrf.mxu0
        %v1231 = vpop.f32.mrf.mxu0
        %1232 = vdwg.mxu0
        %vm1233 = vcmask 64512
        %v1234 = vsel %vm1233, %v1228, -inf
        %1235 = vmax.xlane.f32.xlu0 %v1234
        %v1236 = vpop.xlane.xlu0 %1235
        %v1237 = vsub.f32 %v1228, %v1236
        %v1238 = vmul.f32 %v1237, 1.442695
        %v1239 = vpow.pop %v1238
        %v1240 = vsel %vm1233, %v1239, 0.0
        %1241 = vadd.xlane.f32.xlu0 %v1240
        %v1242 = vpop.xlane.xlu0 %1241
        %v1243 = vrcp.pop %v1242
        %v1244 = vmul.f32 %v1239, %v1243
        %v1245 = vpack.c.bf16 %v1244, %v1244
        %v1247 = vsel %vm1233, %v1245, 0
        %vm1249 = vcmask 1043456
        %v1251 = vsel %vm1249, %v1185, 0
        %1253 = vmatprep.subr.bf16.mxu0 0
        %1254 = vmatpush1.bf16.msra.mxu0 0
        %1255 = vmatprep.subr.bf16.mxu0 0
        %1256 = vmatpush1.bf16.msra.mxu0 0
        %1257 = vmatprep.subr.bf16.mxu0 0
        %1258 = vmatpush1.bf16.msra.mxu0 0
        %1259 = vmatprep.subr.bf16.mxu0 0
        %1260 = vmatpush1.bf16.msra.mxu0 0
        %1261 = vmatprep.subr.bf16.mxu0 0
        %1262 = vmatpush1.bf16.msra.mxu0 0
        %1263 = vmatprep.subr.bf16.mxu0 0
        %1264 = vmatpush1.bf16.msra.mxu0 0
        %1265 = vmatprep.subr.bf16.mxu0 0
        %1266 = vmatpush1.bf16.msra.mxu0 0
        %1267 = vmatprep.subr.bf16.mxu0 0
        %1268 = vmatpush1.bf16.msra.mxu0 %v1251
        %1269 = vmatprep.subr.bf16.mxu0 0
        %1270 = vmatpush2.bf16.msra.mxu0 0
        %1271 = vmatprep.subr.bf16.mxu0 0
        %1272 = vmatpush2.bf16.msra.mxu0 0
        %1273 = vmatprep.subr.bf16.mxu0 0
        %1274 = vmatpush2.bf16.msra.mxu0 0
        %1275 = vmatprep.subr.bf16.mxu0 0
        %1276 = vmatpush2.bf16.msra.mxu0 0
        %1277 = vmatprep.subr.bf16.mxu0 0
        %1278 = vmatpush2.bf16.msra.mxu0 0
        %1279 = vmatprep.subr.bf16.mxu0 0
        %1280 = vmatpush2.bf16.msra.mxu0 0
        %1281 = vmatprep.subr.bf16.mxu0 0
        %1282 = vmatpush2.bf16.msra.mxu0 0
        %1283 = vmatprep.subr.bf16.mxu0 0
        %1284 = vmatpush2.bf16.msra.mxu0 0
        %1285 = vmatprep.mubr.bf16.mxu0 0
        %1286 = vmatmul.mubr.bf16.gmra.mxu0 %v1247
        %v1287 = vpop.f32.mrf.mxu0
        %v1288 = vadd.f32 0.0, %v1287
        %v1289 = vpop.f32.mrf.mxu0
        %v1290 = vpop.f32.mrf.mxu0
        %v1291 = vpop.f32.mrf.mxu0
        %1292 = vdwg.mxu0
        %v1293 = vpack.c.bf16 %v1288, %v1288
        %vm1294 = vcmask 257024
        %1295 = vst.msk [vmem:[#allocation2] sm:$0xf] %vm1294, %v1293
        %1297 = vrot.lane.b32.xlu0 %v1183, 96
        %v1298 = vpop.permute.xlu0 %1297
        %1300 = vrot.lane.b32.xlu0 %v1184, 96
        %v1301 = vpop.permute.xlu0 %1300
        %v1303 = vsel %vm1186, %v1298, 0
        %v1306 = vsel %vm1186, %v1301, 0
        %1308 = vmatprep.subr.bf16.mxu0 0
        %1309 = vmatpush1.bf16.xpose.msra.mxu0 0
        %1310 = vmatprep.subr.bf16.mxu0 0
        %1311 = vmatpush1.bf16.xpose.msra.mxu0 0
        %1312 = vmatprep.subr.bf16.mxu0 0
        %1313 = vmatpush1.bf16.xpose.msra.mxu0 0
        %1314 = vmatprep.subr.bf16.mxu0 0
        %1315 = vmatpush1.bf16.xpose.msra.mxu0 0
        %1316 = vmatprep.subr.bf16.mxu0 0
        %1317 = vmatpush1.bf16.xpose.msra.mxu0 0
        %1318 = vmatprep.subr.bf16.mxu0 0
        %1319 = vmatpush1.bf16.xpose.msra.mxu0 0
        %1320 = vmatprep.subr.bf16.mxu0 0
        %1321 = vmatpush1.bf16.xpose.msra.mxu0 0
        %1322 = vmatprep.subr.bf16.mxu0 0
        %1323 = vmatpush1.bf16.xpose.msra.mxu0 %v1306
        %1324 = vmatprep.subr.bf16.mxu0 0
        %1325 = vmatpush2.bf16.xpose.msra.mxu0 0
        %1326 = vmatprep.subr.bf16.mxu0 0
        %1327 = vmatpush2.bf16.xpose.msra.mxu0 0
        %1328 = vmatprep.subr.bf16.mxu0 0
        %1329 = vmatpush2.bf16.xpose.msra.mxu0 0
        %1330 = vmatprep.subr.bf16.mxu0 0
        %1331 = vmatpush2.bf16.xpose.msra.mxu0 0
        %1332 = vmatprep.subr.bf16.mxu0 0
        %1333 = vmatpush2.bf16.xpose.msra.mxu0 0
        %1334 = vmatprep.subr.bf16.mxu0 0
        %1335 = vmatpush2.bf16.xpose.msra.mxu0 0
        %1336 = vmatprep.subr.bf16.mxu0 0
        %1337 = vmatpush2.bf16.xpose.msra.mxu0 0
        %1338 = vmatprep.subr.bf16.mxu0 0
        %1339 = vmatpush2.bf16.xpose.msra.mxu0 0
        %1340 = vmatprep.mubr.bf16.mxu0 0
        %1341 = vmatmul.mubr.bf16.gmra.mxu0 %v1303
        %v1342 = vpop.f32.mrf.mxu0
        %v1343 = vadd.f32 0.0, %v1342
        %v1344 = vpop.f32.mrf.mxu0
        %v1345 = vpop.f32.mrf.mxu0
        %v1346 = vpop.f32.mrf.mxu0
        %1347 = vdwg.mxu0
        %v1348 = vsel %vm1233, %v1343, -inf
        %1349 = vmax.xlane.f32.xlu0 %v1348
        %v1350 = vpop.xlane.xlu0 %1349
        %v1351 = vsub.f32 %v1343, %v1350
        %v1352 = vmul.f32 %v1351, 1.442695
        %v1353 = vpow.pop %v1352
        %v1354 = vsel %vm1233, %v1353, 0.0
        %1355 = vadd.xlane.f32.xlu0 %v1354
        %v1356 = vpop.xlane.xlu0 %1355
        %v1357 = vrcp.pop %v1356
        %v1358 = vmul.f32 %v1353, %v1357
        %v1359 = vpack.c.bf16 %v1358, %v1358
        %1361 = vrot.lane.b32.xlu0 %v1185, 96
        %v1362 = vpop.permute.xlu0 %1361
        %v1364 = vsel %vm1233, %v1359, 0
        %v1367 = vsel %vm1249, %v1362, 0
        %1369 = vmatprep.subr.bf16.mxu0 0
        %1370 = vmatpush1.bf16.msra.mxu0 0
        %1371 = vmatprep.subr.bf16.mxu0 0
        %1372 = vmatpush1.bf16.msra.mxu0 0
        %1373 = vmatprep.subr.bf16.mxu0 0
        %1374 = vmatpush1.bf16.msra.mxu0 0
        %1375 = vmatprep.subr.bf16.mxu0 0
        %1376 = vmatpush1.bf16.msra.mxu0 0
        %1377 = vmatprep.subr.bf16.mxu0 0
        %1378 = vmatpush1.bf16.msra.mxu0 0
        %1379 = vmatprep.subr.bf16.mxu0 0
        %1380 = vmatpush1.bf16.msra.mxu0 0
        %1381 = vmatprep.subr.bf16.mxu0 0
        %1382 = vmatpush1.bf16.msra.mxu0 0
        %1383 = vmatprep.subr.bf16.mxu0 0
        %1384 = vmatpush1.bf16.msra.mxu0 %v1367
        %1385 = vmatprep.subr.bf16.mxu0 0
        %1386 = vmatpush2.bf16.msra.mxu0 0
        %1387 = vmatprep.subr.bf16.mxu0 0
        %1388 = vmatpush2.bf16.msra.mxu0 0
        %1389 = vmatprep.subr.bf16.mxu0 0
        %1390 = vmatpush2.bf16.msra.mxu0 0
        %1391 = vmatprep.subr.bf16.mxu0 0
        %1392 = vmatpush2.bf16.msra.mxu0 0
        %1393 = vmatprep.subr.bf16.mxu0 0
        %1394 = vmatpush2.bf16.msra.mxu0 0
        %1395 = vmatprep.subr.bf16.mxu0 0
        %1396 = vmatpush2.bf16.msra.mxu0 0
        %1397 = vmatprep.subr.bf16.mxu0 0
        %1398 = vmatpush2.bf16.msra.mxu0 0
        %1399 = vmatprep.subr.bf16.mxu0 0
        %1400 = vmatpush2.bf16.msra.mxu0 0
        %1401 = vmatprep.mubr.bf16.mxu0 0
        %1402 = vmatmul.mubr.bf16.gmra.mxu0 %v1364
        %v1403 = vpop.f32.mrf.mxu0
        %v1404 = vadd.f32 0.0, %v1403
        %v1405 = vpop.f32.mrf.mxu0
        %v1406 = vpop.f32.mrf.mxu0
        %v1407 = vpop.f32.mrf.mxu0
        %1408 = vdwg.mxu0
        %v1409 = vpack.c.bf16 %v1404, %v1404
        %v1411 = vunpack.c.l.b16 %v1409
        %v1412 = vpack.c.b16 %v1411, %v1411
        %1413 = vrot.lane.b32.xlu0 %v1412, 32
        %v1414 = vpop.permute.xlu0 %1413
        %vm1416 = vcmask 519424
        %1417 = vst.msk [vmem:[#allocation2] sm:$0xf] %vm1416, %v1414
        %1418 = vrot.lane.b32.xlu0 %v1183, 64
        %v1419 = vpop.permute.xlu0 %1418
        %1420 = vrot.lane.b32.xlu0 %v1184, 64
        %v1421 = vpop.permute.xlu0 %1420
        %v1423 = vsel %vm1186, %v1419, 0
        %v1426 = vsel %vm1186, %v1421, 0
        %1428 = vmatprep.subr.bf16.mxu0 0
        %1429 = vmatpush1.bf16.xpose.msra.mxu0 0
        %1430 = vmatprep.subr.bf16.mxu0 0
        %1431 = vmatpush1.bf16.xpose.msra.mxu0 0
        %1432 = vmatprep.subr.bf16.mxu0 0
        %1433 = vmatpush1.bf16.xpose.msra.mxu0 0
        %1434 = vmatprep.subr.bf16.mxu0 0
        %1435 = vmatpush1.bf16.xpose.msra.mxu0 0
        %1436 = vmatprep.subr.bf16.mxu0 0
        %1437 = vmatpush1.bf16.xpose.msra.mxu0 0
        %1438 = vmatprep.subr.bf16.mxu0 0
        %1439 = vmatpush1.bf16.xpose.msra.mxu0 0
        %1440 = vmatprep.subr.bf16.mxu0 0
        %1441 = vmatpush1.bf16.xpose.msra.mxu0 0
        %1442 = vmatprep.subr.bf16.mxu0 0
        %1443 = vmatpush1.bf16.xpose.msra.mxu0 %v1426
        %1444 = vmatprep.subr.bf16.mxu0 0
        %1445 = vmatpush2.bf16.xpose.msra.mxu0 0
        %1446 = vmatprep.subr.bf16.mxu0 0
        %1447 = vmatpush2.bf16.xpose.msra.mxu0 0
        %1448 = vmatprep.subr.bf16.mxu0 0
        %1449 = vmatpush2.bf16.xpose.msra.mxu0 0
        %1450 = vmatprep.subr.bf16.mxu0 0
        %1451 = vmatpush2.bf16.xpose.msra.mxu0 0
        %1452 = vmatprep.subr.bf16.mxu0 0
        %1453 = vmatpush2.bf16.xpose.msra.mxu0 0
        %1454 = vmatprep.subr.bf16.mxu0 0
        %1455 = vmatpush2.bf16.xpose.msra.mxu0 0
        %1456 = vmatprep.subr.bf16.mxu0 0
        %1457 = vmatpush2.bf16.xpose.msra.mxu0 0
        %1458 = vmatprep.subr.bf16.mxu0 0
        %1459 = vmatpush2.bf16.xpose.msra.mxu0 0
        %1460 = vmatprep.mubr.bf16.mxu0 0
        %1461 = vmatmul.mubr.bf16.gmra.mxu0 %v1423
        %v1462 = vpop.f32.mrf.mxu0
        %v1463 = vadd.f32 0.0, %v1462
        %v1464 = vpop.f32.mrf.mxu0
        %v1465 = vpop.f32.mrf.mxu0
        %v1466 = vpop.f32.mrf.mxu0
        %1467 = vdwg.mxu0
        %v1468 = vsel %vm1233, %v1463, -inf
        %1469 = vmax.xlane.f32.xlu0 %v1468
        %v1470 = vpop.xlane.xlu0 %1469
        %v1471 = vsub.f32 %v1463, %v1470
        %v1472 = vmul.f32 %v1471, 1.442695
        %v1473 = vpow.pop %v1472
        %v1474 = vsel %vm1233, %v1473, 0.0
        %1475 = vadd.xlane.f32.xlu0 %v1474
        %v1476 = vpop.xlane.xlu0 %1475
        %v1477 = vrcp.pop %v1476
        %v1478 = vmul.f32 %v1473, %v1477
        %v1479 = vpack.c.bf16 %v1478, %v1478
        %1480 = vrot.lane.b32.xlu0 %v1185, 64
        %v1481 = vpop.permute.xlu0 %1480
        %v1483 = vsel %vm1233, %v1479, 0
        %v1486 = vsel %vm1249, %v1481, 0
        %1488 = vmatprep.subr.bf16.mxu0 0
        %1489 = vmatpush1.bf16.msra.mxu0 0
        %1490 = vmatprep.subr.bf16.mxu0 0
        %1491 = vmatpush1.bf16.msra.mxu0 0
        %1492 = vmatprep.subr.bf16.mxu0 0
        %1493 = vmatpush1.bf16.msra.mxu0 0
        %1494 = vmatprep.subr.bf16.mxu0 0
        %1495 = vmatpush1.bf16.msra.mxu0 0
        %1496 = vmatprep.subr.bf16.mxu0 0
        %1497 = vmatpush1.bf16.msra.mxu0 0
        %1498 = vmatprep.subr.bf16.mxu0 0
        %1499 = vmatpush1.bf16.msra.mxu0 0
        %1500 = vmatprep.subr.bf16.mxu0 0
        %1501 = vmatpush1.bf16.msra.mxu0 0
        %1502 = vmatprep.subr.bf16.mxu0 0
        %1503 = vmatpush1.bf16.msra.mxu0 %v1486
        %1504 = vmatprep.subr.bf16.mxu0 0
        %1505 = vmatpush2.bf16.msra.mxu0 0
        %1506 = vmatprep.subr.bf16.mxu0 0
        %1507 = vmatpush2.bf16.msra.mxu0 0
        %1508 = vmatprep.subr.bf16.mxu0 0
        %1509 = vmatpush2.bf16.msra.mxu0 0
        %1510 = vmatprep.subr.bf16.mxu0 0
        %1511 = vmatpush2.bf16.msra.mxu0 0
        %1512 = vmatprep.subr.bf16.mxu0 0
        %1513 = vmatpush2.bf16.msra.mxu0 0
        %1514 = vmatprep.subr.bf16.mxu0 0
        %1515 = vmatpush2.bf16.msra.mxu0 0
        %1516 = vmatprep.subr.bf16.mxu0 0
        %1517 = vmatpush2.bf16.msra.mxu0 0
        %1518 = vmatprep.subr.bf16.mxu0 0
        %1519 = vmatpush2.bf16.msra.mxu0 0
        %1520 = vmatprep.mubr.bf16.mxu0 0
        %1521 = vmatmul.mubr.bf16.gmra.mxu0 %v1483
        %v1522 = vpop.f32.mrf.mxu0
        %v1523 = vadd.f32 0.0, %v1522
        %v1524 = vpop.f32.mrf.mxu0
        %v1525 = vpop.f32.mrf.mxu0
        %v1526 = vpop.f32.mrf.mxu0
        %1527 = vdwg.mxu0
        %v1528 = vpack.c.bf16 %v1523, %v1523
        %v1530 = vunpack.c.l.b16 %v1528
        %v1531 = vpack.c.b16 %v1530, %v1530
        %1532 = vrot.lane.b32.xlu0 %v1531, 64
        %v1533 = vpop.permute.xlu0 %1532
        %vm1535 = vcmask 781824
        %1536 = vst.msk [vmem:[#allocation2] sm:$0xf] %vm1535, %v1533
        %1537 = vrot.lane.b32.xlu0 %v1183, 32
        %v1538 = vpop.permute.xlu0 %1537
        %1539 = vrot.lane.b32.xlu0 %v1184, 32
        %v1540 = vpop.permute.xlu0 %1539
        %v1542 = vsel %vm1186, %v1538, 0
        %v1545 = vsel %vm1186, %v1540, 0
        %1547 = vmatprep.subr.bf16.mxu0 0
        %1548 = vmatpush1.bf16.xpose.msra.mxu0 0
        %1549 = vmatprep.subr.bf16.mxu0 0
        %1550 = vmatpush1.bf16.xpose.msra.mxu0 0
        %1551 = vmatprep.subr.bf16.mxu0 0
        %1552 = vmatpush1.bf16.xpose.msra.mxu0 0
        %1553 = vmatprep.subr.bf16.mxu0 0
        %1554 = vmatpush1.bf16.xpose.msra.mxu0 0
        %1555 = vmatprep.subr.bf16.mxu0 0
        %1556 = vmatpush1.bf16.xpose.msra.mxu0 0
        %1557 = vmatprep.subr.bf16.mxu0 0
        %1558 = vmatpush1.bf16.xpose.msra.mxu0 0
        %1559 = vmatprep.subr.bf16.mxu0 0
        %1560 = vmatpush1.bf16.xpose.msra.mxu0 0
        %1561 = vmatprep.subr.bf16.mxu0 0
        %1562 = vmatpush1.bf16.xpose.msra.mxu0 %v1545
        %1563 = vmatprep.subr.bf16.mxu0 0
        %1564 = vmatpush2.bf16.xpose.msra.mxu0 0
        %1565 = vmatprep.subr.bf16.mxu0 0
        %1566 = vmatpush2.bf16.xpose.msra.mxu0 0
        %1567 = vmatprep.subr.bf16.mxu0 0
        %1568 = vmatpush2.bf16.xpose.msra.mxu0 0
        %1569 = vmatprep.subr.bf16.mxu0 0
        %1570 = vmatpush2.bf16.xpose.msra.mxu0 0
        %1571 = vmatprep.subr.bf16.mxu0 0
        %1572 = vmatpush2.bf16.xpose.msra.mxu0 0
        %1573 = vmatprep.subr.bf16.mxu0 0
        %1574 = vmatpush2.bf16.xpose.msra.mxu0 0
        %1575 = vmatprep.subr.bf16.mxu0 0
        %1576 = vmatpush2.bf16.xpose.msra.mxu0 0
        %1577 = vmatprep.subr.bf16.mxu0 0
        %1578 = vmatpush2.bf16.xpose.msra.mxu0 0
        %1579 = vmatprep.mubr.bf16.mxu0 0
        %1580 = vmatmul.mubr.bf16.gmra.mxu0 %v1542
        %v1581 = vpop.f32.mrf.mxu0
        %v1582 = vadd.f32 0.0, %v1581
        %v1583 = vpop.f32.mrf.mxu0
        %v1584 = vpop.f32.mrf.mxu0
        %v1585 = vpop.f32.mrf.mxu0
        %1586 = vdwg.mxu0
        %v1587 = vsel %vm1233, %v1582, -inf
        %1588 = vmax.xlane.f32.xlu0 %v1587
        %v1589 = vpop.xlane.xlu0 %1588
        %v1590 = vsub.f32 %v1582, %v1589
        %v1591 = vmul.f32 %v1590, 1.442695
        %v1592 = vpow.pop %v1591
        %v1593 = vsel %vm1233, %v1592, 0.0
        %1594 = vadd.xlane.f32.xlu0 %v1593
        %v1595 = vpop.xlane.xlu0 %1594
        %v1596 = vrcp.pop %v1595
        %v1597 = vmul.f32 %v1592, %v1596
        %v1598 = vpack.c.bf16 %v1597, %v1597
        %1599 = vrot.lane.b32.xlu0 %v1185, 32
        %v1600 = vpop.permute.xlu0 %1599
        %v1602 = vsel %vm1233, %v1598, 0
        %v1605 = vsel %vm1249, %v1600, 0
        %1607 = vmatprep.subr.bf16.mxu0 0
        %1608 = vmatpush1.bf16.msra.mxu0 0
        %1609 = vmatprep.subr.bf16.mxu0 0
        %1610 = vmatpush1.bf16.msra.mxu0 0
        %1611 = vmatprep.subr.bf16.mxu0 0
        %1612 = vmatpush1.bf16.msra.mxu0 0
        %1613 = vmatprep.subr.bf16.mxu0 0
        %1614 = vmatpush1.bf16.msra.mxu0 0
        %1615 = vmatprep.subr.bf16.mxu0 0
        %1616 = vmatpush1.bf16.msra.mxu0 0
        %1617 = vmatprep.subr.bf16.mxu0 0
        %1618 = vmatpush1.bf16.msra.mxu0 0
        %1619 = vmatprep.subr.bf16.mxu0 0
        %1620 = vmatpush1.bf16.msra.mxu0 0
        %1621 = vmatprep.subr.bf16.mxu0 0
        %1622 = vmatpush1.bf16.msra.mxu0 %v1605
        %1623 = vmatprep.subr.bf16.mxu0 0
        %1624 = vmatpush2.bf16.msra.mxu0 0
        %1625 = vmatprep.subr.bf16.mxu0 0
        %1626 = vmatpush2.bf16.msra.mxu0 0
        %1627 = vmatprep.subr.bf16.mxu0 0
        %1628 = vmatpush2.bf16.msra.mxu0 0
        %1629 = vmatprep.subr.bf16.mxu0 0
        %1630 = vmatpush2.bf16.msra.mxu0 0
        %1631 = vmatprep.subr.bf16.mxu0 0
        %1632 = vmatpush2.bf16.msra.mxu0 0
        %1633 = vmatprep.subr.bf16.mxu0 0
        %1634 = vmatpush2.bf16.msra.mxu0 0
        %1635 = vmatprep.subr.bf16.mxu0 0
        %1636 = vmatpush2.bf16.msra.mxu0 0
        %1637 = vmatprep.subr.bf16.mxu0 0
        %1638 = vmatpush2.bf16.msra.mxu0 0
        %1639 = vmatprep.mubr.bf16.mxu0 0
        %1640 = vmatmul.mubr.bf16.gmra.mxu0 %v1602
        %v1641 = vpop.f32.mrf.mxu0
        %v1642 = vadd.f32 0.0, %v1641
        %v1643 = vpop.f32.mrf.mxu0
        %v1644 = vpop.f32.mrf.mxu0
        %v1645 = vpop.f32.mrf.mxu0
        %1646 = vdwg.mxu0
        %v1647 = vpack.c.bf16 %v1642, %v1642
        %v1649 = vunpack.c.l.b16 %v1647
        %v1650 = vpack.c.b16 %v1649, %v1649
        %1651 = vrot.lane.b32.xlu0 %v1650, 96
        %v1652 = vpop.permute.xlu0 %1651
        %vm1654 = vcmask 1044224
        %1655 = vst.msk [vmem:[#allocation2] sm:$0xf] %vm1654, %v1652
        %v1656 = vld [vmem:[#allocation2] sm:$0xf]
        %v1657 = vld [vmem:[%s734] sm:$0xf]
        %v1658 = vld [vmem:[%s734 + $0x4] sm:$0xf]
        %v1659 = vld [vmem:[%s734 + $0x8] sm:$0xf]
        %v1660 = vld [vmem:[%s734 + $0xc] sm:$0xf]
        %v1661 = vld [vmem:[%s734 + $0x10] sm:$0xf]
        %v1662 = vld [vmem:[%s734 + $0x14] sm:$0xf]
        %v1663 = vld [vmem:[%s734 + $0x18] sm:$0xf]
        %v1664 = vld [vmem:[%s734 + $0x1c] sm:$0xf]
        %v1665 = vld [vmem:[%s734 + $0x20] sm:$0xf]
        %v1666 = vld [vmem:[%s734 + $0x24] sm:$0xf]
        %v1667 = vld [vmem:[%s734 + $0x28] sm:$0xf]
        %v1668 = vld [vmem:[%s734 + $0x2c] sm:$0xf]
        %v1669 = vld [vmem:[%s734 + $0x30] sm:$0xf]
        %v1670 = vld [vmem:[%s734 + $0x34] sm:$0xf]
        %v1671 = vld [vmem:[%s734 + $0x38] sm:$0xf]
        %v1672 = vld [vmem:[%s734 + $0x3c] sm:$0xf]
        %v1673 = vld [vmem:[%s861] sm:$0x1]
        %v1675 = vlaneseq
        %v1676 = vshrl.u32 %v1675, 7
        %v1677 = vsub.s32 0, %v1676
        %v1678 = vrot.slane %v1673, %v1677
        %v1696 = vunpack.c.l.b16 %v1657
        %v1697 = vunpack.c.l.b16 %v1658
        %v1698 = vunpack.c.l.b16 %v1659
        %v1699 = vunpack.c.l.b16 %v1660
        %v1700 = vunpack.c.l.b16 %v1661
        %v1701 = vunpack.c.l.b16 %v1662
        %v1702 = vunpack.c.l.b16 %v1663
        %v1703 = vunpack.c.l.b16 %v1664
        %v1704 = vunpack.c.l.b16 %v1665
        %v1705 = vunpack.c.l.b16 %v1666
        %v1706 = vunpack.c.l.b16 %v1667
        %v1707 = vunpack.c.l.b16 %v1668
        %v1708 = vunpack.c.l.b16 %v1669
        %v1709 = vunpack.c.l.b16 %v1670
        %v1710 = vunpack.c.l.b16 %v1671
        %v1711 = vunpack.c.l.b16 %v1672
        %v1712 = vpack.c.b16 %v1697, %v1696
        %v1713 = vpack.c.b16 %v1699, %v1698
        %v1714 = vpack.c.b16 %v1701, %v1700
        %v1715 = vpack.c.b16 %v1703, %v1702
        %v1716 = vpack.c.b16 %v1705, %v1704
        %v1717 = vpack.c.b16 %v1707, %v1706
        %v1718 = vpack.c.b16 %v1709, %v1708
        %v1719 = vpack.c.b16 %v1711, %v1710
        %1728 = vmatprep.subr.bf16.mxu0 0
        %1729 = vmatpush1.bf16.msra.mxu0 %v1719
        %1730 = vmatprep.subr.bf16.mxu0 0
        %1731 = vmatpush1.bf16.msra.mxu0 %v1718
        %1732 = vmatprep.subr.bf16.mxu0 0
        %1733 = vmatpush1.bf16.msra.mxu0 %v1717
        %1734 = vmatprep.subr.bf16.mxu0 0
        %1735 = vmatpush1.bf16.msra.mxu0 %v1716
        %1736 = vmatprep.subr.bf16.mxu0 0
        %1737 = vmatpush1.bf16.msra.mxu0 %v1715
        %1738 = vmatprep.subr.bf16.mxu0 0
        %1739 = vmatpush1.bf16.msra.mxu0 %v1714
        %1740 = vmatprep.subr.bf16.mxu0 0
        %1741 = vmatpush1.bf16.msra.mxu0 %v1713
        %1742 = vmatprep.subr.bf16.mxu0 0
        %1743 = vmatpush1.bf16.msra.mxu0 %v1712
        %1744 = vmatprep.subr.bf16.mxu0 0
        %1745 = vmatpush2.bf16.msra.mxu0 0
        %1746 = vmatprep.subr.bf16.mxu0 0
        %1747 = vmatpush2.bf16.msra.mxu0 0
        %1748 = vmatprep.subr.bf16.mxu0 0
        %1749 = vmatpush2.bf16.msra.mxu0 0
        %1750 = vmatprep.subr.bf16.mxu0 0
        %1751 = vmatpush2.bf16.msra.mxu0 0
        %1752 = vmatprep.subr.bf16.mxu0 0
        %1753 = vmatpush2.bf16.msra.mxu0 0
        %1754 = vmatprep.subr.bf16.mxu0 0
        %1755 = vmatpush2.bf16.msra.mxu0 0
        %1756 = vmatprep.subr.bf16.mxu0 0
        %1757 = vmatpush2.bf16.msra.mxu0 0
        %1758 = vmatprep.subr.bf16.mxu0 0
        %1759 = vmatpush2.bf16.msra.mxu0 0
        %1760 = vmatprep.mubr.bf16.mxu0 0
        %1761 = vmatmul.mubr.bf16.gmra.mxu0 %v1656
        %v1762 = vpop.f32.mrf.mxu0
        %v1763 = vadd.f32 %v1678, %v1762
        %v1764 = vpop.f32.mrf.mxu0
        %v1765 = vpop.f32.mrf.mxu0
        %v1766 = vpop.f32.mrf.mxu0
        %1767 = vdwg.mxu0
        %v1768 = vadd.f32 %v923, %v1763
        %v1769 = vld [vmem:[%s864] sm:$0x1]
        %v1770 = vld [vmem:[%s867] sm:$0x1]
        %1771 = vadd.xlane.f32.xlu0 %v1768
        %v1772 = vpop.xlane.xlu0 %1771
        %v1773 = vrcp.pop 128.0
        %v1774 = vmul.f32 %v1772, %v1773
        %v1775 = vsub.f32 %v1768, %v1774
        %v1776 = vmul.f32 %v1775, %v1775
        %1777 = vadd.xlane.f32.xlu0 %v1776
        %v1778 = vpop.xlane.xlu0 %1777
        %v1779 = vmul.f32 %v1778, %v1773
        %v1780 = vadd.f32 %v1779, 1e-12
        %v1781 = vrsqrt.pop %v1780
        %v1782 = vmul.f32 %v1775, %v1781
        %v1784 = vlaneseq
        %v1785 = vshrl.u32 %v1784, 7
        %v1786 = vsub.s32 0, %v1785
        %v1787 = vrot.slane %v1769, %v1786
        %v1789 = vmul.f32 %v1782, %v1787
        %v1791 = vlaneseq
        %v1792 = vshrl.u32 %v1791, 7
        %v1793 = vsub.s32 0, %v1792
        %v1794 = vrot.slane %v1770, %v1793
        %v1796 = vadd.f32 %v1789, %v1794
        %v1797 = vpack.c.bf16 %v1796, %v1796
        %v1798 = vld [vmem:[%s743] sm:$0xff]
        %v1799 = vld [vmem:[%s743 + $0x8] sm:$0xff]
        %v1800 = vld [vmem:[%s743 + $0x10] sm:$0xff]
        %v1801 = vld [vmem:[%s743 + $0x18] sm:$0xff]
        %v1802 = vld [vmem:[%s743 + $0x20] sm:$0xff]
        %v1803 = vld [vmem:[%s743 + $0x28] sm:$0xff]
        %v1804 = vld [vmem:[%s743 + $0x30] sm:$0xff]
        %v1805 = vld [vmem:[%s743 + $0x38] sm:$0xff]
        %v1806 = vld [vmem:[%s743 + $0x40] sm:$0xff]
        %v1807 = vld [vmem:[%s743 + $0x48] sm:$0xff]
        %v1808 = vld [vmem:[%s743 + $0x50] sm:$0xff]
        %v1809 = vld [vmem:[%s743 + $0x58] sm:$0xff]
        %v1810 = vld [vmem:[%s743 + $0x60] sm:$0xff]
        %v1811 = vld [vmem:[%s743 + $0x68] sm:$0xff]
        %v1812 = vld [vmem:[%s743 + $0x70] sm:$0xff]
        %v1813 = vld [vmem:[%s743 + $0x78] sm:$0xff]
        %v1814 = vld [vmem:[%s871] sm:$0x3]
        %v1816 = vlaneseq
        %v1817 = vshrl.u32 %v1816, 7
        %v1818 = vsub.s32 0, %v1817
        %v1819 = vrot.slane %v1814, %v1818
        %v1820 = vlaneseq
        %v1821 = vshrl.u32 %v1820, 7
        %v1822 = vsub.s32 1, %v1821
        %v1823 = vrot.slane %v1814, %v1822
        %v1842 = vunpack.c.l.b16 %v1798
        %v1843 = vunpack.c.h.b16 %v1798
        %v1844 = vunpack.c.l.b16 %v1799
        %v1845 = vunpack.c.h.b16 %v1799
        %v1846 = vunpack.c.l.b16 %v1800
        %v1847 = vunpack.c.h.b16 %v1800
        %v1848 = vunpack.c.l.b16 %v1801
        %v1849 = vunpack.c.h.b16 %v1801
        %v1850 = vunpack.c.l.b16 %v1802
        %v1851 = vunpack.c.h.b16 %v1802
        %v1852 = vunpack.c.l.b16 %v1803
        %v1853 = vunpack.c.h.b16 %v1803
        %v1854 = vunpack.c.l.b16 %v1804
        %v1855 = vunpack.c.h.b16 %v1804
        %v1856 = vunpack.c.l.b16 %v1805
        %v1857 = vunpack.c.h.b16 %v1805
        %v1858 = vunpack.c.l.b16 %v1806
        %v1859 = vunpack.c.h.b16 %v1806
        %v1860 = vunpack.c.l.b16 %v1807
        %v1861 = vunpack.c.h.b16 %v1807
        %v1862 = vunpack.c.l.b16 %v1808
        %v1863 = vunpack.c.h.b16 %v1808
        %v1864 = vunpack.c.l.b16 %v1809
        %v1865 = vunpack.c.h.b16 %v1809
        %v1866 = vunpack.c.l.b16 %v1810
        %v1867 = vunpack.c.h.b16 %v1810
        %v1868 = vunpack.c.l.b16 %v1811
        %v1869 = vunpack.c.h.b16 %v1811
        %v1870 = vunpack.c.l.b16 %v1812
        %v1871 = vunpack.c.h.b16 %v1812
        %v1872 = vunpack.c.l.b16 %v1813
        %v1873 = vunpack.c.h.b16 %v1813
        %v1874 = vpack.c.b16 %v1844, %v1842
        %v1875 = vpack.c.b16 %v1845, %v1843
        %v1876 = vpack.c.b16 %v1848, %v1846
        %v1877 = vpack.c.b16 %v1849, %v1847
        %v1878 = vpack.c.b16 %v1852, %v1850
        %v1879 = vpack.c.b16 %v1853, %v1851
        %v1880 = vpack.c.b16 %v1856, %v1854
        %v1881 = vpack.c.b16 %v1857, %v1855
        %v1882 = vpack.c.b16 %v1860, %v1858
        %v1883 = vpack.c.b16 %v1861, %v1859
        %v1884 = vpack.c.b16 %v1864, %v1862
        %v1885 = vpack.c.b16 %v1865, %v1863
        %v1886 = vpack.c.b16 %v1868, %v1866
        %v1887 = vpack.c.b16 %v1869, %v1867
        %v1888 = vpack.c.b16 %v1872, %v1870
        %v1889 = vpack.c.b16 %v1873, %v1871
        %1906 = vmatprep.subr.bf16.mxu0 %v1889
        %1907 = vmatpush1.bf16.msra.mxu0 %v1888
        %1908 = vmatprep.subr.bf16.mxu0 %v1887
        %1909 = vmatpush1.bf16.msra.mxu0 %v1886
        %1910 = vmatprep.subr.bf16.mxu0 %v1885
        %1911 = vmatpush1.bf16.msra.mxu0 %v1884
        %1912 = vmatprep.subr.bf16.mxu0 %v1883
        %1913 = vmatpush1.bf16.msra.mxu0 %v1882
        %1914 = vmatprep.subr.bf16.mxu0 %v1881
        %1915 = vmatpush1.bf16.msra.mxu0 %v1880
        %1916 = vmatprep.subr.bf16.mxu0 %v1879
        %1917 = vmatpush1.bf16.msra.mxu0 %v1878
        %1918 = vmatprep.subr.bf16.mxu0 %v1877
        %1919 = vmatpush1.bf16.msra.mxu0 %v1876
        %1920 = vmatprep.subr.bf16.mxu0 %v1875
        %1921 = vmatpush1.bf16.msra.mxu0 %v1874
        %1922 = vmatprep.subr.bf16.mxu0 0
        %1923 = vmatpush2.bf16.msra.mxu0 0
        %1924 = vmatprep.subr.bf16.mxu0 0
        %1925 = vmatpush2.bf16.msra.mxu0 0
        %1926 = vmatprep.subr.bf16.mxu0 0
        %1927 = vmatpush2.bf16.msra.mxu0 0
        %1928 = vmatprep.subr.bf16.mxu0 0
        %1929 = vmatpush2.bf16.msra.mxu0 0
        %1930 = vmatprep.subr.bf16.mxu0 0
        %1931 = vmatpush2.bf16.msra.mxu0 0
        %1932 = vmatprep.subr.bf16.mxu0 0
        %1933 = vmatpush2.bf16.msra.mxu0 0
        %1934 = vmatprep.subr.bf16.mxu0 0
        %1935 = vmatpush2.bf16.msra.mxu0 0
        %1936 = vmatprep.subr.bf16.mxu0 0
        %1937 = vmatpush2.bf16.msra.mxu0 0
        %1938 = vmatprep.mubr.bf16.mxu0 0
        %1939 = vmatmul.mubr.bf16.gmra.mxu0 %v1797
        %v1940 = vpop.f32.mrf.mxu0
        %v1941 = vadd.f32 %v1819, %v1940
        %v1942 = vpop.f32.mrf.mxu0
        %v1943 = vadd.f32 %v1823, %v1942
        %v1944 = vpop.f32.mrf.mxu0
        %v1945 = vpop.f32.mrf.mxu0
        %1946 = vdwg.mxu0
        %v1947 = vmul.f32 %v1941, 0.5
        %v1948 = vmul.f32 %v1943, 0.5
        %v1949 = vmul.f32 %v1941, 0.044715
        %v1950 = vmul.f32 %v1943, 0.044715
        %v1951 = vmul.f32 %v1949, %v1941
        %v1952 = vmul.f32 %v1950, %v1943
        %v1953 = vmul.f32 %v1951, %v1941
        %v1954 = vmul.f32 %v1952, %v1943
        %v1955 = vadd.f32 %v1941, %v1953
        %v1956 = vadd.f32 %v1943, %v1954
        %v1957 = vmul.f32 %v1955, 0.7978846
        %v1958 = vmul.f32 %v1956, 0.7978846
        %v1959 = vtanh.pop %v1957
        %v1960 = vtanh.pop %v1958
        %v1961 = vadd.f32 %v1959, 1.0
        %v1962 = vadd.f32 %v1960, 1.0
        %v1963 = vmul.f32 %v1947, %v1961
        %v1964 = vmul.f32 %v1948, %v1962
        %v1965 = vpack.c.bf16 %v1963, %v1963
        %v1966 = vpack.c.bf16 %v1964, %v1964
        %v1967 = vld [vmem:[%s752] sm:$0xf]
        %v1968 = vld [vmem:[%s752 + $0x4] sm:$0xf]
        %v1969 = vld [vmem:[%s752 + $0x8] sm:$0xf]
        %v1970 = vld [vmem:[%s752 + $0xc] sm:$0xf]
        %v1971 = vld [vmem:[%s752 + $0x10] sm:$0xf]
        %v1972 = vld [vmem:[%s752 + $0x14] sm:$0xf]
        %v1973 = vld [vmem:[%s752 + $0x18] sm:$0xf]
        %v1974 = vld [vmem:[%s752 + $0x1c] sm:$0xf]
        %v1975 = vld [vmem:[%s752 + $0x20] sm:$0xf]
        %v1976 = vld [vmem:[%s752 + $0x24] sm:$0xf]
        %v1977 = vld [vmem:[%s752 + $0x28] sm:$0xf]
        %v1978 = vld [vmem:[%s752 + $0x2c] sm:$0xf]
        %v1979 = vld [vmem:[%s752 + $0x30] sm:$0xf]
        %v1980 = vld [vmem:[%s752 + $0x34] sm:$0xf]
        %v1981 = vld [vmem:[%s752 + $0x38] sm:$0xf]
        %v1982 = vld [vmem:[%s752 + $0x3c] sm:$0xf]
        %v1983 = vld [vmem:[%s752 + $0x40] sm:$0xf]
        %v1984 = vld [vmem:[%s752 + $0x44] sm:$0xf]
        %v1985 = vld [vmem:[%s752 + $0x48] sm:$0xf]
        %v1986 = vld [vmem:[%s752 + $0x4c] sm:$0xf]
        %v1987 = vld [vmem:[%s752 + $0x50] sm:$0xf]
        %v1988 = vld [vmem:[%s752 + $0x54] sm:$0xf]
        %v1989 = vld [vmem:[%s752 + $0x58] sm:$0xf]
        %v1990 = vld [vmem:[%s752 + $0x5c] sm:$0xf]
        %v1991 = vld [vmem:[%s752 + $0x60] sm:$0xf]
        %v1992 = vld [vmem:[%s752 + $0x64] sm:$0xf]
        %v1993 = vld [vmem:[%s752 + $0x68] sm:$0xf]
        %v1994 = vld [vmem:[%s752 + $0x6c] sm:$0xf]
        %v1995 = vld [vmem:[%s752 + $0x70] sm:$0xf]
        %v1996 = vld [vmem:[%s752 + $0x74] sm:$0xf]
        %v1997 = vld [vmem:[%s752 + $0x78] sm:$0xf]
        %v1998 = vld [vmem:[%s752 + $0x7c] sm:$0xf]
        %v1999 = vld [vmem:[%s874] sm:$0x1]
        %v2001 = vlaneseq
        %v2002 = vshrl.u32 %v2001, 7
        %v2003 = vsub.s32 0, %v2002
        %v2004 = vrot.slane %v1999, %v2003
        %v2038 = vunpack.c.l.b16 %v1967
        %v2039 = vunpack.c.l.b16 %v1968
        %v2040 = vunpack.c.l.b16 %v1969
        %v2041 = vunpack.c.l.b16 %v1970
        %v2042 = vunpack.c.l.b16 %v1971
        %v2043 = vunpack.c.l.b16 %v1972
        %v2044 = vunpack.c.l.b16 %v1973
        %v2045 = vunpack.c.l.b16 %v1974
        %v2046 = vunpack.c.l.b16 %v1975
        %v2047 = vunpack.c.l.b16 %v1976
        %v2048 = vunpack.c.l.b16 %v1977
        %v2049 = vunpack.c.l.b16 %v1978
        %v2050 = vunpack.c.l.b16 %v1979
        %v2051 = vunpack.c.l.b16 %v1980
        %v2052 = vunpack.c.l.b16 %v1981
        %v2053 = vunpack.c.l.b16 %v1982
        %v2054 = vunpack.c.l.b16 %v1983
        %v2055 = vunpack.c.l.b16 %v1984
        %v2056 = vunpack.c.l.b16 %v1985
        %v2057 = vunpack.c.l.b16 %v1986
        %v2058 = vunpack.c.l.b16 %v1987
        %v2059 = vunpack.c.l.b16 %v1988
        %v2060 = vunpack.c.l.b16 %v1989
        %v2061 = vunpack.c.l.b16 %v1990
        %v2062 = vunpack.c.l.b16 %v1991
        %v2063 = vunpack.c.l.b16 %v1992
        %v2064 = vunpack.c.l.b16 %v1993
        %v2065 = vunpack.c.l.b16 %v1994
        %v2066 = vunpack.c.l.b16 %v1995
        %v2067 = vunpack.c.l.b16 %v1996
        %v2068 = vunpack.c.l.b16 %v1997
        %v2069 = vunpack.c.l.b16 %v1998
        %v2070 = vpack.c.b16 %v2039, %v2038
        %v2071 = vpack.c.b16 %v2041, %v2040
        %v2072 = vpack.c.b16 %v2043, %v2042
        %v2073 = vpack.c.b16 %v2045, %v2044
        %v2074 = vpack.c.b16 %v2047, %v2046
        %v2075 = vpack.c.b16 %v2049, %v2048
        %v2076 = vpack.c.b16 %v2051, %v2050
        %v2077 = vpack.c.b16 %v2053, %v2052
        %v2078 = vpack.c.b16 %v2055, %v2054
        %v2079 = vpack.c.b16 %v2057, %v2056
        %v2080 = vpack.c.b16 %v2059, %v2058
        %v2081 = vpack.c.b16 %v2061, %v2060
        %v2082 = vpack.c.b16 %v2063, %v2062
        %v2083 = vpack.c.b16 %v2065, %v2064
        %v2084 = vpack.c.b16 %v2067, %v2066
        %v2085 = vpack.c.b16 %v2069, %v2068
        %2102 = vmatprep.subr.bf16.mxu0 0
        %2103 = vmatpush1.bf16.msra.mxu0 %v2077
        %2104 = vmatprep.subr.bf16.mxu0 0
        %2105 = vmatpush1.bf16.msra.mxu0 %v2076
        %2106 = vmatprep.subr.bf16.mxu0 0
        %2107 = vmatpush1.bf16.msra.mxu0 %v2075
        %2108 = vmatprep.subr.bf16.mxu0 0
        %2109 = vmatpush1.bf16.msra.mxu0 %v2074
        %2110 = vmatprep.subr.bf16.mxu0 0
        %2111 = vmatpush1.bf16.msra.mxu0 %v2073
        %2112 = vmatprep.subr.bf16.mxu0 0
        %2113 = vmatpush1.bf16.msra.mxu0 %v2072
        %2114 = vmatprep.subr.bf16.mxu0 0
        %2115 = vmatpush1.bf16.msra.mxu0 %v2071
        %2116 = vmatprep.subr.bf16.mxu0 0
        %2117 = vmatpush1.bf16.msra.mxu0 %v2070
        %2118 = vmatprep.subr.bf16.mxu0 0
        %2119 = vmatpush2.bf16.msra.mxu0 %v2085
        %2120 = vmatprep.subr.bf16.mxu0 0
        %2121 = vmatpush2.bf16.msra.mxu0 %v2084
        %2122 = vmatprep.subr.bf16.mxu0 0
        %2123 = vmatpush2.bf16.msra.mxu0 %v2083
        %2124 = vmatprep.subr.bf16.mxu0 0
        %2125 = vmatpush2.bf16.msra.mxu0 %v2082
        %2126 = vmatprep.subr.bf16.mxu0 0
        %2127 = vmatpush2.bf16.msra.mxu0 %v2081
        %2128 = vmatprep.subr.bf16.mxu0 0
        %2129 = vmatpush2.bf16.msra.mxu0 %v2080
        %2130 = vmatprep.subr.bf16.mxu0 0
        %2131 = vmatpush2.bf16.msra.mxu0 %v2079
        %2132 = vmatprep.subr.bf16.mxu0 0
        %2133 = vmatpush2.bf16.msra.mxu0 %v2078
        %2134 = vmatprep.mubr.bf16.mxu0 %v1966
        %2135 = vmatmul.mubr.bf16.gmra.mxu0 %v1965
        %v2136 = vpop.f32.mrf.mxu0
        %v2137 = vadd.f32 %v2004, %v2136
        %v2138 = vpop.f32.mrf.mxu0
        %v2139 = vpop.f32.mrf.mxu0
        %v2140 = vpop.f32.mrf.mxu0
        %2141 = vdwg.mxu0
        %v2142 = vadd.f32 %v1796, %v2137
        %v2143 = vld [vmem:[%s877] sm:$0x1]
        %v2144 = vld [vmem:[%s880] sm:$0x1]
        %2145 = vadd.xlane.f32.xlu0 %v2142
        %v2146 = vpop.xlane.xlu0 %2145
        %v2147 = vmul.f32 %v2146, %v1773
        %v2148 = vsub.f32 %v2142, %v2147
        %v2149 = vmul.f32 %v2148, %v2148
        %2150 = vadd.xlane.f32.xlu0 %v2149
        %v2151 = vpop.xlane.xlu0 %2150
        %v2152 = vmul.f32 %v2151, %v1773
        %v2153 = vadd.f32 %v2152, 1e-12
        %v2154 = vrsqrt.pop %v2153
        %v2155 = vmul.f32 %v2148, %v2154
        %v2157 = vlaneseq
        %v2158 = vshrl.u32 %v2157, 7
        %v2159 = vsub.s32 0, %v2158
        %v2160 = vrot.slane %v2143, %v2159
        %v2162 = vmul.f32 %v2155, %v2160
        %v2164 = vlaneseq
        %v2165 = vshrl.u32 %v2164, 7
        %v2166 = vsub.s32 0, %v2165
        %v2167 = vrot.slane %v2144, %v2166
        %v2169 = vadd.f32 %v2162, %v2167
        %v2170 = vpack.c.bf16 %v2169, %v2169
        %2171 = vst [vmem:[%s884] sm:$0xf] %v2170
        %p2172 = scmp.eq.s32.totalorder %s44, 5
        // Predicated region
        $region117: #{bert_forward.2} parent=95 // pred_check
          %p2173 = pneg %p2172
        $region118: #{bert_forward.2} parent=95 // pred_check_branch
          %2175 = sbr.rel (%p2173) target = $region120
        $region119: #{bert_forward.2} parent=95 // pred_region
          %v2176 = vld [vmem:[%s15] sm:$0xf]
          %v2177 = vld [vmem:[%s15 + $0x4] sm:$0xf]
          %v2178 = vld [vmem:[%s15 + $0x8] sm:$0xf]
          %v2179 = vld [vmem:[%s15 + $0xc] sm:$0xf]
          %v2180 = vld [vmem:[%s15 + $0x10] sm:$0xf]
          %v2181 = vld [vmem:[%s15 + $0x14] sm:$0xf]
          %v2182 = vld [vmem:[%s15 + $0x18] sm:$0xf]
          %v2183 = vld [vmem:[%s15 + $0x1c] sm:$0xf]
          %v2184 = vld [vmem:[%s15 + $0x20] sm:$0xf]
          %v2185 = vld [vmem:[%s15 + $0x24] sm:$0xf]
          %v2186 = vld [vmem:[%s15 + $0x28] sm:$0xf]
          %v2187 = vld [vmem:[%s15 + $0x2c] sm:$0xf]
          %v2188 = vld [vmem:[%s15 + $0x30] sm:$0xf]
          %v2189 = vld [vmem:[%s15 + $0x34] sm:$0xf]
          %v2190 = vld [vmem:[%s15 + $0x38] sm:$0xf]
          %v2191 = vld [vmem:[%s15 + $0x3c] sm:$0xf]
          %v2192 = vld [vmem:[%s16] sm:$0x1]
          %v2194 = vlaneseq
          %v2195 = vshrl.u32 %v2194, 7
          %v2196 = vsub.s32 0, %v2195
          %v2197 = vrot.slane %v2192, %v2196
          %v2215 = vunpack.c.l.b16 %v2176
          %v2216 = vunpack.c.l.b16 %v2177
          %v2217 = vunpack.c.l.b16 %v2178
          %v2218 = vunpack.c.l.b16 %v2179
          %v2219 = vunpack.c.l.b16 %v2180
          %v2220 = vunpack.c.l.b16 %v2181
          %v2221 = vunpack.c.l.b16 %v2182
          %v2222 = vunpack.c.l.b16 %v2183
          %v2223 = vunpack.c.l.b16 %v2184
          %v2224 = vunpack.c.l.b16 %v2185
          %v2225 = vunpack.c.l.b16 %v2186
          %v2226 = vunpack.c.l.b16 %v2187
          %v2227 = vunpack.c.l.b16 %v2188
          %v2228 = vunpack.c.l.b16 %v2189
          %v2229 = vunpack.c.l.b16 %v2190
          %v2230 = vunpack.c.l.b16 %v2191
          %v2231 = vpack.c.b16 %v2216, %v2215
          %v2232 = vpack.c.b16 %v2218, %v2217
          %v2233 = vpack.c.b16 %v2220, %v2219
          %v2234 = vpack.c.b16 %v2222, %v2221
          %v2235 = vpack.c.b16 %v2224, %v2223
          %v2236 = vpack.c.b16 %v2226, %v2225
          %v2237 = vpack.c.b16 %v2228, %v2227
          %v2238 = vpack.c.b16 %v2230, %v2229
          %2247 = vmatprep.subr.bf16.mxu0 0
          %2248 = vmatpush1.bf16.msra.mxu0 %v2238
          %2249 = vmatprep.subr.bf16.mxu0 0
          %2250 = vmatpush1.bf16.msra.mxu0 %v2237
          %2251 = vmatprep.subr.bf16.mxu0 0
          %2252 = vmatpush1.bf16.msra.mxu0 %v2236
          %2253 = vmatprep.subr.bf16.mxu0 0
          %2254 = vmatpush1.bf16.msra.mxu0 %v2235
          %2255 = vmatprep.subr.bf16.mxu0 0
          %2256 = vmatpush1.bf16.msra.mxu0 %v2234
          %2257 = vmatprep.subr.bf16.mxu0 0
          %2258 = vmatpush1.bf16.msra.mxu0 %v2233
          %2259 = vmatprep.subr.bf16.mxu0 0
          %2260 = vmatpush1.bf16.msra.mxu0 %v2232
          %2261 = vmatprep.subr.bf16.mxu0 0
          %2262 = vmatpush1.bf16.msra.mxu0 %v2231
          %2263 = vmatprep.subr.bf16.mxu0 0
          %2264 = vmatpush2.bf16.msra.mxu0 0
          %2265 = vmatprep.subr.bf16.mxu0 0
          %2266 = vmatpush2.bf16.msra.mxu0 0
          %2267 = vmatprep.subr.bf16.mxu0 0
          %2268 = vmatpush2.bf16.msra.mxu0 0
          %2269 = vmatprep.subr.bf16.mxu0 0
          %2270 = vmatpush2.bf16.msra.mxu0 0
          %2271 = vmatprep.subr.bf16.mxu0 0
          %2272 = vmatpush2.bf16.msra.mxu0 0
          %2273 = vmatprep.subr.bf16.mxu0 0
          %2274 = vmatpush2.bf16.msra.mxu0 0
          %2275 = vmatprep.subr.bf16.mxu0 0
          %2276 = vmatpush2.bf16.msra.mxu0 0
          %2277 = vmatprep.subr.bf16.mxu0 0
          %2278 = vmatpush2.bf16.msra.mxu0 0
          %2279 = vmatprep.mubr.bf16.mxu0 0
          %2280 = vmatmul.mubr.bf16.gmra.mxu0 %v2170
          %v2281 = vpop.f32.mrf.mxu0
          %v2282 = vadd.f32 %v2197, %v2281
          %v2283 = vpop.f32.mrf.mxu0
          %v2284 = vpop.f32.mrf.mxu0
          %v2285 = vpop.f32.mrf.mxu0
          %2286 = vdwg.mxu0
          %v2287 = vmul.f32 %v2282, 0.5
          %v2288 = vmul.f32 %v2282, 0.044715
          %v2289 = vmul.f32 %v2288, %v2282
          %v2290 = vmul.f32 %v2289, %v2282
          %v2291 = vadd.f32 %v2282, %v2290
          %v2292 = vmul.f32 %v2291, 0.7978846
          %v2293 = vtanh.pop %v2292
          %v2294 = vadd.f32 %v2293, 1.0
          %v2295 = vmul.f32 %v2287, %v2294
          %v2296 = vld [vmem:[%s17] sm:$0x1]
          %v2297 = vld [vmem:[%s18] sm:$0x1]
          %2298 = vadd.xlane.f32.xlu0 %v2295
          %v2299 = vpop.xlane.xlu0 %2298
          %v2300 = vmul.f32 %v2299, %v1773
          %v2301 = vsub.f32 %v2295, %v2300
          %v2302 = vmul.f32 %v2301, %v2301
          %2303 = vadd.xlane.f32.xlu0 %v2302
          %v2304 = vpop.xlane.xlu0 %2303
          %v2305 = vmul.f32 %v2304, %v1773
          %v2306 = vadd.f32 %v2305, 1e-12
          %v2307 = vrsqrt.pop %v2306
          %v2308 = vmul.f32 %v2301, %v2307
          %v2310 = vlaneseq
          %v2311 = vshrl.u32 %v2310, 7
          %v2312 = vsub.s32 0, %v2311
          %v2313 = vrot.slane %v2296, %v2312
          %v2315 = vmul.f32 %v2308, %v2313
          %v2317 = vlaneseq
          %v2318 = vshrl.u32 %v2317, 7
          %v2319 = vsub.s32 0, %v2318
          %v2320 = vrot.slane %v2297, %v2319
          %v2322 = vadd.f32 %v2315, %v2320
          %v2323 = vpack.c.bf16 %v2322, %v2322
          %2324 = vst [vmem:[%s884] sm:$0xf] %v2323
        $region120: #{bert_forward.2} parent=95 // pred_fallthru
          _
        %p2325 = scmp.lt.s32.totalorder %s43, 1
        %s2326 = scalar_select %p2325, %s43, 1
        %s2327 = smul.addr %s2326, 4
        %s2328 = scalar_lea.vmem %s19, %s2327
        // Predicated region
        $region121: #{bert_forward.2} parent=95 // pred_check
          %p2329 = pneg %p533
        $region122: #{bert_forward.2} parent=95 // pred_check_branch
          %2331 = sbr.rel (%p2329) target = $region124
        $region123: #{bert_forward.2} parent=95 // pred_region
          _
        $region124: #{bert_forward.2} parent=95 // pred_fallthru
          _
      $region96: #{bert_forward.2} parent=5 // pred_fallthru
        _
      %p2332 = scmp.le.s32.totalorder 2, %s34
      // Predicated region
      $region125: #{bert_forward.2} parent=5 // pred_check
        %p2333 = pneg %p2332
      $region126: #{bert_forward.2} parent=5 // pred_check_branch
        %2335 = sbr.rel (%p2333) target = $region128
      $region127: #{bert_forward.2} parent=5 // pred_region
        %s2336 = ssub.s32 %s34, 2
        // Predicated region
        $region129: #{bert_forward.2} parent=127 // pred_check
          %p2337 = pneg %p539
        $region130: #{bert_forward.2} parent=127 // pred_check_branch
          %2339 = sbr.rel (%p2337) target = $region132
        $region131: #{bert_forward.2} parent=127 // pred_region
          %p2340 = scmp.lt.s32.totalorder %s45, 1
          %s2341 = scalar_select %p2340, %s45, 1
          %s2342 = smul.addr %s2341, 4
          %s2343 = scalar_lea.vmem %s19, %s2342
        $region132: #{bert_forward.2} parent=127 // pred_fallthru
          _
      $region128: #{bert_forward.2} parent=5 // pred_fallthru
        _
    $region6: #{bert_forward.2} parent=1 // loop_footer
      %s38 = sadd.s32 1, %s34
    $region7: #{bert_forward.2} parent=1 // loop_footer_branch
      %33 = sbr.rel target = $region3
    $region8: #{bert_forward.2} parent=1 // loop_exit
      _
    %2344 = vsyncpa [#allocation4], 1
    %s2345 = scalar_lea.sflag [#allocation4], 1
    %2346 = vsyncpa %s2345, 1
    %2347 = vsyncpa [#allocation6], 1
    %s2348 = scalar_lea.sflag [#allocation6], 1
    %2349 = vsyncpa %s2348, 1
    %2350 = vsyncpa [#allocation9], 1
    %s2351 = scalar_lea.sflag [#allocation9], 1
    %2352 = vsyncpa %s2351, 1

</llo_original>
